<compile_context>
chip_gen: v7x
topology: tpu7x:2x2x1
jax: 0.10.0
libtpu: 0.0.40
codegen_flags: <defaults>
</compile_context>

<pallas_src>
import functools
import math

import jax
import jax.numpy as jnp
from jax.experimental import pallas as pl
from jax.experimental.pallas import tpu as pltpu

_LANE_TARGET = 1024                 # target lane width L of the output slab (mult. of 128)
_BLOCK_BYTES_CAP = 8 * 1024 * 1024  # target per-step output block size (f32 bytes)


def _round_up(x, m):
    return ((x + m - 1) // m) * m


@functools.lru_cache(maxsize=None)
def _vmem_budget_bytes():
    """Scoped-VMEM budget: half of physical VMEM, capped at 48 MiB."""
    try:
        vmem = int(pltpu.get_tpu_info().vmem_capacity_bytes)
    except Exception:
        vmem = 64 << 20             # conservative fallback (v7x per-core VMEM)
    return min(48 << 20, vmem // 2)


def _adapt_heads_kernel(y_ref, wexp_ref, b_ref, o_ref):
    # y_ref:    (TR, R)  slab of flattened inputs (R original rows per slab row)
    # wexp_ref: (R, L)   expansion matrix, W_exp[r, r*H + j] = w_eff[j]   (resident)
    # b_ref:    (1, L)   bias tiled per head across the lane axis         (resident)
    # o_ref:    (TR, L)  lane-dense output slab block
    o_ref[...] = (
        jnp.dot(
            y_ref[...],
            wexp_ref[...],
            preferred_element_type=jnp.float32,
            precision=jax.lax.Precision.HIGHEST,  # exact f32; free since HBM-bound
        )
        + b_ref[...]
    )


@functools.partial(jax.jit, static_argnames=("inverse",))
def model_adapt_heads(y, weight, bias, inverse=False):
    """Pallas implementation of ModelAdaptHeads.forward.

    y: any shape, flattened like torch's y.view(-1, 1); weight/bias: (1, num_head).
    Returns (N, num_head) float32 with N = y.size.
    """
    y_flat = jnp.reshape(y, (-1,)).astype(jnp.float32)
    n = y_flat.shape[0]
    h = weight.shape[-1]

    w = jnp.reshape(weight, (1, h)).astype(jnp.float32)
    b = jnp.reshape(bias, (1, h)).astype(jnp.float32)

    # Fold epsilon / reciprocal into effective affine params: out = w_eff*y + b_eff.
    if inverse:
        w_eff = 1.0 / (w + 1e-9)    # exact f32 reciprocal, computed once in the wrapper
        b_eff = -b * w_eff
    else:
        w_eff = w + 1e-9
        b_eff = b

    # ---- Slab geometry: R original rows per slab row, L = R*H lanes (mult. of 128) ----
    g = math.gcd(h, 128)
    r_min = 128 // g
    mult = max(1, _LANE_TARGET // (r_min * h))
    r = r_min * mult                # rows packed per slab row (128 for H=8: lane-dense LHS)
    l = r * h                       # slab lane width (1024 for H=8)

    s_needed = -(-n // r)
    s = _round_up(s_needed, 8)      # pad slab rows only to the 8-sublane granule
    n_pad = s * r

    # ---- Block sizing: ~8 MiB output blocks, >=2 grid steps, within the VMEM budget ----
    budget = _vmem_budget_bytes()
    resident = r * l * 4 + l * 4                    # W_exp + tiled bias (single-buffered)
    per_row = 2 * (l + r) * 4                       # double-buffered out + y per slab row
    tr_cap = max(8, (_BLOCK_BYTES_CAP // (l * 4)) // 8 * 8)
    tr_budget = max(8, ((budget - resident) // per_row) // 8 * 8)
    tr_split = _round_up(max(1, (s + 1) // 2), 8)   # >=2 steps when possible (v7x megacore)
    tr = max(8, min(tr_cap, tr_budget, tr_split, s))

    grid = (pl.cdiv(s, tr),)        # ragged final block is masked by Pallas

    # ---- Inputs: avoid a padded copy of y when the flat buffer already fills the slab ----
    if n_pad == n:
        y2d = y_flat.reshape(s, r)                  # free, contiguous view
    else:
        y2d = jnp.pad(y_flat, (0, n_pad - n)).reshape(s, r)

    # W_exp[k, k*h + j] = w_eff[j];  b_tiled[0, k*h + j] = b_eff[j]
    w_exp = (jnp.eye(r, dtype=jnp.float32)[:, :, None]
             * w_eff.reshape(1, 1, h)).reshape(r, l)
    b_tiled = jnp.tile(b_eff, (1, r))

    out_slab = pl.pallas_call(
        _adapt_heads_kernel,
        out_shape=jax.ShapeDtypeStruct((s, l), jnp.float32),
        grid_spec=pltpu.PrefetchScalarGridSpec(
            num_scalar_prefetch=0,
            grid=grid,
            in_specs=[
                pl.BlockSpec((tr, r), lambda i: (i, 0)),   # y slab block
                pl.BlockSpec((r, l), lambda i: (0, 0)),    # expansion weights (resident)
                pl.BlockSpec((1, l), lambda i: (0, 0)),    # tiled bias (resident)
            ],
            out_specs=pl.BlockSpec((tr, l), lambda i: (i, 0)),
        ),
        compiler_params=pltpu.CompilerParams(
            dimension_semantics=("parallel",),
            vmem_limit_bytes=budget,
        ),
        cost_estimate=pl.CostEstimate(          # true memory-bound cost, not MXU-inflated
            flops=2 * n * h,
            transcendentals=0,
            bytes_accessed=4 * (n + n * h + r * l + l),
        ),
    )(y2d, w_exp, b_tiled)

    # The slab is a contiguous view of the row-major (N_pad, H) output.
    out = out_slab.reshape(n_pad, h)
    if n_pad != n:
        out = out[:n]               # only on the ragged path; zero-copy otherwise
    return out


if __name__ == "__main__":
    num_head = 8

    key = jax.random.PRNGKey(0)
    k_w, k_y, k_big = jax.random.split(key, 3)

    # Deterministic init matching nn.init.uniform_(weight, 0.75, 1.25), bias = ones/8.
    weight = jax.random.uniform(
        k_w, (1, num_head), minval=0.75, maxval=1.25, dtype=jnp.float32
    )
    bias = jnp.ones((1, num_head), dtype=jnp.float32) / 8.0

    # Small input (forward flattens it anyway) -> N = 16.
    y = jax.random.normal(k_y, (2, 8), dtype=jnp.float32)

    # Forward pass
    out = jax.block_until_ready(model_adapt_heads(y, weight, bias, inverse=False))
    y_col = jnp.reshape(y, (-1, 1))
    ref_fwd = (weight + 1e-9) * y_col + bias
    assert out.shape == (16, num_head)
    assert jnp.allclose(out, ref_fwd, atol=1e-5, rtol=1e-5), "forward mismatch"

    # Inverse pass (round-trips the per-head outputs back through the affine map)
    inv = jax.block_until_ready(model_adapt_heads(out, weight, bias, inverse=True))
    ref_inv = (jnp.reshape(out, (-1, 1)) - bias) / (weight + 1e-9)
    assert inv.shape == (16 * num_head, num_head)
    assert jnp.allclose(inv, ref_inv, atol=1e-5, rtol=1e-5), "inverse mismatch"

    # A size that exercises the zero-copy fast path (no pad, no slice) and a 2-step grid.
    y_big = jax.random.normal(k_big, (2048,), dtype=jnp.float32)
    out_big = jax.block_until_ready(model_adapt_heads(y_big, weight, bias, inverse=False))
    ref_big = (weight + 1e-9) * y_big[:, None] + bias
    assert out_big.shape == (2048, num_head)
    assert jnp.allclose(out_big, ref_big, atol=1e-5, rtol=1e-5), "large forward mismatch"

    print("KERNEL_OK")
</pallas_src>

<mosaic_0001>
module attributes {stable_mosaic.version = 11 : i64} {
  func.func @_adapt_heads_kernel(%arg0: i32, %arg1: memref<8x128xf32, #tpu.memory_space<vmem>>, %arg2: memref<128x1024xf32, #tpu.memory_space<vmem>>, %arg3: memref<1x1024xf32, #tpu.memory_space<vmem>>, %arg4: memref<8x1024xf32, #tpu.memory_space<vmem>>) attributes {dimension_semantics = [#tpu.dimension_semantics<parallel>], iteration_bounds = array<i64: 1>, scalar_prefetch = 0 : i64, scratch_operands = 0 : i64, tpu.core_type = #tpu.core_type<tc>, window_params = [{transform_indices = @transform_0, window_bounds = array<i64: 8, 128>}, {pipeline_mode = #tpu.pipeline_mode<synchronous>, transform_indices = @transform_1, window_bounds = array<i64: 128, 1024>}, {pipeline_mode = #tpu.pipeline_mode<synchronous>, transform_indices = @transform_2, window_bounds = array<i64: 1, 1024>}, {transform_indices = @transform_3, window_bounds = array<i64: 8, 1024>}]} {
    %c0 = arith.constant 0 : index
    %c0_0 = arith.constant 0 : index
    %0 = vector.load %arg1[%c0, %c0_0] : memref<8x128xf32, #tpu.memory_space<vmem>>, vector<8x128xf32>
    %c0_1 = arith.constant 0 : index
    %c0_2 = arith.constant 0 : index
    %1 = vector.load %arg2[%c0_1, %c0_2] : memref<128x1024xf32, #tpu.memory_space<vmem>>, vector<128x1024xf32>
    %cst = arith.constant dense<0.000000e+00> : vector<8x1024xf32>
    %2 = tpu.matmul %0, %1, %cst {dimension_numbers = #tpu.dot_dimension_numbers<[1], [0], [0], [1], [0, 0, 1, 1], [], []>, precision = #tpu.contract_precision<fp32>} : vector<8x128xf32>, vector<128x1024xf32>, vector<8x1024xf32> -> vector<8x1024xf32>
    %c0_3 = arith.constant 0 : index
    %c0_4 = arith.constant 0 : index
    %3 = vector.load %arg3[%c0_3, %c0_4] : memref<1x1024xf32, #tpu.memory_space<vmem>>, vector<1x1024xf32>
    %4 = vector.broadcast %3 : vector<1x1024xf32> to vector<8x1024xf32>
    %5 = arith.addf %2, %4 : vector<8x1024xf32>
    %c0_5 = arith.constant 0 : index
    %c0_6 = arith.constant 0 : index
    %6 = vector.load %arg4[%c0_5, %c0_6] : memref<8x1024xf32, #tpu.memory_space<vmem>>, vector<8x1024xf32>
    tpu.vector_store %arg4[%c0_5, %c0_6], %5 {strides = array<i32>} : memref<8x1024xf32, #tpu.memory_space<vmem>>, vector<8x1024xf32>,
    return
  }
  func.func @transform_0(%arg0: i32) -> (i32, i32) {
    %c0_i32 = arith.constant 0 : i32
    %c0_i32_0 = arith.constant 0 : i32
    return %arg0, %c0_i32 : i32, i32
  }
  func.func @transform_1(%arg0: i32) -> (i32, i32) {
    %c0_i32 = arith.constant 0 : i32
    %c0_i32_0 = arith.constant 0 : i32
    %c0_i32_1 = arith.constant 0 : i32
    return %c0_i32, %c0_i32_0 : i32, i32
  }
  func.func @transform_2(%arg0: i32) -> (i32, i32) {
    %c0_i32 = arith.constant 0 : i32
    %c0_i32_0 = arith.constant 0 : i32
    %c0_i32_1 = arith.constant 0 : i32
    return %c0_i32, %c0_i32_0 : i32, i32
  }
  func.func @transform_3(%arg0: i32) -> (i32, i32) {
    %c0_i32 = arith.constant 0 : i32
    %c0_i32_0 = arith.constant 0 : i32
    return %arg0, %c0_i32 : i32, i32
  }
}

</mosaic_0001>

<llo_original>
// kernel: model_adapt_heads.1
$region0: #{model_adapt_heads.1}
  #allocation0 [shape = 'u32[]', space=smem, size = 0x4, offset = 0x4, fixed_abs, tag = 'smem constant byte address 0x4 - core index']
  #allocation1 [shape = 'u32[144,128]{1,0:T(1,128)}', space=vmem, size = 0x12000, scoped, tag = 'internal scratch']
  %s0 = inlined_call_operand.vmem [shape: f32[8,128], index: 0, kind: input, shape index: {}]
  %s1 = inlined_call_operand.vmem [shape: f32[128,1024], index: 1, kind: input, shape index: {}]
  %s2 = inlined_call_operand.vmem [shape: f32[1,1024], index: 2, kind: input, shape index: {}]
  %s3 = inlined_call_operand.vmem [shape: f32[8,1024], index: 3, kind: output, shape index: {}]
  %s4 = sld [smem:[#allocation0]]
  $region22: #{model_adapt_heads.1} parent=0
    _
  %s6 = ssub.s32 1, %s4
  %s7 = scalar_select 0, %s6, %s4
  // Predicated region
  $region2: #{model_adapt_heads.1} parent=0 // pred_check
    _
  $region3: #{model_adapt_heads.1} parent=0 // pred_check_branch
    %9 = sbr.rel (0) target = $region5
  $region4: #{model_adapt_heads.1} parent=0 // pred_region
    _
  $region5: #{model_adapt_heads.1} parent=0 // pred_fallthru
    _
  // Predicated region
  $region6: #{model_adapt_heads.1} parent=0 // pred_check
    _
  $region7: #{model_adapt_heads.1} parent=0 // pred_check_branch
    %11 = sbr.rel (0) target = $region9
  $region8: #{model_adapt_heads.1} parent=0 // pred_region
    _
  $region9: #{model_adapt_heads.1} parent=0 // pred_fallthru
    _
  // Predicated region
  $region10: #{model_adapt_heads.1} parent=0 // pred_check
    _
  $region11: #{model_adapt_heads.1} parent=0 // pred_check_branch
    %13 = sbr.rel (0) target = $region13
  $region12: #{model_adapt_heads.1} parent=0 // pred_region
    _
  $region13: #{model_adapt_heads.1} parent=0 // pred_fallthru
    _
  %v14 = vld [vmem:[%s0] sm:$0xff]
  %v15 = vld [vmem:[%s1] sm:$0xff]
  %v16 = vld [vmem:[%s1 + $0x8] sm:$0xff]
  %v17 = vld [vmem:[%s1 + $0x10] sm:$0xff]
  %v18 = vld [vmem:[%s1 + $0x18] sm:$0xff]
  %v19 = vld [vmem:[%s1 + $0x20] sm:$0xff]
  %v20 = vld [vmem:[%s1 + $0x28] sm:$0xff]
  %v21 = vld [vmem:[%s1 + $0x30] sm:$0xff]
  %v22 = vld [vmem:[%s1 + $0x38] sm:$0xff]
  %v23 = vld [vmem:[%s1 + $0x40] sm:$0xff]
  %v24 = vld [vmem:[%s1 + $0x48] sm:$0xff]
  %v25 = vld [vmem:[%s1 + $0x50] sm:$0xff]
  %v26 = vld [vmem:[%s1 + $0x58] sm:$0xff]
  %v27 = vld [vmem:[%s1 + $0x60] sm:$0xff]
  %v28 = vld [vmem:[%s1 + $0x68] sm:$0xff]
  %v29 = vld [vmem:[%s1 + $0x70] sm:$0xff]
  %v30 = vld [vmem:[%s1 + $0x78] sm:$0xff]
  %v31 = vld [vmem:[%s1 + $0x80] sm:$0xff]
  %v32 = vld [vmem:[%s1 + $0x88] sm:$0xff]
  %v33 = vld [vmem:[%s1 + $0x90] sm:$0xff]
  %v34 = vld [vmem:[%s1 + $0x98] sm:$0xff]
  %v35 = vld [vmem:[%s1 + $0xa0] sm:$0xff]
  %v36 = vld [vmem:[%s1 + $0xa8] sm:$0xff]
  %v37 = vld [vmem:[%s1 + $0xb0] sm:$0xff]
  %v38 = vld [vmem:[%s1 + $0xb8] sm:$0xff]
  %v39 = vld [vmem:[%s1 + $0xc0] sm:$0xff]
  %v40 = vld [vmem:[%s1 + $0xc8] sm:$0xff]
  %v41 = vld [vmem:[%s1 + $0xd0] sm:$0xff]
  %v42 = vld [vmem:[%s1 + $0xd8] sm:$0xff]
  %v43 = vld [vmem:[%s1 + $0xe0] sm:$0xff]
  %v44 = vld [vmem:[%s1 + $0xe8] sm:$0xff]
  %v45 = vld [vmem:[%s1 + $0xf0] sm:$0xff]
  %v46 = vld [vmem:[%s1 + $0xf8] sm:$0xff]
  %v47 = vld [vmem:[%s1 + $0x100] sm:$0xff]
  %v48 = vld [vmem:[%s1 + $0x108] sm:$0xff]
  %v49 = vld [vmem:[%s1 + $0x110] sm:$0xff]
  %v50 = vld [vmem:[%s1 + $0x118] sm:$0xff]
  %v51 = vld [vmem:[%s1 + $0x120] sm:$0xff]
  %v52 = vld [vmem:[%s1 + $0x128] sm:$0xff]
  %v53 = vld [vmem:[%s1 + $0x130] sm:$0xff]
  %v54 = vld [vmem:[%s1 + $0x138] sm:$0xff]
  %v55 = vld [vmem:[%s1 + $0x140] sm:$0xff]
  %v56 = vld [vmem:[%s1 + $0x148] sm:$0xff]
  %v57 = vld [vmem:[%s1 + $0x150] sm:$0xff]
  %v58 = vld [vmem:[%s1 + $0x158] sm:$0xff]
  %v59 = vld [vmem:[%s1 + $0x160] sm:$0xff]
  %v60 = vld [vmem:[%s1 + $0x168] sm:$0xff]
  %v61 = vld [vmem:[%s1 + $0x170] sm:$0xff]
  %v62 = vld [vmem:[%s1 + $0x178] sm:$0xff]
  %v63 = vld [vmem:[%s1 + $0x180] sm:$0xff]
  %v64 = vld [vmem:[%s1 + $0x188] sm:$0xff]
  %v65 = vld [vmem:[%s1 + $0x190] sm:$0xff]
  %v66 = vld [vmem:[%s1 + $0x198] sm:$0xff]
  %v67 = vld [vmem:[%s1 + $0x1a0] sm:$0xff]
  %v68 = vld [vmem:[%s1 + $0x1a8] sm:$0xff]
  %v69 = vld [vmem:[%s1 + $0x1b0] sm:$0xff]
  %v70 = vld [vmem:[%s1 + $0x1b8] sm:$0xff]
  %v71 = vld [vmem:[%s1 + $0x1c0] sm:$0xff]
  %v72 = vld [vmem:[%s1 + $0x1c8] sm:$0xff]
  %v73 = vld [vmem:[%s1 + $0x1d0] sm:$0xff]
  %v74 = vld [vmem:[%s1 + $0x1d8] sm:$0xff]
  %v75 = vld [vmem:[%s1 + $0x1e0] sm:$0xff]
  %v76 = vld [vmem:[%s1 + $0x1e8] sm:$0xff]
  %v77 = vld [vmem:[%s1 + $0x1f0] sm:$0xff]
  %v78 = vld [vmem:[%s1 + $0x1f8] sm:$0xff]
  %v79 = vld [vmem:[%s1 + $0x200] sm:$0xff]
  %v80 = vld [vmem:[%s1 + $0x208] sm:$0xff]
  %v81 = vld [vmem:[%s1 + $0x210] sm:$0xff]
  %v82 = vld [vmem:[%s1 + $0x218] sm:$0xff]
  %v83 = vld [vmem:[%s1 + $0x220] sm:$0xff]
  %v84 = vld [vmem:[%s1 + $0x228] sm:$0xff]
  %v85 = vld [vmem:[%s1 + $0x230] sm:$0xff]
  %v86 = vld [vmem:[%s1 + $0x238] sm:$0xff]
  %v87 = vld [vmem:[%s1 + $0x240] sm:$0xff]
  %v88 = vld [vmem:[%s1 + $0x248] sm:$0xff]
  %v89 = vld [vmem:[%s1 + $0x250] sm:$0xff]
  %v90 = vld [vmem:[%s1 + $0x258] sm:$0xff]
  %v91 = vld [vmem:[%s1 + $0x260] sm:$0xff]
  %v92 = vld [vmem:[%s1 + $0x268] sm:$0xff]
  %v93 = vld [vmem:[%s1 + $0x270] sm:$0xff]
  %v94 = vld [vmem:[%s1 + $0x278] sm:$0xff]
  %v95 = vld [vmem:[%s1 + $0x280] sm:$0xff]
  %v96 = vld [vmem:[%s1 + $0x288] sm:$0xff]
  %v97 = vld [vmem:[%s1 + $0x290] sm:$0xff]
  %v98 = vld [vmem:[%s1 + $0x298] sm:$0xff]
  %v99 = vld [vmem:[%s1 + $0x2a0] sm:$0xff]
  %v100 = vld [vmem:[%s1 + $0x2a8] sm:$0xff]
  %v101 = vld [vmem:[%s1 + $0x2b0] sm:$0xff]
  %v102 = vld [vmem:[%s1 + $0x2b8] sm:$0xff]
  %v103 = vld [vmem:[%s1 + $0x2c0] sm:$0xff]
  %v104 = vld [vmem:[%s1 + $0x2c8] sm:$0xff]
  %v105 = vld [vmem:[%s1 + $0x2d0] sm:$0xff]
  %v106 = vld [vmem:[%s1 + $0x2d8] sm:$0xff]
  %v107 = vld [vmem:[%s1 + $0x2e0] sm:$0xff]
  %v108 = vld [vmem:[%s1 + $0x2e8] sm:$0xff]
  %v109 = vld [vmem:[%s1 + $0x2f0] sm:$0xff]
  %v110 = vld [vmem:[%s1 + $0x2f8] sm:$0xff]
  %v111 = vld [vmem:[%s1 + $0x300] sm:$0xff]
  %v112 = vld [vmem:[%s1 + $0x308] sm:$0xff]
  %v113 = vld [vmem:[%s1 + $0x310] sm:$0xff]
  %v114 = vld [vmem:[%s1 + $0x318] sm:$0xff]
  %v115 = vld [vmem:[%s1 + $0x320] sm:$0xff]
  %v116 = vld [vmem:[%s1 + $0x328] sm:$0xff]
  %v117 = vld [vmem:[%s1 + $0x330] sm:$0xff]
  %v118 = vld [vmem:[%s1 + $0x338] sm:$0xff]
  %v119 = vld [vmem:[%s1 + $0x340] sm:$0xff]
  %v120 = vld [vmem:[%s1 + $0x348] sm:$0xff]
  %v121 = vld [vmem:[%s1 + $0x350] sm:$0xff]
  %v122 = vld [vmem:[%s1 + $0x358] sm:$0xff]
  %v123 = vld [vmem:[%s1 + $0x360] sm:$0xff]
  %v124 = vld [vmem:[%s1 + $0x368] sm:$0xff]
  %v125 = vld [vmem:[%s1 + $0x370] sm:$0xff]
  %v126 = vld [vmem:[%s1 + $0x378] sm:$0xff]
  %v127 = vld [vmem:[%s1 + $0x380] sm:$0xff]
  %v128 = vld [vmem:[%s1 + $0x388] sm:$0xff]
  %v129 = vld [vmem:[%s1 + $0x390] sm:$0xff]
  %v130 = vld [vmem:[%s1 + $0x398] sm:$0xff]
  %v131 = vld [vmem:[%s1 + $0x3a0] sm:$0xff]
  %v132 = vld [vmem:[%s1 + $0x3a8] sm:$0xff]
  %v133 = vld [vmem:[%s1 + $0x3b0] sm:$0xff]
  %v134 = vld [vmem:[%s1 + $0x3b8] sm:$0xff]
  %v135 = vld [vmem:[%s1 + $0x3c0] sm:$0xff]
  %v136 = vld [vmem:[%s1 + $0x3c8] sm:$0xff]
  %v137 = vld [vmem:[%s1 + $0x3d0] sm:$0xff]
  %v138 = vld [vmem:[%s1 + $0x3d8] sm:$0xff]
  %v139 = vld [vmem:[%s1 + $0x3e0] sm:$0xff]
  %v140 = vld [vmem:[%s1 + $0x3e8] sm:$0xff]
  %v141 = vld [vmem:[%s1 + $0x3f0] sm:$0xff]
  %v142 = vld [vmem:[%s1 + $0x3f8] sm:$0xff]
  %v143 = vld [vmem:[%s2] sm:$0xff]
  %v145 = vlaneseq
  %v146 = vshrl.u32 %v145, 7
  %v147 = vsub.s32 0, %v146
  %v148 = vrot.slane %v143, %v147
  %v149 = vlaneseq
  %v150 = vshrl.u32 %v149, 7
  %v151 = vsub.s32 1, %v150
  %v152 = vrot.slane %v143, %v151
  %v153 = vlaneseq
  %v154 = vshrl.u32 %v153, 7
  %v155 = vsub.s32 2, %v154
  %v156 = vrot.slane %v143, %v155
  %v157 = vlaneseq
  %v158 = vshrl.u32 %v157, 7
  %v159 = vsub.s32 3, %v158
  %v160 = vrot.slane %v143, %v159
  %v161 = vlaneseq
  %v162 = vshrl.u32 %v161, 7
  %v163 = vsub.s32 4, %v162
  %v164 = vrot.slane %v143, %v163
  %v165 = vlaneseq
  %v166 = vshrl.u32 %v165, 7
  %v167 = vsub.s32 5, %v166
  %v168 = vrot.slane %v143, %v167
  %v169 = vlaneseq
  %v170 = vshrl.u32 %v169, 7
  %v171 = vsub.s32 6, %v170
  %v172 = vrot.slane %v143, %v171
  %v173 = vlaneseq
  %v174 = vshrl.u32 %v173, 7
  %v175 = vsub.s32 7, %v174
  %v176 = vrot.slane %v143, %v175
  %v185 = vand.u32 %v16, 4294901760
  %186 = vmatprep.subr.mxu0 %v185
  %v187 = vand.u32 %v15, 4294901760
  %188 = vmatpush1.msra.mxu0 %v187
  %v189 = vand.u32 %v24, 4294901760
  %190 = vmatprep.subr.mxu0 %v189
  %v191 = vand.u32 %v23, 4294901760
  %192 = vmatpush1.msra.mxu0 %v191
  %v193 = vand.u32 %v32, 4294901760
  %194 = vmatprep.subr.mxu0 %v193
  %v195 = vand.u32 %v31, 4294901760
  %196 = vmatpush1.msra.mxu0 %v195
  %v197 = vand.u32 %v40, 4294901760
  %198 = vmatprep.subr.mxu0 %v197
  %v199 = vand.u32 %v39, 4294901760
  %200 = vmatpush1.msra.mxu0 %v199
  %v201 = vand.u32 %v48, 4294901760
  %202 = vmatprep.subr.mxu0 %v201
  %v203 = vand.u32 %v47, 4294901760
  %204 = vmatpush1.msra.mxu0 %v203
  %v205 = vand.u32 %v56, 4294901760
  %206 = vmatprep.subr.mxu0 %v205
  %v207 = vand.u32 %v55, 4294901760
  %208 = vmatpush1.msra.mxu0 %v207
  %v209 = vand.u32 %v64, 4294901760
  %210 = vmatprep.subr.mxu0 %v209
  %v211 = vand.u32 %v63, 4294901760
  %212 = vmatpush1.msra.mxu0 %v211
  %v213 = vand.u32 %v72, 4294901760
  %214 = vmatprep.subr.mxu0 %v213
  %v215 = vand.u32 %v71, 4294901760
  %216 = vmatpush1.msra.mxu0 %v215
  %v217 = vand.u32 %v80, 4294901760
  %218 = vmatprep.subr.mxu0 %v217
  %v219 = vand.u32 %v79, 4294901760
  %220 = vmatpush1.msra.mxu0 %v219
  %v221 = vand.u32 %v88, 4294901760
  %222 = vmatprep.subr.mxu0 %v221
  %v223 = vand.u32 %v87, 4294901760
  %224 = vmatpush1.msra.mxu0 %v223
  %v225 = vand.u32 %v96, 4294901760
  %226 = vmatprep.subr.mxu0 %v225
  %v227 = vand.u32 %v95, 4294901760
  %228 = vmatpush1.msra.mxu0 %v227
  %v229 = vand.u32 %v104, 4294901760
  %230 = vmatprep.subr.mxu0 %v229
  %v231 = vand.u32 %v103, 4294901760
  %232 = vmatpush1.msra.mxu0 %v231
  %v233 = vand.u32 %v112, 4294901760
  %234 = vmatprep.subr.mxu0 %v233
  %v235 = vand.u32 %v111, 4294901760
  %236 = vmatpush1.msra.mxu0 %v235
  %v237 = vand.u32 %v120, 4294901760
  %238 = vmatprep.subr.mxu0 %v237
  %v239 = vand.u32 %v119, 4294901760
  %240 = vmatpush1.msra.mxu0 %v239
  %v241 = vand.u32 %v128, 4294901760
  %242 = vmatprep.subr.mxu0 %v241
  %v243 = vand.u32 %v127, 4294901760
  %244 = vmatpush1.msra.mxu0 %v243
  %v245 = vand.u32 %v136, 4294901760
  %246 = vmatprep.subr.mxu0 %v245
  %v247 = vand.u32 %v135, 4294901760
  %248 = vmatpush1.msra.mxu0 %v247
  %249 = vmatprep.subr.mxu0 0.0
  %250 = vmatpush1.msra.mxu0 0.0
  %251 = vmatprep.subr.mxu0 0.0
  %252 = vmatpush1.msra.mxu0 0.0
  %253 = vmatprep.subr.mxu0 0.0
  %254 = vmatpush1.msra.mxu0 0.0
  %255 = vmatprep.subr.mxu0 0.0
  %256 = vmatpush1.msra.mxu0 0.0
  %257 = vmatprep.subr.mxu0 0.0
  %258 = vmatpush1.msra.mxu0 0.0
  %259 = vmatprep.subr.mxu0 0.0
  %260 = vmatpush1.msra.mxu0 0.0
  %261 = vmatprep.subr.mxu0 0.0
  %262 = vmatpush1.msra.mxu0 0.0
  %263 = vmatprep.subr.mxu0 0.0
  %264 = vmatpush1.msra.mxu0 0.0
  %265 = vmatprep.subr.mxu0 0.0
  %266 = vmatpush1.msra.mxu0 0.0
  %267 = vmatprep.subr.mxu0 0.0
  %268 = vmatpush1.msra.mxu0 0.0
  %269 = vmatprep.subr.mxu0 0.0
  %270 = vmatpush1.msra.mxu0 0.0
  %271 = vmatprep.subr.mxu0 0.0
  %272 = vmatpush1.msra.mxu0 0.0
  %273 = vmatprep.subr.mxu0 0.0
  %274 = vmatpush1.msra.mxu0 0.0
  %275 = vmatprep.subr.mxu0 0.0
  %276 = vmatpush1.msra.mxu0 0.0
  %277 = vmatprep.subr.mxu0 0.0
  %278 = vmatpush1.msra.mxu0 0.0
  %279 = vmatprep.subr.mxu0 0.0
  %280 = vmatpush1.msra.mxu0 0.0
  %281 = vmatprep.mubr.f32.mxu0 0.0
  %v282 = vand.u32 %v14, 4294901760
  %v283 = vsub.f32 %v14, %v282
  %v284 = vand.u32 %v283, 4294901760
  %v285 = vsub.f32 %v283, %v284
  %v286 = vand.u32 %v285, 4294901760
  %287 = vmatmul.mubr.f32.gmra.mrb[0].mxu0 %v286
  %v288 = vpop.f32.mrb[0].mxu0
  %v289 = vadd.f32 %v148, %v288
  %v290 = vpop.f32.mrb[0].mxu0
  %v291 = vadd.f32 %v152, %v290
  %292 = vdwg.mxu0
  %v293 = vand.u32 %v16, 4294901760
  %v294 = vsub.f32 %v16, %v293
  %v295 = vand.u32 %v294, 4294901760
  %v296 = vsub.f32 %v294, %v295
  %v297 = vand.u32 %v296, 4294901760
  %298 = vmatprep.subr.mxu0 %v297
  %v299 = vand.u32 %v15, 4294901760
  %v300 = vsub.f32 %v15, %v299
  %v301 = vand.u32 %v300, 4294901760
  %v302 = vsub.f32 %v300, %v301
  %v303 = vand.u32 %v302, 4294901760
  %304 = vmatpush1.msra.mxu0 %v303
  %v305 = vand.u32 %v24, 4294901760
  %v306 = vsub.f32 %v24, %v305
  %v307 = vand.u32 %v306, 4294901760
  %v308 = vsub.f32 %v306, %v307
  %v309 = vand.u32 %v308, 4294901760
  %310 = vmatprep.subr.mxu0 %v309
  %v311 = vand.u32 %v23, 4294901760
  %v312 = vsub.f32 %v23, %v311
  %v313 = vand.u32 %v312, 4294901760
  %v314 = vsub.f32 %v312, %v313
  %v315 = vand.u32 %v314, 4294901760
  %316 = vmatpush1.msra.mxu0 %v315
  %v317 = vand.u32 %v32, 4294901760
  %v318 = vsub.f32 %v32, %v317
  %v319 = vand.u32 %v318, 4294901760
  %v320 = vsub.f32 %v318, %v319
  %v321 = vand.u32 %v320, 4294901760
  %322 = vmatprep.subr.mxu0 %v321
  %v323 = vand.u32 %v31, 4294901760
  %v324 = vsub.f32 %v31, %v323
  %v325 = vand.u32 %v324, 4294901760
  %v326 = vsub.f32 %v324, %v325
  %v327 = vand.u32 %v326, 4294901760
  %328 = vmatpush1.msra.mxu0 %v327
  %v329 = vand.u32 %v40, 4294901760
  %v330 = vsub.f32 %v40, %v329
  %v331 = vand.u32 %v330, 4294901760
  %v332 = vsub.f32 %v330, %v331
  %v333 = vand.u32 %v332, 4294901760
  %334 = vmatprep.subr.mxu0 %v333
  %v335 = vand.u32 %v39, 4294901760
  %v336 = vsub.f32 %v39, %v335
  %v337 = vand.u32 %v336, 4294901760
  %v338 = vsub.f32 %v336, %v337
  %v339 = vand.u32 %v338, 4294901760
  %340 = vmatpush1.msra.mxu0 %v339
  %v341 = vand.u32 %v48, 4294901760
  %v342 = vsub.f32 %v48, %v341
  %v343 = vand.u32 %v342, 4294901760
  %v344 = vsub.f32 %v342, %v343
  %v345 = vand.u32 %v344, 4294901760
  %346 = vmatprep.subr.mxu0 %v345
  %v347 = vand.u32 %v47, 4294901760
  %v348 = vsub.f32 %v47, %v347
  %v349 = vand.u32 %v348, 4294901760
  %v350 = vsub.f32 %v348, %v349
  %v351 = vand.u32 %v350, 4294901760
  %352 = vmatpush1.msra.mxu0 %v351
  %v353 = vand.u32 %v56, 4294901760
  %v354 = vsub.f32 %v56, %v353
  %v355 = vand.u32 %v354, 4294901760
  %v356 = vsub.f32 %v354, %v355
  %v357 = vand.u32 %v356, 4294901760
  %358 = vmatprep.subr.mxu0 %v357
  %v359 = vand.u32 %v55, 4294901760
  %v360 = vsub.f32 %v55, %v359
  %v361 = vand.u32 %v360, 4294901760
  %v362 = vsub.f32 %v360, %v361
  %v363 = vand.u32 %v362, 4294901760
  %364 = vmatpush1.msra.mxu0 %v363
  %v365 = vand.u32 %v64, 4294901760
  %v366 = vsub.f32 %v64, %v365
  %v367 = vand.u32 %v366, 4294901760
  %v368 = vsub.f32 %v366, %v367
  %v369 = vand.u32 %v368, 4294901760
  %370 = vmatprep.subr.mxu0 %v369
  %v371 = vand.u32 %v63, 4294901760
  %v372 = vsub.f32 %v63, %v371
  %v373 = vand.u32 %v372, 4294901760
  %v374 = vsub.f32 %v372, %v373
  %v375 = vand.u32 %v374, 4294901760
  %376 = vmatpush1.msra.mxu0 %v375
  %v377 = vand.u32 %v72, 4294901760
  %v378 = vsub.f32 %v72, %v377
  %v379 = vand.u32 %v378, 4294901760
  %v380 = vsub.f32 %v378, %v379
  %v381 = vand.u32 %v380, 4294901760
  %382 = vmatprep.subr.mxu0 %v381
  %v383 = vand.u32 %v71, 4294901760
  %v384 = vsub.f32 %v71, %v383
  %v385 = vand.u32 %v384, 4294901760
  %v386 = vsub.f32 %v384, %v385
  %v387 = vand.u32 %v386, 4294901760
  %388 = vmatpush1.msra.mxu0 %v387
  %v389 = vand.u32 %v80, 4294901760
  %v390 = vsub.f32 %v80, %v389
  %v391 = vand.u32 %v390, 4294901760
  %v392 = vsub.f32 %v390, %v391
  %v393 = vand.u32 %v392, 4294901760
  %394 = vmatprep.subr.mxu0 %v393
  %v395 = vand.u32 %v79, 4294901760
  %v396 = vsub.f32 %v79, %v395
  %v397 = vand.u32 %v396, 4294901760
  %v398 = vsub.f32 %v396, %v397
  %v399 = vand.u32 %v398, 4294901760
  %400 = vmatpush1.msra.mxu0 %v399
  %v401 = vand.u32 %v88, 4294901760
  %v402 = vsub.f32 %v88, %v401
  %v403 = vand.u32 %v402, 4294901760
  %v404 = vsub.f32 %v402, %v403
  %v405 = vand.u32 %v404, 4294901760
  %406 = vmatprep.subr.mxu0 %v405
  %v407 = vand.u32 %v87, 4294901760
  %v408 = vsub.f32 %v87, %v407
  %v409 = vand.u32 %v408, 4294901760
  %v410 = vsub.f32 %v408, %v409
  %v411 = vand.u32 %v410, 4294901760
  %412 = vmatpush1.msra.mxu0 %v411
  %v413 = vand.u32 %v96, 4294901760
  %v414 = vsub.f32 %v96, %v413
  %v415 = vand.u32 %v414, 4294901760
  %v416 = vsub.f32 %v414, %v415
  %v417 = vand.u32 %v416, 4294901760
  %418 = vmatprep.subr.mxu0 %v417
  %v419 = vand.u32 %v95, 4294901760
  %v420 = vsub.f32 %v95, %v419
  %v421 = vand.u32 %v420, 4294901760
  %v422 = vsub.f32 %v420, %v421
  %v423 = vand.u32 %v422, 4294901760
  %424 = vmatpush1.msra.mxu0 %v423
  %v425 = vand.u32 %v104, 4294901760
  %v426 = vsub.f32 %v104, %v425
  %v427 = vand.u32 %v426, 4294901760
  %v428 = vsub.f32 %v426, %v427
  %v429 = vand.u32 %v428, 4294901760
  %430 = vmatprep.subr.mxu0 %v429
  %v431 = vand.u32 %v103, 4294901760
  %v432 = vsub.f32 %v103, %v431
  %v433 = vand.u32 %v432, 4294901760
  %v434 = vsub.f32 %v432, %v433
  %v435 = vand.u32 %v434, 4294901760
  %436 = vmatpush1.msra.mxu0 %v435
  %v437 = vand.u32 %v112, 4294901760
  %v438 = vsub.f32 %v112, %v437
  %v439 = vand.u32 %v438, 4294901760
  %v440 = vsub.f32 %v438, %v439
  %v441 = vand.u32 %v440, 4294901760
  %442 = vmatprep.subr.mxu0 %v441
  %v443 = vand.u32 %v111, 4294901760
  %v444 = vsub.f32 %v111, %v443
  %v445 = vand.u32 %v444, 4294901760
  %v446 = vsub.f32 %v444, %v445
  %v447 = vand.u32 %v446, 4294901760
  %448 = vmatpush1.msra.mxu0 %v447
  %v449 = vand.u32 %v120, 4294901760
  %v450 = vsub.f32 %v120, %v449
  %v451 = vand.u32 %v450, 4294901760
  %v452 = vsub.f32 %v450, %v451
  %v453 = vand.u32 %v452, 4294901760
  %454 = vmatprep.subr.mxu0 %v453
  %v455 = vand.u32 %v119, 4294901760
  %v456 = vsub.f32 %v119, %v455
  %v457 = vand.u32 %v456, 4294901760
  %v458 = vsub.f32 %v456, %v457
  %v459 = vand.u32 %v458, 4294901760
  %460 = vmatpush1.msra.mxu0 %v459
  %v461 = vand.u32 %v128, 4294901760
  %v462 = vsub.f32 %v128, %v461
  %v463 = vand.u32 %v462, 4294901760
  %v464 = vsub.f32 %v462, %v463
  %v465 = vand.u32 %v464, 4294901760
  %466 = vmatprep.subr.mxu0 %v465
  %v467 = vand.u32 %v127, 4294901760
  %v468 = vsub.f32 %v127, %v467
  %v469 = vand.u32 %v468, 4294901760
  %v470 = vsub.f32 %v468, %v469
  %v471 = vand.u32 %v470, 4294901760
  %472 = vmatpush1.msra.mxu0 %v471
  %v473 = vand.u32 %v136, 4294901760
  %v474 = vsub.f32 %v136, %v473
  %v475 = vand.u32 %v474, 4294901760
  %v476 = vsub.f32 %v474, %v475
  %v477 = vand.u32 %v476, 4294901760
  %478 = vmatprep.subr.mxu0 %v477
  %v479 = vand.u32 %v135, 4294901760
  %v480 = vsub.f32 %v135, %v479
  %v481 = vand.u32 %v480, 4294901760
  %v482 = vsub.f32 %v480, %v481
  %v483 = vand.u32 %v482, 4294901760
  %484 = vmatpush1.msra.mxu0 %v483
  %485 = vmatprep.subr.mxu0 0.0
  %486 = vmatpush1.msra.mxu0 0.0
  %487 = vmatprep.subr.mxu0 0.0
  %488 = vmatpush1.msra.mxu0 0.0
  %489 = vmatprep.subr.mxu0 0.0
  %490 = vmatpush1.msra.mxu0 0.0
  %491 = vmatprep.subr.mxu0 0.0
  %492 = vmatpush1.msra.mxu0 0.0
  %493 = vmatprep.subr.mxu0 0.0
  %494 = vmatpush1.msra.mxu0 0.0
  %495 = vmatprep.subr.mxu0 0.0
  %496 = vmatpush1.msra.mxu0 0.0
  %497 = vmatprep.subr.mxu0 0.0
  %498 = vmatpush1.msra.mxu0 0.0
  %499 = vmatprep.subr.mxu0 0.0
  %500 = vmatpush1.msra.mxu0 0.0
  %501 = vmatprep.subr.mxu0 0.0
  %502 = vmatpush1.msra.mxu0 0.0
  %503 = vmatprep.subr.mxu0 0.0
  %504 = vmatpush1.msra.mxu0 0.0
  %505 = vmatprep.subr.mxu0 0.0
  %506 = vmatpush1.msra.mxu0 0.0
  %507 = vmatprep.subr.mxu0 0.0
  %508 = vmatpush1.msra.mxu0 0.0
  %509 = vmatprep.subr.mxu0 0.0
  %510 = vmatpush1.msra.mxu0 0.0
  %511 = vmatprep.subr.mxu0 0.0
  %512 = vmatpush1.msra.mxu0 0.0
  %513 = vmatprep.subr.mxu0 0.0
  %514 = vmatpush1.msra.mxu0 0.0
  %515 = vmatprep.subr.mxu0 0.0
  %516 = vmatpush1.msra.mxu0 0.0
  %517 = vmatprep.mubr.f32.mxu0 0.0
  %v518 = vand.u32 %v14, 4294901760
  %519 = vmatmul.mubr.f32.gmra.mrb[0].mxu0 %v518
  %v520 = vpop.f32.mrb[0].mxu0
  %v521 = vadd.f32 %v289, %v520
  %v522 = vpop.f32.mrb[0].mxu0
  %v523 = vadd.f32 %v291, %v522
  %524 = vdwg.mxu0
  %v525 = vand.u32 %v16, 4294901760
  %v526 = vsub.f32 %v16, %v525
  %527 = vmatprep.subr.mxu0 %v526
  %v528 = vand.u32 %v15, 4294901760
  %v529 = vsub.f32 %v15, %v528
  %530 = vmatpush1.msra.mxu0 %v529
  %v531 = vand.u32 %v24, 4294901760
  %v532 = vsub.f32 %v24, %v531
  %533 = vmatprep.subr.mxu0 %v532
  %v534 = vand.u32 %v23, 4294901760
  %v535 = vsub.f32 %v23, %v534
  %536 = vmatpush1.msra.mxu0 %v535
  %v537 = vand.u32 %v32, 4294901760
  %v538 = vsub.f32 %v32, %v537
  %539 = vmatprep.subr.mxu0 %v538
  %v540 = vand.u32 %v31, 4294901760
  %v541 = vsub.f32 %v31, %v540
  %542 = vmatpush1.msra.mxu0 %v541
  %v543 = vand.u32 %v40, 4294901760
  %v544 = vsub.f32 %v40, %v543
  %545 = vmatprep.subr.mxu0 %v544
  %v546 = vand.u32 %v39, 4294901760
  %v547 = vsub.f32 %v39, %v546
  %548 = vmatpush1.msra.mxu0 %v547
  %v549 = vand.u32 %v48, 4294901760
  %v550 = vsub.f32 %v48, %v549
  %551 = vmatprep.subr.mxu0 %v550
  %v552 = vand.u32 %v47, 4294901760
  %v553 = vsub.f32 %v47, %v552
  %554 = vmatpush1.msra.mxu0 %v553
  %v555 = vand.u32 %v56, 4294901760
  %v556 = vsub.f32 %v56, %v555
  %557 = vmatprep.subr.mxu0 %v556
  %v558 = vand.u32 %v55, 4294901760
  %v559 = vsub.f32 %v55, %v558
  %560 = vmatpush1.msra.mxu0 %v559
  %v561 = vand.u32 %v64, 4294901760
  %v562 = vsub.f32 %v64, %v561
  %563 = vmatprep.subr.mxu0 %v562
  %v564 = vand.u32 %v63, 4294901760
  %v565 = vsub.f32 %v63, %v564
  %566 = vmatpush1.msra.mxu0 %v565
  %v567 = vand.u32 %v72, 4294901760
  %v568 = vsub.f32 %v72, %v567
  %569 = vmatprep.subr.mxu0 %v568
  %v570 = vand.u32 %v71, 4294901760
  %v571 = vsub.f32 %v71, %v570
  %572 = vmatpush1.msra.mxu0 %v571
  %v573 = vand.u32 %v80, 4294901760
  %v574 = vsub.f32 %v80, %v573
  %575 = vmatprep.subr.mxu0 %v574
  %v576 = vand.u32 %v79, 4294901760
  %v577 = vsub.f32 %v79, %v576
  %578 = vmatpush1.msra.mxu0 %v577
  %v579 = vand.u32 %v88, 4294901760
  %v580 = vsub.f32 %v88, %v579
  %581 = vmatprep.subr.mxu0 %v580
  %v582 = vand.u32 %v87, 4294901760
  %v583 = vsub.f32 %v87, %v582
  %584 = vmatpush1.msra.mxu0 %v583
  %v585 = vand.u32 %v96, 4294901760
  %v586 = vsub.f32 %v96, %v585
  %587 = vmatprep.subr.mxu0 %v586
  %v588 = vand.u32 %v95, 4294901760
  %v589 = vsub.f32 %v95, %v588
  %590 = vmatpush1.msra.mxu0 %v589
  %v591 = vand.u32 %v104, 4294901760
  %v592 = vsub.f32 %v104, %v591
  %593 = vmatprep.subr.mxu0 %v592
  %v594 = vand.u32 %v103, 4294901760
  %v595 = vsub.f32 %v103, %v594
  %596 = vmatpush1.msra.mxu0 %v595
  %v597 = vand.u32 %v112, 4294901760
  %v598 = vsub.f32 %v112, %v597
  %599 = vmatprep.subr.mxu0 %v598
  %v600 = vand.u32 %v111, 4294901760
  %v601 = vsub.f32 %v111, %v600
  %602 = vmatpush1.msra.mxu0 %v601
  %v603 = vand.u32 %v120, 4294901760
  %v604 = vsub.f32 %v120, %v603
  %605 = vmatprep.subr.mxu0 %v604
  %v606 = vand.u32 %v119, 4294901760
  %v607 = vsub.f32 %v119, %v606
  %608 = vmatpush1.msra.mxu0 %v607
  %v609 = vand.u32 %v128, 4294901760
  %v610 = vsub.f32 %v128, %v609
  %611 = vmatprep.subr.mxu0 %v610
  %v612 = vand.u32 %v127, 4294901760
  %v613 = vsub.f32 %v127, %v612
  %614 = vmatpush1.msra.mxu0 %v613
  %v615 = vand.u32 %v136, 4294901760
  %v616 = vsub.f32 %v136, %v615
  %617 = vmatprep.subr.mxu0 %v616
  %v618 = vand.u32 %v135, 4294901760
  %v619 = vsub.f32 %v135, %v618
  %620 = vmatpush1.msra.mxu0 %v619
  %621 = vmatprep.subr.mxu0 0.0
  %622 = vmatpush1.msra.mxu0 0.0
  %623 = vmatprep.subr.mxu0 0.0
  %624 = vmatpush1.msra.mxu0 0.0
  %625 = vmatprep.subr.mxu0 0.0
  %626 = vmatpush1.msra.mxu0 0.0
  %627 = vmatprep.subr.mxu0 0.0
  %628 = vmatpush1.msra.mxu0 0.0
  %629 = vmatprep.subr.mxu0 0.0
  %630 = vmatpush1.msra.mxu0 0.0
  %631 = vmatprep.subr.mxu0 0.0
  %632 = vmatpush1.msra.mxu0 0.0
  %633 = vmatprep.subr.mxu0 0.0
  %634 = vmatpush1.msra.mxu0 0.0
  %635 = vmatprep.subr.mxu0 0.0
  %636 = vmatpush1.msra.mxu0 0.0
  %637 = vmatprep.subr.mxu0 0.0
  %638 = vmatpush1.msra.mxu0 0.0
  %639 = vmatprep.subr.mxu0 0.0
  %640 = vmatpush1.msra.mxu0 0.0
  %641 = vmatprep.subr.mxu0 0.0
  %642 = vmatpush1.msra.mxu0 0.0
  %643 = vmatprep.subr.mxu0 0.0
  %644 = vmatpush1.msra.mxu0 0.0
  %645 = vmatprep.subr.mxu0 0.0
  %646 = vmatpush1.msra.mxu0 0.0
  %647 = vmatprep.subr.mxu0 0.0
  %648 = vmatpush1.msra.mxu0 0.0
  %649 = vmatprep.subr.mxu0 0.0
  %650 = vmatpush1.msra.mxu0 0.0
  %651 = vmatprep.subr.mxu0 0.0
  %652 = vmatpush1.msra.mxu0 0.0
  %653 = vmatprep.mubr.f32.mxu0 0.0
  %v654 = vand.u32 %v14, 4294901760
  %v655 = vsub.f32 %v14, %v654
  %656 = vmatmul.mubr.f32.gmra.mrb[0].mxu0 %v655
  %v657 = vpop.f32.mrb[0].mxu0
  %v658 = vadd.f32 %v521, %v657
  %v659 = vpop.f32.mrb[0].mxu0
  %v660 = vadd.f32 %v523, %v659
  %661 = vdwg.mxu0
  %v662 = vand.u32 %v16, 4294901760
  %663 = vmatprep.subr.mxu0 %v662
  %v664 = vand.u32 %v15, 4294901760
  %665 = vmatpush1.msra.mxu0 %v664
  %v666 = vand.u32 %v24, 4294901760
  %667 = vmatprep.subr.mxu0 %v666
  %v668 = vand.u32 %v23, 4294901760
  %669 = vmatpush1.msra.mxu0 %v668
  %v670 = vand.u32 %v32, 4294901760
  %671 = vmatprep.subr.mxu0 %v670
  %v672 = vand.u32 %v31, 4294901760
  %673 = vmatpush1.msra.mxu0 %v672
  %v674 = vand.u32 %v40, 4294901760
  %675 = vmatprep.subr.mxu0 %v674
  %v676 = vand.u32 %v39, 4294901760
  %677 = vmatpush1.msra.mxu0 %v676
  %v678 = vand.u32 %v48, 4294901760
  %679 = vmatprep.subr.mxu0 %v678
  %v680 = vand.u32 %v47, 4294901760
  %681 = vmatpush1.msra.mxu0 %v680
  %v682 = vand.u32 %v56, 4294901760
  %683 = vmatprep.subr.mxu0 %v682
  %v684 = vand.u32 %v55, 4294901760
  %685 = vmatpush1.msra.mxu0 %v684
  %v686 = vand.u32 %v64, 4294901760
  %687 = vmatprep.subr.mxu0 %v686
  %v688 = vand.u32 %v63, 4294901760
  %689 = vmatpush1.msra.mxu0 %v688
  %v690 = vand.u32 %v72, 4294901760
  %691 = vmatprep.subr.mxu0 %v690
  %v692 = vand.u32 %v71, 4294901760
  %693 = vmatpush1.msra.mxu0 %v692
  %v694 = vand.u32 %v80, 4294901760
  %695 = vmatprep.subr.mxu0 %v694
  %v696 = vand.u32 %v79, 4294901760
  %697 = vmatpush1.msra.mxu0 %v696
  %v698 = vand.u32 %v88, 4294901760
  %699 = vmatprep.subr.mxu0 %v698
  %v700 = vand.u32 %v87, 4294901760
  %701 = vmatpush1.msra.mxu0 %v700
  %v702 = vand.u32 %v96, 4294901760
  %703 = vmatprep.subr.mxu0 %v702
  %v704 = vand.u32 %v95, 4294901760
  %705 = vmatpush1.msra.mxu0 %v704
  %v706 = vand.u32 %v104, 4294901760
  %707 = vmatprep.subr.mxu0 %v706
  %v708 = vand.u32 %v103, 4294901760
  %709 = vmatpush1.msra.mxu0 %v708
  %v710 = vand.u32 %v112, 4294901760
  %711 = vmatprep.subr.mxu0 %v710
  %v712 = vand.u32 %v111, 4294901760
  %713 = vmatpush1.msra.mxu0 %v712
  %v714 = vand.u32 %v120, 4294901760
  %715 = vmatprep.subr.mxu0 %v714
  %v716 = vand.u32 %v119, 4294901760
  %717 = vmatpush1.msra.mxu0 %v716
  %v718 = vand.u32 %v128, 4294901760
  %719 = vmatprep.subr.mxu0 %v718
  %v720 = vand.u32 %v127, 4294901760
  %721 = vmatpush1.msra.mxu0 %v720
  %v722 = vand.u32 %v136, 4294901760
  %723 = vmatprep.subr.mxu0 %v722
  %v724 = vand.u32 %v135, 4294901760
  %725 = vmatpush1.msra.mxu0 %v724
  %726 = vmatprep.subr.mxu0 0.0
  %727 = vmatpush1.msra.mxu0 0.0
  %728 = vmatprep.subr.mxu0 0.0
  %729 = vmatpush1.msra.mxu0 0.0
  %730 = vmatprep.subr.mxu0 0.0
  %731 = vmatpush1.msra.mxu0 0.0
  %732 = vmatprep.subr.mxu0 0.0
  %733 = vmatpush1.msra.mxu0 0.0
  %734 = vmatprep.subr.mxu0 0.0
  %735 = vmatpush1.msra.mxu0 0.0
  %736 = vmatprep.subr.mxu0 0.0
  %737 = vmatpush1.msra.mxu0 0.0
  %738 = vmatprep.subr.mxu0 0.0
  %739 = vmatpush1.msra.mxu0 0.0
  %740 = vmatprep.subr.mxu0 0.0
  %741 = vmatpush1.msra.mxu0 0.0
  %742 = vmatprep.subr.mxu0 0.0
  %743 = vmatpush1.msra.mxu0 0.0
  %744 = vmatprep.subr.mxu0 0.0
  %745 = vmatpush1.msra.mxu0 0.0
  %746 = vmatprep.subr.mxu0 0.0
  %747 = vmatpush1.msra.mxu0 0.0
  %748 = vmatprep.subr.mxu0 0.0
  %749 = vmatpush1.msra.mxu0 0.0
  %750 = vmatprep.subr.mxu0 0.0
  %751 = vmatpush1.msra.mxu0 0.0
  %752 = vmatprep.subr.mxu0 0.0
  %753 = vmatpush1.msra.mxu0 0.0
  %754 = vmatprep.subr.mxu0 0.0
  %755 = vmatpush1.msra.mxu0 0.0
  %756 = vmatprep.subr.mxu0 0.0
  %757 = vmatpush1.msra.mxu0 0.0
  %758 = vmatprep.mubr.f32.mxu0 0.0
  %v759 = vand.u32 %v14, 4294901760
  %v760 = vsub.f32 %v14, %v759
  %v761 = vand.u32 %v760, 4294901760
  %762 = vmatmul.mubr.f32.gmra.mrb[0].mxu0 %v761
  %v763 = vpop.f32.mrb[0].mxu0
  %v764 = vadd.f32 %v658, %v763
  %v765 = vpop.f32.mrb[0].mxu0
  %v766 = vadd.f32 %v660, %v765
  %767 = vdwg.mxu0
  %v768 = vand.u32 %v16, 4294901760
  %v769 = vsub.f32 %v16, %v768
  %v770 = vand.u32 %v769, 4294901760
  %771 = vmatprep.subr.mxu0 %v770
  %v772 = vand.u32 %v15, 4294901760
  %v773 = vsub.f32 %v15, %v772
  %v774 = vand.u32 %v773, 4294901760
  %775 = vmatpush1.msra.mxu0 %v774
  %v776 = vand.u32 %v24, 4294901760
  %v777 = vsub.f32 %v24, %v776
  %v778 = vand.u32 %v777, 4294901760
  %779 = vmatprep.subr.mxu0 %v778
  %v780 = vand.u32 %v23, 4294901760
  %v781 = vsub.f32 %v23, %v780
  %v782 = vand.u32 %v781, 4294901760
  %783 = vmatpush1.msra.mxu0 %v782
  %v784 = vand.u32 %v32, 4294901760
  %v785 = vsub.f32 %v32, %v784
  %v786 = vand.u32 %v785, 4294901760
  %787 = vmatprep.subr.mxu0 %v786
  %v788 = vand.u32 %v31, 4294901760
  %v789 = vsub.f32 %v31, %v788
  %v790 = vand.u32 %v789, 4294901760
  %791 = vmatpush1.msra.mxu0 %v790
  %v792 = vand.u32 %v40, 4294901760
  %v793 = vsub.f32 %v40, %v792
  %v794 = vand.u32 %v793, 4294901760
  %795 = vmatprep.subr.mxu0 %v794
  %v796 = vand.u32 %v39, 4294901760
  %v797 = vsub.f32 %v39, %v796
  %v798 = vand.u32 %v797, 4294901760
  %799 = vmatpush1.msra.mxu0 %v798
  %v800 = vand.u32 %v48, 4294901760
  %v801 = vsub.f32 %v48, %v800
  %v802 = vand.u32 %v801, 4294901760
  %803 = vmatprep.subr.mxu0 %v802
  %v804 = vand.u32 %v47, 4294901760
  %v805 = vsub.f32 %v47, %v804
  %v806 = vand.u32 %v805, 4294901760
  %807 = vmatpush1.msra.mxu0 %v806
  %v808 = vand.u32 %v56, 4294901760
  %v809 = vsub.f32 %v56, %v808
  %v810 = vand.u32 %v809, 4294901760
  %811 = vmatprep.subr.mxu0 %v810
  %v812 = vand.u32 %v55, 4294901760
  %v813 = vsub.f32 %v55, %v812
  %v814 = vand.u32 %v813, 4294901760
  %815 = vmatpush1.msra.mxu0 %v814
  %v816 = vand.u32 %v64, 4294901760
  %v817 = vsub.f32 %v64, %v816
  %v818 = vand.u32 %v817, 4294901760
  %819 = vmatprep.subr.mxu0 %v818
  %v820 = vand.u32 %v63, 4294901760
  %v821 = vsub.f32 %v63, %v820
  %v822 = vand.u32 %v821, 4294901760
  %823 = vmatpush1.msra.mxu0 %v822
  %v824 = vand.u32 %v72, 4294901760
  %v825 = vsub.f32 %v72, %v824
  %v826 = vand.u32 %v825, 4294901760
  %827 = vmatprep.subr.mxu0 %v826
  %v828 = vand.u32 %v71, 4294901760
  %v829 = vsub.f32 %v71, %v828
  %v830 = vand.u32 %v829, 4294901760
  %831 = vmatpush1.msra.mxu0 %v830
  %v832 = vand.u32 %v80, 4294901760
  %v833 = vsub.f32 %v80, %v832
  %v834 = vand.u32 %v833, 4294901760
  %835 = vmatprep.subr.mxu0 %v834
  %v836 = vand.u32 %v79, 4294901760
  %v837 = vsub.f32 %v79, %v836
  %v838 = vand.u32 %v837, 4294901760
  %839 = vmatpush1.msra.mxu0 %v838
  %v840 = vand.u32 %v88, 4294901760
  %v841 = vsub.f32 %v88, %v840
  %v842 = vand.u32 %v841, 4294901760
  %843 = vmatprep.subr.mxu0 %v842
  %v844 = vand.u32 %v87, 4294901760
  %v845 = vsub.f32 %v87, %v844
  %v846 = vand.u32 %v845, 4294901760
  %847 = vmatpush1.msra.mxu0 %v846
  %v848 = vand.u32 %v96, 4294901760
  %v849 = vsub.f32 %v96, %v848
  %v850 = vand.u32 %v849, 4294901760
  %851 = vmatprep.subr.mxu0 %v850
  %v852 = vand.u32 %v95, 4294901760
  %v853 = vsub.f32 %v95, %v852
  %v854 = vand.u32 %v853, 4294901760
  %855 = vmatpush1.msra.mxu0 %v854
  %v856 = vand.u32 %v104, 4294901760
  %v857 = vsub.f32 %v104, %v856
  %v858 = vand.u32 %v857, 4294901760
  %859 = vmatprep.subr.mxu0 %v858
  %v860 = vand.u32 %v103, 4294901760
  %v861 = vsub.f32 %v103, %v860
  %v862 = vand.u32 %v861, 4294901760
  %863 = vmatpush1.msra.mxu0 %v862
  %v864 = vand.u32 %v112, 4294901760
  %v865 = vsub.f32 %v112, %v864
  %v866 = vand.u32 %v865, 4294901760
  %867 = vmatprep.subr.mxu0 %v866
  %v868 = vand.u32 %v111, 4294901760
  %v869 = vsub.f32 %v111, %v868
  %v870 = vand.u32 %v869, 4294901760
  %871 = vmatpush1.msra.mxu0 %v870
  %v872 = vand.u32 %v120, 4294901760
  %v873 = vsub.f32 %v120, %v872
  %v874 = vand.u32 %v873, 4294901760
  %875 = vmatprep.subr.mxu0 %v874
  %v876 = vand.u32 %v119, 4294901760
  %v877 = vsub.f32 %v119, %v876
  %v878 = vand.u32 %v877, 4294901760
  %879 = vmatpush1.msra.mxu0 %v878
  %v880 = vand.u32 %v128, 4294901760
  %v881 = vsub.f32 %v128, %v880
  %v882 = vand.u32 %v881, 4294901760
  %883 = vmatprep.subr.mxu0 %v882
  %v884 = vand.u32 %v127, 4294901760
  %v885 = vsub.f32 %v127, %v884
  %v886 = vand.u32 %v885, 4294901760
  %887 = vmatpush1.msra.mxu0 %v886
  %v888 = vand.u32 %v136, 4294901760
  %v889 = vsub.f32 %v136, %v888
  %v890 = vand.u32 %v889, 4294901760
  %891 = vmatprep.subr.mxu0 %v890
  %v892 = vand.u32 %v135, 4294901760
  %v893 = vsub.f32 %v135, %v892
  %v894 = vand.u32 %v893, 4294901760
  %895 = vmatpush1.msra.mxu0 %v894
  %896 = vmatprep.subr.mxu0 0.0
  %897 = vmatpush1.msra.mxu0 0.0
  %898 = vmatprep.subr.mxu0 0.0
  %899 = vmatpush1.msra.mxu0 0.0
  %900 = vmatprep.subr.mxu0 0.0
  %901 = vmatpush1.msra.mxu0 0.0
  %902 = vmatprep.subr.mxu0 0.0
  %903 = vmatpush1.msra.mxu0 0.0
  %904 = vmatprep.subr.mxu0 0.0
  %905 = vmatpush1.msra.mxu0 0.0
  %906 = vmatprep.subr.mxu0 0.0
  %907 = vmatpush1.msra.mxu0 0.0
  %908 = vmatprep.subr.mxu0 0.0
  %909 = vmatpush1.msra.mxu0 0.0
  %910 = vmatprep.subr.mxu0 0.0
  %911 = vmatpush1.msra.mxu0 0.0
  %912 = vmatprep.subr.mxu0 0.0
  %913 = vmatpush1.msra.mxu0 0.0
  %914 = vmatprep.subr.mxu0 0.0
  %915 = vmatpush1.msra.mxu0 0.0
  %916 = vmatprep.subr.mxu0 0.0
  %917 = vmatpush1.msra.mxu0 0.0
  %918 = vmatprep.subr.mxu0 0.0
  %919 = vmatpush1.msra.mxu0 0.0
  %920 = vmatprep.subr.mxu0 0.0
  %921 = vmatpush1.msra.mxu0 0.0
  %922 = vmatprep.subr.mxu0 0.0
  %923 = vmatpush1.msra.mxu0 0.0
  %924 = vmatprep.subr.mxu0 0.0
  %925 = vmatpush1.msra.mxu0 0.0
  %926 = vmatprep.subr.mxu0 0.0
  %927 = vmatpush1.msra.mxu0 0.0
  %928 = vmatprep.mubr.f32.mxu0 0.0
  %v929 = vand.u32 %v14, 4294901760
  %930 = vmatmul.mubr.f32.gmra.mrb[0].mxu0 %v929
  %v931 = vpop.f32.mrb[0].mxu0
  %v932 = vadd.f32 %v764, %v931
  %v933 = vpop.f32.mrb[0].mxu0
  %v934 = vadd.f32 %v766, %v933
  %935 = vdwg.mxu0
  %v936 = vand.u32 %v16, 4294901760
  %937 = vmatprep.subr.mxu0 %v936
  %v938 = vand.u32 %v15, 4294901760
  %939 = vmatpush1.msra.mxu0 %v938
  %v940 = vand.u32 %v24, 4294901760
  %941 = vmatprep.subr.mxu0 %v940
  %v942 = vand.u32 %v23, 4294901760
  %943 = vmatpush1.msra.mxu0 %v942
  %v944 = vand.u32 %v32, 4294901760
  %945 = vmatprep.subr.mxu0 %v944
  %v946 = vand.u32 %v31, 4294901760
  %947 = vmatpush1.msra.mxu0 %v946
  %v948 = vand.u32 %v40, 4294901760
  %949 = vmatprep.subr.mxu0 %v948
  %v950 = vand.u32 %v39, 4294901760
  %951 = vmatpush1.msra.mxu0 %v950
  %v952 = vand.u32 %v48, 4294901760
  %953 = vmatprep.subr.mxu0 %v952
  %v954 = vand.u32 %v47, 4294901760
  %955 = vmatpush1.msra.mxu0 %v954
  %v956 = vand.u32 %v56, 4294901760
  %957 = vmatprep.subr.mxu0 %v956
  %v958 = vand.u32 %v55, 4294901760
  %959 = vmatpush1.msra.mxu0 %v958
  %v960 = vand.u32 %v64, 4294901760
  %961 = vmatprep.subr.mxu0 %v960
  %v962 = vand.u32 %v63, 4294901760
  %963 = vmatpush1.msra.mxu0 %v962
  %v964 = vand.u32 %v72, 4294901760
  %965 = vmatprep.subr.mxu0 %v964
  %v966 = vand.u32 %v71, 4294901760
  %967 = vmatpush1.msra.mxu0 %v966
  %v968 = vand.u32 %v80, 4294901760
  %969 = vmatprep.subr.mxu0 %v968
  %v970 = vand.u32 %v79, 4294901760
  %971 = vmatpush1.msra.mxu0 %v970
  %v972 = vand.u32 %v88, 4294901760
  %973 = vmatprep.subr.mxu0 %v972
  %v974 = vand.u32 %v87, 4294901760
  %975 = vmatpush1.msra.mxu0 %v974
  %v976 = vand.u32 %v96, 4294901760
  %977 = vmatprep.subr.mxu0 %v976
  %v978 = vand.u32 %v95, 4294901760
  %979 = vmatpush1.msra.mxu0 %v978
  %v980 = vand.u32 %v104, 4294901760
  %981 = vmatprep.subr.mxu0 %v980
  %v982 = vand.u32 %v103, 4294901760
  %983 = vmatpush1.msra.mxu0 %v982
  %v984 = vand.u32 %v112, 4294901760
  %985 = vmatprep.subr.mxu0 %v984
  %v986 = vand.u32 %v111, 4294901760
  %987 = vmatpush1.msra.mxu0 %v986
  %v988 = vand.u32 %v120, 4294901760
  %989 = vmatprep.subr.mxu0 %v988
  %v990 = vand.u32 %v119, 4294901760
  %991 = vmatpush1.msra.mxu0 %v990
  %v992 = vand.u32 %v128, 4294901760
  %993 = vmatprep.subr.mxu0 %v992
  %v994 = vand.u32 %v127, 4294901760
  %995 = vmatpush1.msra.mxu0 %v994
  %v996 = vand.u32 %v136, 4294901760
  %997 = vmatprep.subr.mxu0 %v996
  %v998 = vand.u32 %v135, 4294901760
  %999 = vmatpush1.msra.mxu0 %v998
  %1000 = vmatprep.subr.mxu0 0.0
  %1001 = vmatpush1.msra.mxu0 0.0
  %1002 = vmatprep.subr.mxu0 0.0
  %1003 = vmatpush1.msra.mxu0 0.0
  %1004 = vmatprep.subr.mxu0 0.0
  %1005 = vmatpush1.msra.mxu0 0.0
  %1006 = vmatprep.subr.mxu0 0.0
  %1007 = vmatpush1.msra.mxu0 0.0
  %1008 = vmatprep.subr.mxu0 0.0
  %1009 = vmatpush1.msra.mxu0 0.0
  %1010 = vmatprep.subr.mxu0 0.0
  %1011 = vmatpush1.msra.mxu0 0.0
  %1012 = vmatprep.subr.mxu0 0.0
  %1013 = vmatpush1.msra.mxu0 0.0
  %1014 = vmatprep.subr.mxu0 0.0
  %1015 = vmatpush1.msra.mxu0 0.0
  %1016 = vmatprep.subr.mxu0 0.0
  %1017 = vmatpush1.msra.mxu0 0.0
  %1018 = vmatprep.subr.mxu0 0.0
  %1019 = vmatpush1.msra.mxu0 0.0
  %1020 = vmatprep.subr.mxu0 0.0
  %1021 = vmatpush1.msra.mxu0 0.0
  %1022 = vmatprep.subr.mxu0 0.0
  %1023 = vmatpush1.msra.mxu0 0.0
  %1024 = vmatprep.subr.mxu0 0.0
  %1025 = vmatpush1.msra.mxu0 0.0
  %1026 = vmatprep.subr.mxu0 0.0
  %1027 = vmatpush1.msra.mxu0 0.0
  %1028 = vmatprep.subr.mxu0 0.0
  %1029 = vmatpush1.msra.mxu0 0.0
  %1030 = vmatprep.subr.mxu0 0.0
  %1031 = vmatpush1.msra.mxu0 0.0
  %1032 = vmatprep.mubr.f32.mxu0 0.0
  %v1033 = vand.u32 %v14, 4294901760
  %1034 = vmatmul.mubr.f32.gmra.mrb[0].mxu0 %v1033
  %v1035 = vpop.f32.mrb[0].mxu0
  %v1036 = vadd.f32 %v932, %v1035
  %v1037 = vpop.f32.mrb[0].mxu0
  %v1038 = vadd.f32 %v934, %v1037
  %1039 = vdwg.mxu0
  %v1040 = vand.u32 %v18, 4294901760
  %1041 = vmatprep.subr.mxu0 %v1040
  %v1042 = vand.u32 %v17, 4294901760
  %1043 = vmatpush1.msra.mxu0 %v1042
  %v1044 = vand.u32 %v26, 4294901760
  %1045 = vmatprep.subr.mxu0 %v1044
  %v1046 = vand.u32 %v25, 4294901760
  %1047 = vmatpush1.msra.mxu0 %v1046
  %v1048 = vand.u32 %v34, 4294901760
  %1049 = vmatprep.subr.mxu0 %v1048
  %v1050 = vand.u32 %v33, 4294901760
  %1051 = vmatpush1.msra.mxu0 %v1050
  %v1052 = vand.u32 %v42, 4294901760
  %1053 = vmatprep.subr.mxu0 %v1052
  %v1054 = vand.u32 %v41, 4294901760
  %1055 = vmatpush1.msra.mxu0 %v1054
  %v1056 = vand.u32 %v50, 4294901760
  %1057 = vmatprep.subr.mxu0 %v1056
  %v1058 = vand.u32 %v49, 4294901760
  %1059 = vmatpush1.msra.mxu0 %v1058
  %v1060 = vand.u32 %v58, 4294901760
  %1061 = vmatprep.subr.mxu0 %v1060
  %v1062 = vand.u32 %v57, 4294901760
  %1063 = vmatpush1.msra.mxu0 %v1062
  %v1064 = vand.u32 %v66, 4294901760
  %1065 = vmatprep.subr.mxu0 %v1064
  %v1066 = vand.u32 %v65, 4294901760
  %1067 = vmatpush1.msra.mxu0 %v1066
  %v1068 = vand.u32 %v74, 4294901760
  %1069 = vmatprep.subr.mxu0 %v1068
  %v1070 = vand.u32 %v73, 4294901760
  %1071 = vmatpush1.msra.mxu0 %v1070
  %v1072 = vand.u32 %v82, 4294901760
  %1073 = vmatprep.subr.mxu0 %v1072
  %v1074 = vand.u32 %v81, 4294901760
  %1075 = vmatpush1.msra.mxu0 %v1074
  %v1076 = vand.u32 %v90, 4294901760
  %1077 = vmatprep.subr.mxu0 %v1076
  %v1078 = vand.u32 %v89, 4294901760
  %1079 = vmatpush1.msra.mxu0 %v1078
  %v1080 = vand.u32 %v98, 4294901760
  %1081 = vmatprep.subr.mxu0 %v1080
  %v1082 = vand.u32 %v97, 4294901760
  %1083 = vmatpush1.msra.mxu0 %v1082
  %v1084 = vand.u32 %v106, 4294901760
  %1085 = vmatprep.subr.mxu0 %v1084
  %v1086 = vand.u32 %v105, 4294901760
  %1087 = vmatpush1.msra.mxu0 %v1086
  %v1088 = vand.u32 %v114, 4294901760
  %1089 = vmatprep.subr.mxu0 %v1088
  %v1090 = vand.u32 %v113, 4294901760
  %1091 = vmatpush1.msra.mxu0 %v1090
  %v1092 = vand.u32 %v122, 4294901760
  %1093 = vmatprep.subr.mxu0 %v1092
  %v1094 = vand.u32 %v121, 4294901760
  %1095 = vmatpush1.msra.mxu0 %v1094
  %v1096 = vand.u32 %v130, 4294901760
  %1097 = vmatprep.subr.mxu0 %v1096
  %v1098 = vand.u32 %v129, 4294901760
  %1099 = vmatpush1.msra.mxu0 %v1098
  %v1100 = vand.u32 %v138, 4294901760
  %1101 = vmatprep.subr.mxu0 %v1100
  %v1102 = vand.u32 %v137, 4294901760
  %1103 = vmatpush1.msra.mxu0 %v1102
  %1104 = vmatprep.subr.mxu0 0.0
  %1105 = vmatpush1.msra.mxu0 0.0
  %1106 = vmatprep.subr.mxu0 0.0
  %1107 = vmatpush1.msra.mxu0 0.0
  %1108 = vmatprep.subr.mxu0 0.0
  %1109 = vmatpush1.msra.mxu0 0.0
  %1110 = vmatprep.subr.mxu0 0.0
  %1111 = vmatpush1.msra.mxu0 0.0
  %1112 = vmatprep.subr.mxu0 0.0
  %1113 = vmatpush1.msra.mxu0 0.0
  %1114 = vmatprep.subr.mxu0 0.0
  %1115 = vmatpush1.msra.mxu0 0.0
  %1116 = vmatprep.subr.mxu0 0.0
  %1117 = vmatpush1.msra.mxu0 0.0
  %1118 = vmatprep.subr.mxu0 0.0
  %1119 = vmatpush1.msra.mxu0 0.0
  %1120 = vmatprep.subr.mxu0 0.0
  %1121 = vmatpush1.msra.mxu0 0.0
  %1122 = vmatprep.subr.mxu0 0.0
  %1123 = vmatpush1.msra.mxu0 0.0
  %1124 = vmatprep.subr.mxu0 0.0
  %1125 = vmatpush1.msra.mxu0 0.0
  %1126 = vmatprep.subr.mxu0 0.0
  %1127 = vmatpush1.msra.mxu0 0.0
  %1128 = vmatprep.subr.mxu0 0.0
  %1129 = vmatpush1.msra.mxu0 0.0
  %1130 = vmatprep.subr.mxu0 0.0
  %1131 = vmatpush1.msra.mxu0 0.0
  %1132 = vmatprep.subr.mxu0 0.0
  %1133 = vmatpush1.msra.mxu0 0.0
  %1134 = vmatprep.subr.mxu0 0.0
  %1135 = vmatpush1.msra.mxu0 0.0
  %1136 = vmatprep.mubr.f32.mxu0 0.0
  %v1137 = vand.u32 %v14, 4294901760
  %v1138 = vsub.f32 %v14, %v1137
  %v1139 = vand.u32 %v1138, 4294901760
  %v1140 = vsub.f32 %v1138, %v1139
  %v1141 = vand.u32 %v1140, 4294901760
  %1142 = vmatmul.mubr.f32.gmra.mrb[0].mxu0 %v1141
  %v1143 = vpop.f32.mrb[0].mxu0
  %v1144 = vadd.f32 %v156, %v1143
  %v1145 = vpop.f32.mrb[0].mxu0
  %v1146 = vadd.f32 %v160, %v1145
  %1147 = vdwg.mxu0
  %v1148 = vand.u32 %v18, 4294901760
  %v1149 = vsub.f32 %v18, %v1148
  %v1150 = vand.u32 %v1149, 4294901760
  %v1151 = vsub.f32 %v1149, %v1150
  %v1152 = vand.u32 %v1151, 4294901760
  %1153 = vmatprep.subr.mxu0 %v1152
  %v1154 = vand.u32 %v17, 4294901760
  %v1155 = vsub.f32 %v17, %v1154
  %v1156 = vand.u32 %v1155, 4294901760
  %v1157 = vsub.f32 %v1155, %v1156
  %v1158 = vand.u32 %v1157, 4294901760
  %1159 = vmatpush1.msra.mxu0 %v1158
  %v1160 = vand.u32 %v26, 4294901760
  %v1161 = vsub.f32 %v26, %v1160
  %v1162 = vand.u32 %v1161, 4294901760
  %v1163 = vsub.f32 %v1161, %v1162
  %v1164 = vand.u32 %v1163, 4294901760
  %1165 = vmatprep.subr.mxu0 %v1164
  %v1166 = vand.u32 %v25, 4294901760
  %v1167 = vsub.f32 %v25, %v1166
  %v1168 = vand.u32 %v1167, 4294901760
  %v1169 = vsub.f32 %v1167, %v1168
  %v1170 = vand.u32 %v1169, 4294901760
  %1171 = vmatpush1.msra.mxu0 %v1170
  %v1172 = vand.u32 %v34, 4294901760
  %v1173 = vsub.f32 %v34, %v1172
  %v1174 = vand.u32 %v1173, 4294901760
  %v1175 = vsub.f32 %v1173, %v1174
  %v1176 = vand.u32 %v1175, 4294901760
  %1177 = vmatprep.subr.mxu0 %v1176
  %v1178 = vand.u32 %v33, 4294901760
  %v1179 = vsub.f32 %v33, %v1178
  %v1180 = vand.u32 %v1179, 4294901760
  %v1181 = vsub.f32 %v1179, %v1180
  %v1182 = vand.u32 %v1181, 4294901760
  %1183 = vmatpush1.msra.mxu0 %v1182
  %v1184 = vand.u32 %v42, 4294901760
  %v1185 = vsub.f32 %v42, %v1184
  %v1186 = vand.u32 %v1185, 4294901760
  %v1187 = vsub.f32 %v1185, %v1186
  %v1188 = vand.u32 %v1187, 4294901760
  %1189 = vmatprep.subr.mxu0 %v1188
  %v1190 = vand.u32 %v41, 4294901760
  %v1191 = vsub.f32 %v41, %v1190
  %v1192 = vand.u32 %v1191, 4294901760
  %v1193 = vsub.f32 %v1191, %v1192
  %v1194 = vand.u32 %v1193, 4294901760
  %1195 = vmatpush1.msra.mxu0 %v1194
  %v1196 = vand.u32 %v50, 4294901760
  %v1197 = vsub.f32 %v50, %v1196
  %v1198 = vand.u32 %v1197, 4294901760
  %v1199 = vsub.f32 %v1197, %v1198
  %v1200 = vand.u32 %v1199, 4294901760
  %1201 = vmatprep.subr.mxu0 %v1200
  %v1202 = vand.u32 %v49, 4294901760
  %v1203 = vsub.f32 %v49, %v1202
  %v1204 = vand.u32 %v1203, 4294901760
  %v1205 = vsub.f32 %v1203, %v1204
  %v1206 = vand.u32 %v1205, 4294901760
  %1207 = vmatpush1.msra.mxu0 %v1206
  %v1208 = vand.u32 %v58, 4294901760
  %v1209 = vsub.f32 %v58, %v1208
  %v1210 = vand.u32 %v1209, 4294901760
  %v1211 = vsub.f32 %v1209, %v1210
  %v1212 = vand.u32 %v1211, 4294901760
  %1213 = vmatprep.subr.mxu0 %v1212
  %v1214 = vand.u32 %v57, 4294901760
  %v1215 = vsub.f32 %v57, %v1214
  %v1216 = vand.u32 %v1215, 4294901760
  %v1217 = vsub.f32 %v1215, %v1216
  %v1218 = vand.u32 %v1217, 4294901760
  %1219 = vmatpush1.msra.mxu0 %v1218
  %v1220 = vand.u32 %v66, 4294901760
  %v1221 = vsub.f32 %v66, %v1220
  %v1222 = vand.u32 %v1221, 4294901760
  %v1223 = vsub.f32 %v1221, %v1222
  %v1224 = vand.u32 %v1223, 4294901760
  %1225 = vmatprep.subr.mxu0 %v1224
  %v1226 = vand.u32 %v65, 4294901760
  %v1227 = vsub.f32 %v65, %v1226
  %v1228 = vand.u32 %v1227, 4294901760
  %v1229 = vsub.f32 %v1227, %v1228
  %v1230 = vand.u32 %v1229, 4294901760
  %1231 = vmatpush1.msra.mxu0 %v1230
  %v1232 = vand.u32 %v74, 4294901760
  %v1233 = vsub.f32 %v74, %v1232
  %v1234 = vand.u32 %v1233, 4294901760
  %v1235 = vsub.f32 %v1233, %v1234
  %v1236 = vand.u32 %v1235, 4294901760
  %1237 = vmatprep.subr.mxu0 %v1236
  %v1238 = vand.u32 %v73, 4294901760
  %v1239 = vsub.f32 %v73, %v1238
  %v1240 = vand.u32 %v1239, 4294901760
  %v1241 = vsub.f32 %v1239, %v1240
  %v1242 = vand.u32 %v1241, 4294901760
  %1243 = vmatpush1.msra.mxu0 %v1242
  %v1244 = vand.u32 %v82, 4294901760
  %v1245 = vsub.f32 %v82, %v1244
  %v1246 = vand.u32 %v1245, 4294901760
  %v1247 = vsub.f32 %v1245, %v1246
  %v1248 = vand.u32 %v1247, 4294901760
  %1249 = vmatprep.subr.mxu0 %v1248
  %v1250 = vand.u32 %v81, 4294901760
  %v1251 = vsub.f32 %v81, %v1250
  %v1252 = vand.u32 %v1251, 4294901760
  %v1253 = vsub.f32 %v1251, %v1252
  %v1254 = vand.u32 %v1253, 4294901760
  %1255 = vmatpush1.msra.mxu0 %v1254
  %v1256 = vand.u32 %v90, 4294901760
  %v1257 = vsub.f32 %v90, %v1256
  %v1258 = vand.u32 %v1257, 4294901760
  %v1259 = vsub.f32 %v1257, %v1258
  %v1260 = vand.u32 %v1259, 4294901760
  %1261 = vmatprep.subr.mxu0 %v1260
  %v1262 = vand.u32 %v89, 4294901760
  %v1263 = vsub.f32 %v89, %v1262
  %v1264 = vand.u32 %v1263, 4294901760
  %v1265 = vsub.f32 %v1263, %v1264
  %v1266 = vand.u32 %v1265, 4294901760
  %1267 = vmatpush1.msra.mxu0 %v1266
  %v1268 = vand.u32 %v98, 4294901760
  %v1269 = vsub.f32 %v98, %v1268
  %v1270 = vand.u32 %v1269, 4294901760
  %v1271 = vsub.f32 %v1269, %v1270
  %v1272 = vand.u32 %v1271, 4294901760
  %1273 = vmatprep.subr.mxu0 %v1272
  %v1274 = vand.u32 %v97, 4294901760
  %v1275 = vsub.f32 %v97, %v1274
  %v1276 = vand.u32 %v1275, 4294901760
  %v1277 = vsub.f32 %v1275, %v1276
  %v1278 = vand.u32 %v1277, 4294901760
  %1279 = vmatpush1.msra.mxu0 %v1278
  %v1280 = vand.u32 %v106, 4294901760
  %v1281 = vsub.f32 %v106, %v1280
  %v1282 = vand.u32 %v1281, 4294901760
  %v1283 = vsub.f32 %v1281, %v1282
  %v1284 = vand.u32 %v1283, 4294901760
  %1285 = vmatprep.subr.mxu0 %v1284
  %v1286 = vand.u32 %v105, 4294901760
  %v1287 = vsub.f32 %v105, %v1286
  %v1288 = vand.u32 %v1287, 4294901760
  %v1289 = vsub.f32 %v1287, %v1288
  %v1290 = vand.u32 %v1289, 4294901760
  %1291 = vmatpush1.msra.mxu0 %v1290
  %v1292 = vand.u32 %v114, 4294901760
  %v1293 = vsub.f32 %v114, %v1292
  %v1294 = vand.u32 %v1293, 4294901760
  %v1295 = vsub.f32 %v1293, %v1294
  %v1296 = vand.u32 %v1295, 4294901760
  %1297 = vmatprep.subr.mxu0 %v1296
  %v1298 = vand.u32 %v113, 4294901760
  %v1299 = vsub.f32 %v113, %v1298
  %v1300 = vand.u32 %v1299, 4294901760
  %v1301 = vsub.f32 %v1299, %v1300
  %v1302 = vand.u32 %v1301, 4294901760
  %1303 = vmatpush1.msra.mxu0 %v1302
  %v1304 = vand.u32 %v122, 4294901760
  %v1305 = vsub.f32 %v122, %v1304
  %v1306 = vand.u32 %v1305, 4294901760
  %v1307 = vsub.f32 %v1305, %v1306
  %v1308 = vand.u32 %v1307, 4294901760
  %1309 = vmatprep.subr.mxu0 %v1308
  %v1310 = vand.u32 %v121, 4294901760
  %v1311 = vsub.f32 %v121, %v1310
  %v1312 = vand.u32 %v1311, 4294901760
  %v1313 = vsub.f32 %v1311, %v1312
  %v1314 = vand.u32 %v1313, 4294901760
  %1315 = vmatpush1.msra.mxu0 %v1314
  %v1316 = vand.u32 %v130, 4294901760
  %v1317 = vsub.f32 %v130, %v1316
  %v1318 = vand.u32 %v1317, 4294901760
  %v1319 = vsub.f32 %v1317, %v1318
  %v1320 = vand.u32 %v1319, 4294901760
  %1321 = vmatprep.subr.mxu0 %v1320
  %v1322 = vand.u32 %v129, 4294901760
  %v1323 = vsub.f32 %v129, %v1322
  %v1324 = vand.u32 %v1323, 4294901760
  %v1325 = vsub.f32 %v1323, %v1324
  %v1326 = vand.u32 %v1325, 4294901760
  %1327 = vmatpush1.msra.mxu0 %v1326
  %v1328 = vand.u32 %v138, 4294901760
  %v1329 = vsub.f32 %v138, %v1328
  %v1330 = vand.u32 %v1329, 4294901760
  %v1331 = vsub.f32 %v1329, %v1330
  %v1332 = vand.u32 %v1331, 4294901760
  %1333 = vmatprep.subr.mxu0 %v1332
  %v1334 = vand.u32 %v137, 4294901760
  %v1335 = vsub.f32 %v137, %v1334
  %v1336 = vand.u32 %v1335, 4294901760
  %v1337 = vsub.f32 %v1335, %v1336
  %v1338 = vand.u32 %v1337, 4294901760
  %1339 = vmatpush1.msra.mxu0 %v1338
  %1340 = vmatprep.subr.mxu0 0.0
  %1341 = vmatpush1.msra.mxu0 0.0
  %1342 = vmatprep.subr.mxu0 0.0
  %1343 = vmatpush1.msra.mxu0 0.0
  %1344 = vmatprep.subr.mxu0 0.0
  %1345 = vmatpush1.msra.mxu0 0.0
  %1346 = vmatprep.subr.mxu0 0.0
  %1347 = vmatpush1.msra.mxu0 0.0
  %1348 = vmatprep.subr.mxu0 0.0
  %1349 = vmatpush1.msra.mxu0 0.0
  %1350 = vmatprep.subr.mxu0 0.0
  %1351 = vmatpush1.msra.mxu0 0.0
  %1352 = vmatprep.subr.mxu0 0.0
  %1353 = vmatpush1.msra.mxu0 0.0
  %1354 = vmatprep.subr.mxu0 0.0
  %1355 = vmatpush1.msra.mxu0 0.0
  %1356 = vmatprep.subr.mxu0 0.0
  %1357 = vmatpush1.msra.mxu0 0.0
  %1358 = vmatprep.subr.mxu0 0.0
  %1359 = vmatpush1.msra.mxu0 0.0
  %1360 = vmatprep.subr.mxu0 0.0
  %1361 = vmatpush1.msra.mxu0 0.0
  %1362 = vmatprep.subr.mxu0 0.0
  %1363 = vmatpush1.msra.mxu0 0.0
  %1364 = vmatprep.subr.mxu0 0.0
  %1365 = vmatpush1.msra.mxu0 0.0
  %1366 = vmatprep.subr.mxu0 0.0
  %1367 = vmatpush1.msra.mxu0 0.0
  %1368 = vmatprep.subr.mxu0 0.0
  %1369 = vmatpush1.msra.mxu0 0.0
  %1370 = vmatprep.subr.mxu0 0.0
  %1371 = vmatpush1.msra.mxu0 0.0
  %1372 = vmatprep.mubr.f32.mxu0 0.0
  %v1373 = vand.u32 %v14, 4294901760
  %1374 = vmatmul.mubr.f32.gmra.mrb[0].mxu0 %v1373
  %v1375 = vpop.f32.mrb[0].mxu0
  %v1376 = vadd.f32 %v1144, %v1375
  %v1377 = vpop.f32.mrb[0].mxu0
  %v1378 = vadd.f32 %v1146, %v1377
  %1379 = vdwg.mxu0
  %v1380 = vand.u32 %v18, 4294901760
  %v1381 = vsub.f32 %v18, %v1380
  %1382 = vmatprep.subr.mxu0 %v1381
  %v1383 = vand.u32 %v17, 4294901760
  %v1384 = vsub.f32 %v17, %v1383
  %1385 = vmatpush1.msra.mxu0 %v1384
  %v1386 = vand.u32 %v26, 4294901760
  %v1387 = vsub.f32 %v26, %v1386
  %1388 = vmatprep.subr.mxu0 %v1387
  %v1389 = vand.u32 %v25, 4294901760
  %v1390 = vsub.f32 %v25, %v1389
  %1391 = vmatpush1.msra.mxu0 %v1390
  %v1392 = vand.u32 %v34, 4294901760
  %v1393 = vsub.f32 %v34, %v1392
  %1394 = vmatprep.subr.mxu0 %v1393
  %v1395 = vand.u32 %v33, 4294901760
  %v1396 = vsub.f32 %v33, %v1395
  %1397 = vmatpush1.msra.mxu0 %v1396
  %v1398 = vand.u32 %v42, 4294901760
  %v1399 = vsub.f32 %v42, %v1398
  %1400 = vmatprep.subr.mxu0 %v1399
  %v1401 = vand.u32 %v41, 4294901760
  %v1402 = vsub.f32 %v41, %v1401
  %1403 = vmatpush1.msra.mxu0 %v1402
  %v1404 = vand.u32 %v50, 4294901760
  %v1405 = vsub.f32 %v50, %v1404
  %1406 = vmatprep.subr.mxu0 %v1405
  %v1407 = vand.u32 %v49, 4294901760
  %v1408 = vsub.f32 %v49, %v1407
  %1409 = vmatpush1.msra.mxu0 %v1408
  %v1410 = vand.u32 %v58, 4294901760
  %v1411 = vsub.f32 %v58, %v1410
  %1412 = vmatprep.subr.mxu0 %v1411
  %v1413 = vand.u32 %v57, 4294901760
  %v1414 = vsub.f32 %v57, %v1413
  %1415 = vmatpush1.msra.mxu0 %v1414
  %v1416 = vand.u32 %v66, 4294901760
  %v1417 = vsub.f32 %v66, %v1416
  %1418 = vmatprep.subr.mxu0 %v1417
  %v1419 = vand.u32 %v65, 4294901760
  %v1420 = vsub.f32 %v65, %v1419
  %1421 = vmatpush1.msra.mxu0 %v1420
  %v1422 = vand.u32 %v74, 4294901760
  %v1423 = vsub.f32 %v74, %v1422
  %1424 = vmatprep.subr.mxu0 %v1423
  %v1425 = vand.u32 %v73, 4294901760
  %v1426 = vsub.f32 %v73, %v1425
  %1427 = vmatpush1.msra.mxu0 %v1426
  %v1428 = vand.u32 %v82, 4294901760
  %v1429 = vsub.f32 %v82, %v1428
  %1430 = vmatprep.subr.mxu0 %v1429
  %v1431 = vand.u32 %v81, 4294901760
  %v1432 = vsub.f32 %v81, %v1431
  %1433 = vmatpush1.msra.mxu0 %v1432
  %v1434 = vand.u32 %v90, 4294901760
  %v1435 = vsub.f32 %v90, %v1434
  %1436 = vmatprep.subr.mxu0 %v1435
  %v1437 = vand.u32 %v89, 4294901760
  %v1438 = vsub.f32 %v89, %v1437
  %1439 = vmatpush1.msra.mxu0 %v1438
  %v1440 = vand.u32 %v98, 4294901760
  %v1441 = vsub.f32 %v98, %v1440
  %1442 = vmatprep.subr.mxu0 %v1441
  %v1443 = vand.u32 %v97, 4294901760
  %v1444 = vsub.f32 %v97, %v1443
  %1445 = vmatpush1.msra.mxu0 %v1444
  %v1446 = vand.u32 %v106, 4294901760
  %v1447 = vsub.f32 %v106, %v1446
  %1448 = vmatprep.subr.mxu0 %v1447
  %v1449 = vand.u32 %v105, 4294901760
  %v1450 = vsub.f32 %v105, %v1449
  %1451 = vmatpush1.msra.mxu0 %v1450
  %v1452 = vand.u32 %v114, 4294901760
  %v1453 = vsub.f32 %v114, %v1452
  %1454 = vmatprep.subr.mxu0 %v1453
  %v1455 = vand.u32 %v113, 4294901760
  %v1456 = vsub.f32 %v113, %v1455
  %1457 = vmatpush1.msra.mxu0 %v1456
  %v1458 = vand.u32 %v122, 4294901760
  %v1459 = vsub.f32 %v122, %v1458
  %1460 = vmatprep.subr.mxu0 %v1459
  %v1461 = vand.u32 %v121, 4294901760
  %v1462 = vsub.f32 %v121, %v1461
  %1463 = vmatpush1.msra.mxu0 %v1462
  %v1464 = vand.u32 %v130, 4294901760
  %v1465 = vsub.f32 %v130, %v1464
  %1466 = vmatprep.subr.mxu0 %v1465
  %v1467 = vand.u32 %v129, 4294901760
  %v1468 = vsub.f32 %v129, %v1467
  %1469 = vmatpush1.msra.mxu0 %v1468
  %v1470 = vand.u32 %v138, 4294901760
  %v1471 = vsub.f32 %v138, %v1470
  %1472 = vmatprep.subr.mxu0 %v1471
  %v1473 = vand.u32 %v137, 4294901760
  %v1474 = vsub.f32 %v137, %v1473
  %1475 = vmatpush1.msra.mxu0 %v1474
  %1476 = vmatprep.subr.mxu0 0.0
  %1477 = vmatpush1.msra.mxu0 0.0
  %1478 = vmatprep.subr.mxu0 0.0
  %1479 = vmatpush1.msra.mxu0 0.0
  %1480 = vmatprep.subr.mxu0 0.0
  %1481 = vmatpush1.msra.mxu0 0.0
  %1482 = vmatprep.subr.mxu0 0.0
  %1483 = vmatpush1.msra.mxu0 0.0
  %1484 = vmatprep.subr.mxu0 0.0
  %1485 = vmatpush1.msra.mxu0 0.0
  %1486 = vmatprep.subr.mxu0 0.0
  %1487 = vmatpush1.msra.mxu0 0.0
  %1488 = vmatprep.subr.mxu0 0.0
  %1489 = vmatpush1.msra.mxu0 0.0
  %1490 = vmatprep.subr.mxu0 0.0
  %1491 = vmatpush1.msra.mxu0 0.0
  %1492 = vmatprep.subr.mxu0 0.0
  %1493 = vmatpush1.msra.mxu0 0.0
  %1494 = vmatprep.subr.mxu0 0.0
  %1495 = vmatpush1.msra.mxu0 0.0
  %1496 = vmatprep.subr.mxu0 0.0
  %1497 = vmatpush1.msra.mxu0 0.0
  %1498 = vmatprep.subr.mxu0 0.0
  %1499 = vmatpush1.msra.mxu0 0.0
  %1500 = vmatprep.subr.mxu0 0.0
  %1501 = vmatpush1.msra.mxu0 0.0
  %1502 = vmatprep.subr.mxu0 0.0
  %1503 = vmatpush1.msra.mxu0 0.0
  %1504 = vmatprep.subr.mxu0 0.0
  %1505 = vmatpush1.msra.mxu0 0.0
  %1506 = vmatprep.subr.mxu0 0.0
  %1507 = vmatpush1.msra.mxu0 0.0
  %1508 = vmatprep.mubr.f32.mxu0 0.0
  %v1509 = vand.u32 %v14, 4294901760
  %v1510 = vsub.f32 %v14, %v1509
  %1511 = vmatmul.mubr.f32.gmra.mrb[0].mxu0 %v1510
  %v1512 = vpop.f32.mrb[0].mxu0
  %v1513 = vadd.f32 %v1376, %v1512
  %v1514 = vpop.f32.mrb[0].mxu0
  %v1515 = vadd.f32 %v1378, %v1514
  %1516 = vdwg.mxu0
  %v1517 = vand.u32 %v18, 4294901760
  %1518 = vmatprep.subr.mxu0 %v1517
  %v1519 = vand.u32 %v17, 4294901760
  %1520 = vmatpush1.msra.mxu0 %v1519
  %v1521 = vand.u32 %v26, 4294901760
  %1522 = vmatprep.subr.mxu0 %v1521
  %v1523 = vand.u32 %v25, 4294901760
  %1524 = vmatpush1.msra.mxu0 %v1523
  %v1525 = vand.u32 %v34, 4294901760
  %1526 = vmatprep.subr.mxu0 %v1525
  %v1527 = vand.u32 %v33, 4294901760
  %1528 = vmatpush1.msra.mxu0 %v1527
  %v1529 = vand.u32 %v42, 4294901760
  %1530 = vmatprep.subr.mxu0 %v1529
  %v1531 = vand.u32 %v41, 4294901760
  %1532 = vmatpush1.msra.mxu0 %v1531
  %v1533 = vand.u32 %v50, 4294901760
  %1534 = vmatprep.subr.mxu0 %v1533
  %v1535 = vand.u32 %v49, 4294901760
  %1536 = vmatpush1.msra.mxu0 %v1535
  %v1537 = vand.u32 %v58, 4294901760
  %1538 = vmatprep.subr.mxu0 %v1537
  %v1539 = vand.u32 %v57, 4294901760
  %1540 = vmatpush1.msra.mxu0 %v1539
  %v1541 = vand.u32 %v66, 4294901760
  %1542 = vmatprep.subr.mxu0 %v1541
  %v1543 = vand.u32 %v65, 4294901760
  %1544 = vmatpush1.msra.mxu0 %v1543
  %v1545 = vand.u32 %v74, 4294901760
  %1546 = vmatprep.subr.mxu0 %v1545
  %v1547 = vand.u32 %v73, 4294901760
  %1548 = vmatpush1.msra.mxu0 %v1547
  %v1549 = vand.u32 %v82, 4294901760
  %1550 = vmatprep.subr.mxu0 %v1549
  %v1551 = vand.u32 %v81, 4294901760
  %1552 = vmatpush1.msra.mxu0 %v1551
  %v1553 = vand.u32 %v90, 4294901760
  %1554 = vmatprep.subr.mxu0 %v1553
  %v1555 = vand.u32 %v89, 4294901760
  %1556 = vmatpush1.msra.mxu0 %v1555
  %v1557 = vand.u32 %v98, 4294901760
  %1558 = vmatprep.subr.mxu0 %v1557
  %v1559 = vand.u32 %v97, 4294901760
  %1560 = vmatpush1.msra.mxu0 %v1559
  %v1561 = vand.u32 %v106, 4294901760
  %1562 = vmatprep.subr.mxu0 %v1561
  %v1563 = vand.u32 %v105, 4294901760
  %1564 = vmatpush1.msra.mxu0 %v1563
  %v1565 = vand.u32 %v114, 4294901760
  %1566 = vmatprep.subr.mxu0 %v1565
  %v1567 = vand.u32 %v113, 4294901760
  %1568 = vmatpush1.msra.mxu0 %v1567
  %v1569 = vand.u32 %v122, 4294901760
  %1570 = vmatprep.subr.mxu0 %v1569
  %v1571 = vand.u32 %v121, 4294901760
  %1572 = vmatpush1.msra.mxu0 %v1571
  %v1573 = vand.u32 %v130, 4294901760
  %1574 = vmatprep.subr.mxu0 %v1573
  %v1575 = vand.u32 %v129, 4294901760
  %1576 = vmatpush1.msra.mxu0 %v1575
  %v1577 = vand.u32 %v138, 4294901760
  %1578 = vmatprep.subr.mxu0 %v1577
  %v1579 = vand.u32 %v137, 4294901760
  %1580 = vmatpush1.msra.mxu0 %v1579
  %1581 = vmatprep.subr.mxu0 0.0
  %1582 = vmatpush1.msra.mxu0 0.0
  %1583 = vmatprep.subr.mxu0 0.0
  %1584 = vmatpush1.msra.mxu0 0.0
  %1585 = vmatprep.subr.mxu0 0.0
  %1586 = vmatpush1.msra.mxu0 0.0
  %1587 = vmatprep.subr.mxu0 0.0
  %1588 = vmatpush1.msra.mxu0 0.0
  %1589 = vmatprep.subr.mxu0 0.0
  %1590 = vmatpush1.msra.mxu0 0.0
  %1591 = vmatprep.subr.mxu0 0.0
  %1592 = vmatpush1.msra.mxu0 0.0
  %1593 = vmatprep.subr.mxu0 0.0
  %1594 = vmatpush1.msra.mxu0 0.0
  %1595 = vmatprep.subr.mxu0 0.0
  %1596 = vmatpush1.msra.mxu0 0.0
  %1597 = vmatprep.subr.mxu0 0.0
  %1598 = vmatpush1.msra.mxu0 0.0
  %1599 = vmatprep.subr.mxu0 0.0
  %1600 = vmatpush1.msra.mxu0 0.0
  %1601 = vmatprep.subr.mxu0 0.0
  %1602 = vmatpush1.msra.mxu0 0.0
  %1603 = vmatprep.subr.mxu0 0.0
  %1604 = vmatpush1.msra.mxu0 0.0
  %1605 = vmatprep.subr.mxu0 0.0
  %1606 = vmatpush1.msra.mxu0 0.0
  %1607 = vmatprep.subr.mxu0 0.0
  %1608 = vmatpush1.msra.mxu0 0.0
  %1609 = vmatprep.subr.mxu0 0.0
  %1610 = vmatpush1.msra.mxu0 0.0
  %1611 = vmatprep.subr.mxu0 0.0
  %1612 = vmatpush1.msra.mxu0 0.0
  %1613 = vmatprep.mubr.f32.mxu0 0.0
  %v1614 = vand.u32 %v14, 4294901760
  %v1615 = vsub.f32 %v14, %v1614
  %v1616 = vand.u32 %v1615, 4294901760
  %1617 = vmatmul.mubr.f32.gmra.mrb[0].mxu0 %v1616
  %v1618 = vpop.f32.mrb[0].mxu0
  %v1619 = vadd.f32 %v1513, %v1618
  %v1620 = vpop.f32.mrb[0].mxu0
  %v1621 = vadd.f32 %v1515, %v1620
  %1622 = vdwg.mxu0
  %v1623 = vand.u32 %v18, 4294901760
  %v1624 = vsub.f32 %v18, %v1623
  %v1625 = vand.u32 %v1624, 4294901760
  %1626 = vmatprep.subr.mxu0 %v1625
  %v1627 = vand.u32 %v17, 4294901760
  %v1628 = vsub.f32 %v17, %v1627
  %v1629 = vand.u32 %v1628, 4294901760
  %1630 = vmatpush1.msra.mxu0 %v1629
  %v1631 = vand.u32 %v26, 4294901760
  %v1632 = vsub.f32 %v26, %v1631
  %v1633 = vand.u32 %v1632, 4294901760
  %1634 = vmatprep.subr.mxu0 %v1633
  %v1635 = vand.u32 %v25, 4294901760
  %v1636 = vsub.f32 %v25, %v1635
  %v1637 = vand.u32 %v1636, 4294901760
  %1638 = vmatpush1.msra.mxu0 %v1637
  %v1639 = vand.u32 %v34, 4294901760
  %v1640 = vsub.f32 %v34, %v1639
  %v1641 = vand.u32 %v1640, 4294901760
  %1642 = vmatprep.subr.mxu0 %v1641
  %v1643 = vand.u32 %v33, 4294901760
  %v1644 = vsub.f32 %v33, %v1643
  %v1645 = vand.u32 %v1644, 4294901760
  %1646 = vmatpush1.msra.mxu0 %v1645
  %v1647 = vand.u32 %v42, 4294901760
  %v1648 = vsub.f32 %v42, %v1647
  %v1649 = vand.u32 %v1648, 4294901760
  %1650 = vmatprep.subr.mxu0 %v1649
  %v1651 = vand.u32 %v41, 4294901760
  %v1652 = vsub.f32 %v41, %v1651
  %v1653 = vand.u32 %v1652, 4294901760
  %1654 = vmatpush1.msra.mxu0 %v1653
  %v1655 = vand.u32 %v50, 4294901760
  %v1656 = vsub.f32 %v50, %v1655
  %v1657 = vand.u32 %v1656, 4294901760
  %1658 = vmatprep.subr.mxu0 %v1657
  %v1659 = vand.u32 %v49, 4294901760
  %v1660 = vsub.f32 %v49, %v1659
  %v1661 = vand.u32 %v1660, 4294901760
  %1662 = vmatpush1.msra.mxu0 %v1661
  %v1663 = vand.u32 %v58, 4294901760
  %v1664 = vsub.f32 %v58, %v1663
  %v1665 = vand.u32 %v1664, 4294901760
  %1666 = vmatprep.subr.mxu0 %v1665
  %v1667 = vand.u32 %v57, 4294901760
  %v1668 = vsub.f32 %v57, %v1667
  %v1669 = vand.u32 %v1668, 4294901760
  %1670 = vmatpush1.msra.mxu0 %v1669
  %v1671 = vand.u32 %v66, 4294901760
  %v1672 = vsub.f32 %v66, %v1671
  %v1673 = vand.u32 %v1672, 4294901760
  %1674 = vmatprep.subr.mxu0 %v1673
  %v1675 = vand.u32 %v65, 4294901760
  %v1676 = vsub.f32 %v65, %v1675
  %v1677 = vand.u32 %v1676, 4294901760
  %1678 = vmatpush1.msra.mxu0 %v1677
  %v1679 = vand.u32 %v74, 4294901760
  %v1680 = vsub.f32 %v74, %v1679
  %v1681 = vand.u32 %v1680, 4294901760
  %1682 = vmatprep.subr.mxu0 %v1681
  %v1683 = vand.u32 %v73, 4294901760
  %v1684 = vsub.f32 %v73, %v1683
  %v1685 = vand.u32 %v1684, 4294901760
  %1686 = vmatpush1.msra.mxu0 %v1685
  %v1687 = vand.u32 %v82, 4294901760
  %v1688 = vsub.f32 %v82, %v1687
  %v1689 = vand.u32 %v1688, 4294901760
  %1690 = vmatprep.subr.mxu0 %v1689
  %v1691 = vand.u32 %v81, 4294901760
  %v1692 = vsub.f32 %v81, %v1691
  %v1693 = vand.u32 %v1692, 4294901760
  %1694 = vmatpush1.msra.mxu0 %v1693
  %v1695 = vand.u32 %v90, 4294901760
  %v1696 = vsub.f32 %v90, %v1695
  %v1697 = vand.u32 %v1696, 4294901760
  %1698 = vmatprep.subr.mxu0 %v1697
  %v1699 = vand.u32 %v89, 4294901760
  %v1700 = vsub.f32 %v89, %v1699
  %v1701 = vand.u32 %v1700, 4294901760
  %1702 = vmatpush1.msra.mxu0 %v1701
  %v1703 = vand.u32 %v98, 4294901760
  %v1704 = vsub.f32 %v98, %v1703
  %v1705 = vand.u32 %v1704, 4294901760
  %1706 = vmatprep.subr.mxu0 %v1705
  %v1707 = vand.u32 %v97, 4294901760
  %v1708 = vsub.f32 %v97, %v1707
  %v1709 = vand.u32 %v1708, 4294901760
  %1710 = vmatpush1.msra.mxu0 %v1709
  %v1711 = vand.u32 %v106, 4294901760
  %v1712 = vsub.f32 %v106, %v1711
  %v1713 = vand.u32 %v1712, 4294901760
  %1714 = vmatprep.subr.mxu0 %v1713
  %v1715 = vand.u32 %v105, 4294901760
  %v1716 = vsub.f32 %v105, %v1715
  %v1717 = vand.u32 %v1716, 4294901760
  %1718 = vmatpush1.msra.mxu0 %v1717
  %v1719 = vand.u32 %v114, 4294901760
  %v1720 = vsub.f32 %v114, %v1719
  %v1721 = vand.u32 %v1720, 4294901760
  %1722 = vmatprep.subr.mxu0 %v1721
  %v1723 = vand.u32 %v113, 4294901760
  %v1724 = vsub.f32 %v113, %v1723
  %v1725 = vand.u32 %v1724, 4294901760
  %1726 = vmatpush1.msra.mxu0 %v1725
  %v1727 = vand.u32 %v122, 4294901760
  %v1728 = vsub.f32 %v122, %v1727
  %v1729 = vand.u32 %v1728, 4294901760
  %1730 = vmatprep.subr.mxu0 %v1729
  %v1731 = vand.u32 %v121, 4294901760
  %v1732 = vsub.f32 %v121, %v1731
  %v1733 = vand.u32 %v1732, 4294901760
  %1734 = vmatpush1.msra.mxu0 %v1733
  %v1735 = vand.u32 %v130, 4294901760
  %v1736 = vsub.f32 %v130, %v1735
  %v1737 = vand.u32 %v1736, 4294901760
  %1738 = vmatprep.subr.mxu0 %v1737
  %v1739 = vand.u32 %v129, 4294901760
  %v1740 = vsub.f32 %v129, %v1739
  %v1741 = vand.u32 %v1740, 4294901760
  %1742 = vmatpush1.msra.mxu0 %v1741
  %v1743 = vand.u32 %v138, 4294901760
  %v1744 = vsub.f32 %v138, %v1743
  %v1745 = vand.u32 %v1744, 4294901760
  %1746 = vmatprep.subr.mxu0 %v1745
  %v1747 = vand.u32 %v137, 4294901760
  %v1748 = vsub.f32 %v137, %v1747
  %v1749 = vand.u32 %v1748, 4294901760
  %1750 = vmatpush1.msra.mxu0 %v1749
  %1751 = vmatprep.subr.mxu0 0.0
  %1752 = vmatpush1.msra.mxu0 0.0
  %1753 = vmatprep.subr.mxu0 0.0
  %1754 = vmatpush1.msra.mxu0 0.0
  %1755 = vmatprep.subr.mxu0 0.0
  %1756 = vmatpush1.msra.mxu0 0.0
  %1757 = vmatprep.subr.mxu0 0.0
  %1758 = vmatpush1.msra.mxu0 0.0
  %1759 = vmatprep.subr.mxu0 0.0
  %1760 = vmatpush1.msra.mxu0 0.0
  %1761 = vmatprep.subr.mxu0 0.0
  %1762 = vmatpush1.msra.mxu0 0.0
  %1763 = vmatprep.subr.mxu0 0.0
  %1764 = vmatpush1.msra.mxu0 0.0
  %1765 = vmatprep.subr.mxu0 0.0
  %1766 = vmatpush1.msra.mxu0 0.0
  %1767 = vmatprep.subr.mxu0 0.0
  %1768 = vmatpush1.msra.mxu0 0.0
  %1769 = vmatprep.subr.mxu0 0.0
  %1770 = vmatpush1.msra.mxu0 0.0
  %1771 = vmatprep.subr.mxu0 0.0
  %1772 = vmatpush1.msra.mxu0 0.0
  %1773 = vmatprep.subr.mxu0 0.0
  %1774 = vmatpush1.msra.mxu0 0.0
  %1775 = vmatprep.subr.mxu0 0.0
  %1776 = vmatpush1.msra.mxu0 0.0
  %1777 = vmatprep.subr.mxu0 0.0
  %1778 = vmatpush1.msra.mxu0 0.0
  %1779 = vmatprep.subr.mxu0 0.0
  %1780 = vmatpush1.msra.mxu0 0.0
  %1781 = vmatprep.subr.mxu0 0.0
  %1782 = vmatpush1.msra.mxu0 0.0
  %1783 = vmatprep.mubr.f32.mxu0 0.0
  %v1784 = vand.u32 %v14, 4294901760
  %1785 = vmatmul.mubr.f32.gmra.mrb[0].mxu0 %v1784
  %v1786 = vpop.f32.mrb[0].mxu0
  %v1787 = vadd.f32 %v1619, %v1786
  %v1788 = vpop.f32.mrb[0].mxu0
  %v1789 = vadd.f32 %v1621, %v1788
  %1790 = vdwg.mxu0
  %v1791 = vand.u32 %v18, 4294901760
  %1792 = vmatprep.subr.mxu0 %v1791
  %v1793 = vand.u32 %v17, 4294901760
  %1794 = vmatpush1.msra.mxu0 %v1793
  %v1795 = vand.u32 %v26, 4294901760
  %1796 = vmatprep.subr.mxu0 %v1795
  %v1797 = vand.u32 %v25, 4294901760
  %1798 = vmatpush1.msra.mxu0 %v1797
  %v1799 = vand.u32 %v34, 4294901760
  %1800 = vmatprep.subr.mxu0 %v1799
  %v1801 = vand.u32 %v33, 4294901760
  %1802 = vmatpush1.msra.mxu0 %v1801
  %v1803 = vand.u32 %v42, 4294901760
  %1804 = vmatprep.subr.mxu0 %v1803
  %v1805 = vand.u32 %v41, 4294901760
  %1806 = vmatpush1.msra.mxu0 %v1805
  %v1807 = vand.u32 %v50, 4294901760
  %1808 = vmatprep.subr.mxu0 %v1807
  %v1809 = vand.u32 %v49, 4294901760
  %1810 = vmatpush1.msra.mxu0 %v1809
  %v1811 = vand.u32 %v58, 4294901760
  %1812 = vmatprep.subr.mxu0 %v1811
  %v1813 = vand.u32 %v57, 4294901760
  %1814 = vmatpush1.msra.mxu0 %v1813
  %v1815 = vand.u32 %v66, 4294901760
  %1816 = vmatprep.subr.mxu0 %v1815
  %v1817 = vand.u32 %v65, 4294901760
  %1818 = vmatpush1.msra.mxu0 %v1817
  %v1819 = vand.u32 %v74, 4294901760
  %1820 = vmatprep.subr.mxu0 %v1819
  %v1821 = vand.u32 %v73, 4294901760
  %1822 = vmatpush1.msra.mxu0 %v1821
  %v1823 = vand.u32 %v82, 4294901760
  %1824 = vmatprep.subr.mxu0 %v1823
  %v1825 = vand.u32 %v81, 4294901760
  %1826 = vmatpush1.msra.mxu0 %v1825
  %v1827 = vand.u32 %v90, 4294901760
  %1828 = vmatprep.subr.mxu0 %v1827
  %v1829 = vand.u32 %v89, 4294901760
  %1830 = vmatpush1.msra.mxu0 %v1829
  %v1831 = vand.u32 %v98, 4294901760
  %1832 = vmatprep.subr.mxu0 %v1831
  %v1833 = vand.u32 %v97, 4294901760
  %1834 = vmatpush1.msra.mxu0 %v1833
  %v1835 = vand.u32 %v106, 4294901760
  %1836 = vmatprep.subr.mxu0 %v1835
  %v1837 = vand.u32 %v105, 4294901760
  %1838 = vmatpush1.msra.mxu0 %v1837
  %v1839 = vand.u32 %v114, 4294901760
  %1840 = vmatprep.subr.mxu0 %v1839
  %v1841 = vand.u32 %v113, 4294901760
  %1842 = vmatpush1.msra.mxu0 %v1841
  %v1843 = vand.u32 %v122, 4294901760
  %1844 = vmatprep.subr.mxu0 %v1843
  %v1845 = vand.u32 %v121, 4294901760
  %1846 = vmatpush1.msra.mxu0 %v1845
  %v1847 = vand.u32 %v130, 4294901760
  %1848 = vmatprep.subr.mxu0 %v1847
  %v1849 = vand.u32 %v129, 4294901760
  %1850 = vmatpush1.msra.mxu0 %v1849
  %v1851 = vand.u32 %v138, 4294901760
  %1852 = vmatprep.subr.mxu0 %v1851
  %v1853 = vand.u32 %v137, 4294901760
  %1854 = vmatpush1.msra.mxu0 %v1853
  %1855 = vmatprep.subr.mxu0 0.0
  %1856 = vmatpush1.msra.mxu0 0.0
  %1857 = vmatprep.subr.mxu0 0.0
  %1858 = vmatpush1.msra.mxu0 0.0
  %1859 = vmatprep.subr.mxu0 0.0
  %1860 = vmatpush1.msra.mxu0 0.0
  %1861 = vmatprep.subr.mxu0 0.0
  %1862 = vmatpush1.msra.mxu0 0.0
  %1863 = vmatprep.subr.mxu0 0.0
  %1864 = vmatpush1.msra.mxu0 0.0
  %1865 = vmatprep.subr.mxu0 0.0
  %1866 = vmatpush1.msra.mxu0 0.0
  %1867 = vmatprep.subr.mxu0 0.0
  %1868 = vmatpush1.msra.mxu0 0.0
  %1869 = vmatprep.subr.mxu0 0.0
  %1870 = vmatpush1.msra.mxu0 0.0
  %1871 = vmatprep.subr.mxu0 0.0
  %1872 = vmatpush1.msra.mxu0 0.0
  %1873 = vmatprep.subr.mxu0 0.0
  %1874 = vmatpush1.msra.mxu0 0.0
  %1875 = vmatprep.subr.mxu0 0.0
  %1876 = vmatpush1.msra.mxu0 0.0
  %1877 = vmatprep.subr.mxu0 0.0
  %1878 = vmatpush1.msra.mxu0 0.0
  %1879 = vmatprep.subr.mxu0 0.0
  %1880 = vmatpush1.msra.mxu0 0.0
  %1881 = vmatprep.subr.mxu0 0.0
  %1882 = vmatpush1.msra.mxu0 0.0
  %1883 = vmatprep.subr.mxu0 0.0
  %1884 = vmatpush1.msra.mxu0 0.0
  %1885 = vmatprep.subr.mxu0 0.0
  %1886 = vmatpush1.msra.mxu0 0.0
  %1887 = vmatprep.mubr.f32.mxu0 0.0
  %v1888 = vand.u32 %v14, 4294901760
  %1889 = vmatmul.mubr.f32.gmra.mrb[0].mxu0 %v1888
  %v1890 = vpop.f32.mrb[0].mxu0
  %v1891 = vadd.f32 %v1787, %v1890
  %v1892 = vpop.f32.mrb[0].mxu0
  %v1893 = vadd.f32 %v1789, %v1892
  %1894 = vdwg.mxu0
  %v1895 = vand.u32 %v20, 4294901760
  %1896 = vmatprep.subr.mxu0 %v1895
  %v1897 = vand.u32 %v19, 4294901760
  %1898 = vmatpush1.msra.mxu0 %v1897
  %v1899 = vand.u32 %v28, 4294901760
  %1900 = vmatprep.subr.mxu0 %v1899
  %v1901 = vand.u32 %v27, 4294901760
  %1902 = vmatpush1.msra.mxu0 %v1901
  %v1903 = vand.u32 %v36, 4294901760
  %1904 = vmatprep.subr.mxu0 %v1903
  %v1905 = vand.u32 %v35, 4294901760
  %1906 = vmatpush1.msra.mxu0 %v1905
  %v1907 = vand.u32 %v44, 4294901760
  %1908 = vmatprep.subr.mxu0 %v1907
  %v1909 = vand.u32 %v43, 4294901760
  %1910 = vmatpush1.msra.mxu0 %v1909
  %v1911 = vand.u32 %v52, 4294901760
  %1912 = vmatprep.subr.mxu0 %v1911
  %v1913 = vand.u32 %v51, 4294901760
  %1914 = vmatpush1.msra.mxu0 %v1913
  %v1915 = vand.u32 %v60, 4294901760
  %1916 = vmatprep.subr.mxu0 %v1915
  %v1917 = vand.u32 %v59, 4294901760
  %1918 = vmatpush1.msra.mxu0 %v1917
  %v1919 = vand.u32 %v68, 4294901760
  %1920 = vmatprep.subr.mxu0 %v1919
  %v1921 = vand.u32 %v67, 4294901760
  %1922 = vmatpush1.msra.mxu0 %v1921
  %v1923 = vand.u32 %v76, 4294901760
  %1924 = vmatprep.subr.mxu0 %v1923
  %v1925 = vand.u32 %v75, 4294901760
  %1926 = vmatpush1.msra.mxu0 %v1925
  %v1927 = vand.u32 %v84, 4294901760
  %1928 = vmatprep.subr.mxu0 %v1927
  %v1929 = vand.u32 %v83, 4294901760
  %1930 = vmatpush1.msra.mxu0 %v1929
  %v1931 = vand.u32 %v92, 4294901760
  %1932 = vmatprep.subr.mxu0 %v1931
  %v1933 = vand.u32 %v91, 4294901760
  %1934 = vmatpush1.msra.mxu0 %v1933
  %v1935 = vand.u32 %v100, 4294901760
  %1936 = vmatprep.subr.mxu0 %v1935
  %v1937 = vand.u32 %v99, 4294901760
  %1938 = vmatpush1.msra.mxu0 %v1937
  %v1939 = vand.u32 %v108, 4294901760
  %1940 = vmatprep.subr.mxu0 %v1939
  %v1941 = vand.u32 %v107, 4294901760
  %1942 = vmatpush1.msra.mxu0 %v1941
  %v1943 = vand.u32 %v116, 4294901760
  %1944 = vmatprep.subr.mxu0 %v1943
  %v1945 = vand.u32 %v115, 4294901760
  %1946 = vmatpush1.msra.mxu0 %v1945
  %v1947 = vand.u32 %v124, 4294901760
  %1948 = vmatprep.subr.mxu0 %v1947
  %v1949 = vand.u32 %v123, 4294901760
  %1950 = vmatpush1.msra.mxu0 %v1949
  %v1951 = vand.u32 %v132, 4294901760
  %1952 = vmatprep.subr.mxu0 %v1951
  %v1953 = vand.u32 %v131, 4294901760
  %1954 = vmatpush1.msra.mxu0 %v1953
  %v1955 = vand.u32 %v140, 4294901760
  %1956 = vmatprep.subr.mxu0 %v1955
  %v1957 = vand.u32 %v139, 4294901760
  %1958 = vmatpush1.msra.mxu0 %v1957
  %1959 = vmatprep.subr.mxu0 0.0
  %1960 = vmatpush1.msra.mxu0 0.0
  %1961 = vmatprep.subr.mxu0 0.0
  %1962 = vmatpush1.msra.mxu0 0.0
  %1963 = vmatprep.subr.mxu0 0.0
  %1964 = vmatpush1.msra.mxu0 0.0
  %1965 = vmatprep.subr.mxu0 0.0
  %1966 = vmatpush1.msra.mxu0 0.0
  %1967 = vmatprep.subr.mxu0 0.0
  %1968 = vmatpush1.msra.mxu0 0.0
  %1969 = vmatprep.subr.mxu0 0.0
  %1970 = vmatpush1.msra.mxu0 0.0
  %1971 = vmatprep.subr.mxu0 0.0
  %1972 = vmatpush1.msra.mxu0 0.0
  %1973 = vmatprep.subr.mxu0 0.0
  %1974 = vmatpush1.msra.mxu0 0.0
  %1975 = vmatprep.subr.mxu0 0.0
  %1976 = vmatpush1.msra.mxu0 0.0
  %1977 = vmatprep.subr.mxu0 0.0
  %1978 = vmatpush1.msra.mxu0 0.0
  %1979 = vmatprep.subr.mxu0 0.0
  %1980 = vmatpush1.msra.mxu0 0.0
  %1981 = vmatprep.subr.mxu0 0.0
  %1982 = vmatpush1.msra.mxu0 0.0
  %1983 = vmatprep.subr.mxu0 0.0
  %1984 = vmatpush1.msra.mxu0 0.0
  %1985 = vmatprep.subr.mxu0 0.0
  %1986 = vmatpush1.msra.mxu0 0.0
  %1987 = vmatprep.subr.mxu0 0.0
  %1988 = vmatpush1.msra.mxu0 0.0
  %1989 = vmatprep.subr.mxu0 0.0
  %1990 = vmatpush1.msra.mxu0 0.0
  %1991 = vmatprep.mubr.f32.mxu0 0.0
  %v1992 = vand.u32 %v14, 4294901760
  %v1993 = vsub.f32 %v14, %v1992
  %v1994 = vand.u32 %v1993, 4294901760
  %v1995 = vsub.f32 %v1993, %v1994
  %v1996 = vand.u32 %v1995, 4294901760
  %1997 = vmatmul.mubr.f32.gmra.mrb[0].mxu0 %v1996
  %v1998 = vpop.f32.mrb[0].mxu0
  %v1999 = vadd.f32 %v164, %v1998
  %v2000 = vpop.f32.mrb[0].mxu0
  %v2001 = vadd.f32 %v168, %v2000
  %2002 = vdwg.mxu0
  %v2003 = vand.u32 %v20, 4294901760
  %v2004 = vsub.f32 %v20, %v2003
  %v2005 = vand.u32 %v2004, 4294901760
  %v2006 = vsub.f32 %v2004, %v2005
  %v2007 = vand.u32 %v2006, 4294901760
  %2008 = vmatprep.subr.mxu0 %v2007
  %v2009 = vand.u32 %v19, 4294901760
  %v2010 = vsub.f32 %v19, %v2009
  %v2011 = vand.u32 %v2010, 4294901760
  %v2012 = vsub.f32 %v2010, %v2011
  %v2013 = vand.u32 %v2012, 4294901760
  %2014 = vmatpush1.msra.mxu0 %v2013
  %v2015 = vand.u32 %v28, 4294901760
  %v2016 = vsub.f32 %v28, %v2015
  %v2017 = vand.u32 %v2016, 4294901760
  %v2018 = vsub.f32 %v2016, %v2017
  %v2019 = vand.u32 %v2018, 4294901760
  %2020 = vmatprep.subr.mxu0 %v2019
  %v2021 = vand.u32 %v27, 4294901760
  %v2022 = vsub.f32 %v27, %v2021
  %v2023 = vand.u32 %v2022, 4294901760
  %v2024 = vsub.f32 %v2022, %v2023
  %v2025 = vand.u32 %v2024, 4294901760
  %2026 = vmatpush1.msra.mxu0 %v2025
  %v2027 = vand.u32 %v36, 4294901760
  %v2028 = vsub.f32 %v36, %v2027
  %v2029 = vand.u32 %v2028, 4294901760
  %v2030 = vsub.f32 %v2028, %v2029
  %v2031 = vand.u32 %v2030, 4294901760
  %2032 = vmatprep.subr.mxu0 %v2031
  %v2033 = vand.u32 %v35, 4294901760
  %v2034 = vsub.f32 %v35, %v2033
  %v2035 = vand.u32 %v2034, 4294901760
  %v2036 = vsub.f32 %v2034, %v2035
  %v2037 = vand.u32 %v2036, 4294901760
  %2038 = vmatpush1.msra.mxu0 %v2037
  %v2039 = vand.u32 %v44, 4294901760
  %v2040 = vsub.f32 %v44, %v2039
  %v2041 = vand.u32 %v2040, 4294901760
  %v2042 = vsub.f32 %v2040, %v2041
  %v2043 = vand.u32 %v2042, 4294901760
  %2044 = vmatprep.subr.mxu0 %v2043
  %v2045 = vand.u32 %v43, 4294901760
  %v2046 = vsub.f32 %v43, %v2045
  %v2047 = vand.u32 %v2046, 4294901760
  %v2048 = vsub.f32 %v2046, %v2047
  %v2049 = vand.u32 %v2048, 4294901760
  %2050 = vmatpush1.msra.mxu0 %v2049
  %v2051 = vand.u32 %v52, 4294901760
  %v2052 = vsub.f32 %v52, %v2051
  %v2053 = vand.u32 %v2052, 4294901760
  %v2054 = vsub.f32 %v2052, %v2053
  %v2055 = vand.u32 %v2054, 4294901760
  %2056 = vmatprep.subr.mxu0 %v2055
  %v2057 = vand.u32 %v51, 4294901760
  %v2058 = vsub.f32 %v51, %v2057
  %v2059 = vand.u32 %v2058, 4294901760
  %v2060 = vsub.f32 %v2058, %v2059
  %v2061 = vand.u32 %v2060, 4294901760
  %2062 = vmatpush1.msra.mxu0 %v2061
  %v2063 = vand.u32 %v60, 4294901760
  %v2064 = vsub.f32 %v60, %v2063
  %v2065 = vand.u32 %v2064, 4294901760
  %v2066 = vsub.f32 %v2064, %v2065
  %v2067 = vand.u32 %v2066, 4294901760
  %2068 = vmatprep.subr.mxu0 %v2067
  %v2069 = vand.u32 %v59, 4294901760
  %v2070 = vsub.f32 %v59, %v2069
  %v2071 = vand.u32 %v2070, 4294901760
  %v2072 = vsub.f32 %v2070, %v2071
  %v2073 = vand.u32 %v2072, 4294901760
  %2074 = vmatpush1.msra.mxu0 %v2073
  %v2075 = vand.u32 %v68, 4294901760
  %v2076 = vsub.f32 %v68, %v2075
  %v2077 = vand.u32 %v2076, 4294901760
  %v2078 = vsub.f32 %v2076, %v2077
  %v2079 = vand.u32 %v2078, 4294901760
  %2080 = vmatprep.subr.mxu0 %v2079
  %v2081 = vand.u32 %v67, 4294901760
  %v2082 = vsub.f32 %v67, %v2081
  %v2083 = vand.u32 %v2082, 4294901760
  %v2084 = vsub.f32 %v2082, %v2083
  %v2085 = vand.u32 %v2084, 4294901760
  %2086 = vmatpush1.msra.mxu0 %v2085
  %v2087 = vand.u32 %v76, 4294901760
  %v2088 = vsub.f32 %v76, %v2087
  %v2089 = vand.u32 %v2088, 4294901760
  %v2090 = vsub.f32 %v2088, %v2089
  %v2091 = vand.u32 %v2090, 4294901760
  %2092 = vmatprep.subr.mxu0 %v2091
  %v2093 = vand.u32 %v75, 4294901760
  %v2094 = vsub.f32 %v75, %v2093
  %v2095 = vand.u32 %v2094, 4294901760
  %v2096 = vsub.f32 %v2094, %v2095
  %v2097 = vand.u32 %v2096, 4294901760
  %2098 = vmatpush1.msra.mxu0 %v2097
  %v2099 = vand.u32 %v84, 4294901760
  %v2100 = vsub.f32 %v84, %v2099
  %v2101 = vand.u32 %v2100, 4294901760
  %v2102 = vsub.f32 %v2100, %v2101
  %v2103 = vand.u32 %v2102, 4294901760
  %2104 = vmatprep.subr.mxu0 %v2103
  %v2105 = vand.u32 %v83, 4294901760
  %v2106 = vsub.f32 %v83, %v2105
  %v2107 = vand.u32 %v2106, 4294901760
  %v2108 = vsub.f32 %v2106, %v2107
  %v2109 = vand.u32 %v2108, 4294901760
  %2110 = vmatpush1.msra.mxu0 %v2109
  %v2111 = vand.u32 %v92, 4294901760
  %v2112 = vsub.f32 %v92, %v2111
  %v2113 = vand.u32 %v2112, 4294901760
  %v2114 = vsub.f32 %v2112, %v2113
  %v2115 = vand.u32 %v2114, 4294901760
  %2116 = vmatprep.subr.mxu0 %v2115
  %v2117 = vand.u32 %v91, 4294901760
  %v2118 = vsub.f32 %v91, %v2117
  %v2119 = vand.u32 %v2118, 4294901760
  %v2120 = vsub.f32 %v2118, %v2119
  %v2121 = vand.u32 %v2120, 4294901760
  %2122 = vmatpush1.msra.mxu0 %v2121
  %v2123 = vand.u32 %v100, 4294901760
  %v2124 = vsub.f32 %v100, %v2123
  %v2125 = vand.u32 %v2124, 4294901760
  %v2126 = vsub.f32 %v2124, %v2125
  %v2127 = vand.u32 %v2126, 4294901760
  %2128 = vmatprep.subr.mxu0 %v2127
  %v2129 = vand.u32 %v99, 4294901760
  %v2130 = vsub.f32 %v99, %v2129
  %v2131 = vand.u32 %v2130, 4294901760
  %v2132 = vsub.f32 %v2130, %v2131
  %v2133 = vand.u32 %v2132, 4294901760
  %2134 = vmatpush1.msra.mxu0 %v2133
  %v2135 = vand.u32 %v108, 4294901760
  %v2136 = vsub.f32 %v108, %v2135
  %v2137 = vand.u32 %v2136, 4294901760
  %v2138 = vsub.f32 %v2136, %v2137
  %v2139 = vand.u32 %v2138, 4294901760
  %2140 = vmatprep.subr.mxu0 %v2139
  %v2141 = vand.u32 %v107, 4294901760
  %v2142 = vsub.f32 %v107, %v2141
  %v2143 = vand.u32 %v2142, 4294901760
  %v2144 = vsub.f32 %v2142, %v2143
  %v2145 = vand.u32 %v2144, 4294901760
  %2146 = vmatpush1.msra.mxu0 %v2145
  %v2147 = vand.u32 %v116, 4294901760
  %v2148 = vsub.f32 %v116, %v2147
  %v2149 = vand.u32 %v2148, 4294901760
  %v2150 = vsub.f32 %v2148, %v2149
  %v2151 = vand.u32 %v2150, 4294901760
  %2152 = vmatprep.subr.mxu0 %v2151
  %v2153 = vand.u32 %v115, 4294901760
  %v2154 = vsub.f32 %v115, %v2153
  %v2155 = vand.u32 %v2154, 4294901760
  %v2156 = vsub.f32 %v2154, %v2155
  %v2157 = vand.u32 %v2156, 4294901760
  %2158 = vmatpush1.msra.mxu0 %v2157
  %v2159 = vand.u32 %v124, 4294901760
  %v2160 = vsub.f32 %v124, %v2159
  %v2161 = vand.u32 %v2160, 4294901760
  %v2162 = vsub.f32 %v2160, %v2161
  %v2163 = vand.u32 %v2162, 4294901760
  %2164 = vmatprep.subr.mxu0 %v2163
  %v2165 = vand.u32 %v123, 4294901760
  %v2166 = vsub.f32 %v123, %v2165
  %v2167 = vand.u32 %v2166, 4294901760
  %v2168 = vsub.f32 %v2166, %v2167
  %v2169 = vand.u32 %v2168, 4294901760
  %2170 = vmatpush1.msra.mxu0 %v2169
  %v2171 = vand.u32 %v132, 4294901760
  %v2172 = vsub.f32 %v132, %v2171
  %v2173 = vand.u32 %v2172, 4294901760
  %v2174 = vsub.f32 %v2172, %v2173
  %v2175 = vand.u32 %v2174, 4294901760
  %2176 = vmatprep.subr.mxu0 %v2175
  %v2177 = vand.u32 %v131, 4294901760
  %v2178 = vsub.f32 %v131, %v2177
  %v2179 = vand.u32 %v2178, 4294901760
  %v2180 = vsub.f32 %v2178, %v2179
  %v2181 = vand.u32 %v2180, 4294901760
  %2182 = vmatpush1.msra.mxu0 %v2181
  %v2183 = vand.u32 %v140, 4294901760
  %v2184 = vsub.f32 %v140, %v2183
  %v2185 = vand.u32 %v2184, 4294901760
  %v2186 = vsub.f32 %v2184, %v2185
  %v2187 = vand.u32 %v2186, 4294901760
  %2188 = vmatprep.subr.mxu0 %v2187
  %v2189 = vand.u32 %v139, 4294901760
  %v2190 = vsub.f32 %v139, %v2189
  %v2191 = vand.u32 %v2190, 4294901760
  %v2192 = vsub.f32 %v2190, %v2191
  %v2193 = vand.u32 %v2192, 4294901760
  %2194 = vmatpush1.msra.mxu0 %v2193
  %2195 = vmatprep.subr.mxu0 0.0
  %2196 = vmatpush1.msra.mxu0 0.0
  %2197 = vmatprep.subr.mxu0 0.0
  %2198 = vmatpush1.msra.mxu0 0.0
  %2199 = vmatprep.subr.mxu0 0.0
  %2200 = vmatpush1.msra.mxu0 0.0
  %2201 = vmatprep.subr.mxu0 0.0
  %2202 = vmatpush1.msra.mxu0 0.0
  %2203 = vmatprep.subr.mxu0 0.0
  %2204 = vmatpush1.msra.mxu0 0.0
  %2205 = vmatprep.subr.mxu0 0.0
  %2206 = vmatpush1.msra.mxu0 0.0
  %2207 = vmatprep.subr.mxu0 0.0
  %2208 = vmatpush1.msra.mxu0 0.0
  %2209 = vmatprep.subr.mxu0 0.0
  %2210 = vmatpush1.msra.mxu0 0.0
  %2211 = vmatprep.subr.mxu0 0.0
  %2212 = vmatpush1.msra.mxu0 0.0
  %2213 = vmatprep.subr.mxu0 0.0
  %2214 = vmatpush1.msra.mxu0 0.0
  %2215 = vmatprep.subr.mxu0 0.0
  %2216 = vmatpush1.msra.mxu0 0.0
  %2217 = vmatprep.subr.mxu0 0.0
  %2218 = vmatpush1.msra.mxu0 0.0
  %2219 = vmatprep.subr.mxu0 0.0
  %2220 = vmatpush1.msra.mxu0 0.0
  %2221 = vmatprep.subr.mxu0 0.0
  %2222 = vmatpush1.msra.mxu0 0.0
  %2223 = vmatprep.subr.mxu0 0.0
  %2224 = vmatpush1.msra.mxu0 0.0
  %2225 = vmatprep.subr.mxu0 0.0
  %2226 = vmatpush1.msra.mxu0 0.0
  %2227 = vmatprep.mubr.f32.mxu0 0.0
  %v2228 = vand.u32 %v14, 4294901760
  %2229 = vmatmul.mubr.f32.gmra.mrb[0].mxu0 %v2228
  %v2230 = vpop.f32.mrb[0].mxu0
  %v2231 = vadd.f32 %v1999, %v2230
  %v2232 = vpop.f32.mrb[0].mxu0
  %v2233 = vadd.f32 %v2001, %v2232
  %2234 = vdwg.mxu0
  %v2235 = vand.u32 %v20, 4294901760
  %v2236 = vsub.f32 %v20, %v2235
  %2237 = vmatprep.subr.mxu0 %v2236
  %v2238 = vand.u32 %v19, 4294901760
  %v2239 = vsub.f32 %v19, %v2238
  %2240 = vmatpush1.msra.mxu0 %v2239
  %v2241 = vand.u32 %v28, 4294901760
  %v2242 = vsub.f32 %v28, %v2241
  %2243 = vmatprep.subr.mxu0 %v2242
  %v2244 = vand.u32 %v27, 4294901760
  %v2245 = vsub.f32 %v27, %v2244
  %2246 = vmatpush1.msra.mxu0 %v2245
  %v2247 = vand.u32 %v36, 4294901760
  %v2248 = vsub.f32 %v36, %v2247
  %2249 = vmatprep.subr.mxu0 %v2248
  %v2250 = vand.u32 %v35, 4294901760
  %v2251 = vsub.f32 %v35, %v2250
  %2252 = vmatpush1.msra.mxu0 %v2251
  %v2253 = vand.u32 %v44, 4294901760
  %v2254 = vsub.f32 %v44, %v2253
  %2255 = vmatprep.subr.mxu0 %v2254
  %v2256 = vand.u32 %v43, 4294901760
  %v2257 = vsub.f32 %v43, %v2256
  %2258 = vmatpush1.msra.mxu0 %v2257
  %v2259 = vand.u32 %v52, 4294901760
  %v2260 = vsub.f32 %v52, %v2259
  %2261 = vmatprep.subr.mxu0 %v2260
  %v2262 = vand.u32 %v51, 4294901760
  %v2263 = vsub.f32 %v51, %v2262
  %2264 = vmatpush1.msra.mxu0 %v2263
  %v2265 = vand.u32 %v60, 4294901760
  %v2266 = vsub.f32 %v60, %v2265
  %2267 = vmatprep.subr.mxu0 %v2266
  %v2268 = vand.u32 %v59, 4294901760
  %v2269 = vsub.f32 %v59, %v2268
  %2270 = vmatpush1.msra.mxu0 %v2269
  %v2271 = vand.u32 %v68, 4294901760
  %v2272 = vsub.f32 %v68, %v2271
  %2273 = vmatprep.subr.mxu0 %v2272
  %v2274 = vand.u32 %v67, 4294901760
  %v2275 = vsub.f32 %v67, %v2274
  %2276 = vmatpush1.msra.mxu0 %v2275
  %v2277 = vand.u32 %v76, 4294901760
  %v2278 = vsub.f32 %v76, %v2277
  %2279 = vmatprep.subr.mxu0 %v2278
  %v2280 = vand.u32 %v75, 4294901760
  %v2281 = vsub.f32 %v75, %v2280
  %2282 = vmatpush1.msra.mxu0 %v2281
  %v2283 = vand.u32 %v84, 4294901760
  %v2284 = vsub.f32 %v84, %v2283
  %2285 = vmatprep.subr.mxu0 %v2284
  %v2286 = vand.u32 %v83, 4294901760
  %v2287 = vsub.f32 %v83, %v2286
  %2288 = vmatpush1.msra.mxu0 %v2287
  %v2289 = vand.u32 %v92, 4294901760
  %v2290 = vsub.f32 %v92, %v2289
  %2291 = vmatprep.subr.mxu0 %v2290
  %v2292 = vand.u32 %v91, 4294901760
  %v2293 = vsub.f32 %v91, %v2292
  %2294 = vmatpush1.msra.mxu0 %v2293
  %v2295 = vand.u32 %v100, 4294901760
  %v2296 = vsub.f32 %v100, %v2295
  %2297 = vmatprep.subr.mxu0 %v2296
  %v2298 = vand.u32 %v99, 4294901760
  %v2299 = vsub.f32 %v99, %v2298
  %2300 = vmatpush1.msra.mxu0 %v2299
  %v2301 = vand.u32 %v108, 4294901760
  %v2302 = vsub.f32 %v108, %v2301
  %2303 = vmatprep.subr.mxu0 %v2302
  %v2304 = vand.u32 %v107, 4294901760
  %v2305 = vsub.f32 %v107, %v2304
  %2306 = vmatpush1.msra.mxu0 %v2305
  %v2307 = vand.u32 %v116, 4294901760
  %v2308 = vsub.f32 %v116, %v2307
  %2309 = vmatprep.subr.mxu0 %v2308
  %v2310 = vand.u32 %v115, 4294901760
  %v2311 = vsub.f32 %v115, %v2310
  %2312 = vmatpush1.msra.mxu0 %v2311
  %v2313 = vand.u32 %v124, 4294901760
  %v2314 = vsub.f32 %v124, %v2313
  %2315 = vmatprep.subr.mxu0 %v2314
  %v2316 = vand.u32 %v123, 4294901760
  %v2317 = vsub.f32 %v123, %v2316
  %2318 = vmatpush1.msra.mxu0 %v2317
  %v2319 = vand.u32 %v132, 4294901760
  %v2320 = vsub.f32 %v132, %v2319
  %2321 = vmatprep.subr.mxu0 %v2320
  %v2322 = vand.u32 %v131, 4294901760
  %v2323 = vsub.f32 %v131, %v2322
  %2324 = vmatpush1.msra.mxu0 %v2323
  %v2325 = vand.u32 %v140, 4294901760
  %v2326 = vsub.f32 %v140, %v2325
  %2327 = vmatprep.subr.mxu0 %v2326
  %v2328 = vand.u32 %v139, 4294901760
  %v2329 = vsub.f32 %v139, %v2328
  %2330 = vmatpush1.msra.mxu0 %v2329
  %2331 = vmatprep.subr.mxu0 0.0
  %2332 = vmatpush1.msra.mxu0 0.0
  %2333 = vmatprep.subr.mxu0 0.0
  %2334 = vmatpush1.msra.mxu0 0.0
  %2335 = vmatprep.subr.mxu0 0.0
  %2336 = vmatpush1.msra.mxu0 0.0
  %2337 = vmatprep.subr.mxu0 0.0
  %2338 = vmatpush1.msra.mxu0 0.0
  %2339 = vmatprep.subr.mxu0 0.0
  %2340 = vmatpush1.msra.mxu0 0.0
  %2341 = vmatprep.subr.mxu0 0.0
  %2342 = vmatpush1.msra.mxu0 0.0
  %2343 = vmatprep.subr.mxu0 0.0
  %2344 = vmatpush1.msra.mxu0 0.0
  %2345 = vmatprep.subr.mxu0 0.0
  %2346 = vmatpush1.msra.mxu0 0.0
  %2347 = vmatprep.subr.mxu0 0.0
  %2348 = vmatpush1.msra.mxu0 0.0
  %2349 = vmatprep.subr.mxu0 0.0
  %2350 = vmatpush1.msra.mxu0 0.0
  %2351 = vmatprep.subr.mxu0 0.0
  %2352 = vmatpush1.msra.mxu0 0.0
  %2353 = vmatprep.subr.mxu0 0.0
  %2354 = vmatpush1.msra.mxu0 0.0
  %2355 = vmatprep.subr.mxu0 0.0
  %2356 = vmatpush1.msra.mxu0 0.0
  %2357 = vmatprep.subr.mxu0 0.0
  %2358 = vmatpush1.msra.mxu0 0.0
  %2359 = vmatprep.subr.mxu0 0.0
  %2360 = vmatpush1.msra.mxu0 0.0
  %2361 = vmatprep.subr.mxu0 0.0
  %2362 = vmatpush1.msra.mxu0 0.0
  %2363 = vmatprep.mubr.f32.mxu0 0.0
  %v2364 = vand.u32 %v14, 4294901760
  %v2365 = vsub.f32 %v14, %v2364
  %2366 = vmatmul.mubr.f32.gmra.mrb[0].mxu0 %v2365
  %v2367 = vpop.f32.mrb[0].mxu0
  %v2368 = vadd.f32 %v2231, %v2367
  %v2369 = vpop.f32.mrb[0].mxu0
  %v2370 = vadd.f32 %v2233, %v2369
  %2371 = vdwg.mxu0
  %v2372 = vand.u32 %v20, 4294901760
  %2373 = vmatprep.subr.mxu0 %v2372
  %v2374 = vand.u32 %v19, 4294901760
  %2375 = vmatpush1.msra.mxu0 %v2374
  %v2376 = vand.u32 %v28, 4294901760
  %2377 = vmatprep.subr.mxu0 %v2376
  %v2378 = vand.u32 %v27, 4294901760
  %2379 = vmatpush1.msra.mxu0 %v2378
  %v2380 = vand.u32 %v36, 4294901760
  %2381 = vmatprep.subr.mxu0 %v2380
  %v2382 = vand.u32 %v35, 4294901760
  %2383 = vmatpush1.msra.mxu0 %v2382
  %v2384 = vand.u32 %v44, 4294901760
  %2385 = vmatprep.subr.mxu0 %v2384
  %v2386 = vand.u32 %v43, 4294901760
  %2387 = vmatpush1.msra.mxu0 %v2386
  %v2388 = vand.u32 %v52, 4294901760
  %2389 = vmatprep.subr.mxu0 %v2388
  %v2390 = vand.u32 %v51, 4294901760
  %2391 = vmatpush1.msra.mxu0 %v2390
  %v2392 = vand.u32 %v60, 4294901760
  %2393 = vmatprep.subr.mxu0 %v2392
  %v2394 = vand.u32 %v59, 4294901760
  %2395 = vmatpush1.msra.mxu0 %v2394
  %v2396 = vand.u32 %v68, 4294901760
  %2397 = vmatprep.subr.mxu0 %v2396
  %v2398 = vand.u32 %v67, 4294901760
  %2399 = vmatpush1.msra.mxu0 %v2398
  %v2400 = vand.u32 %v76, 4294901760
  %2401 = vmatprep.subr.mxu0 %v2400
  %v2402 = vand.u32 %v75, 4294901760
  %2403 = vmatpush1.msra.mxu0 %v2402
  %v2404 = vand.u32 %v84, 4294901760
  %2405 = vmatprep.subr.mxu0 %v2404
  %v2406 = vand.u32 %v83, 4294901760
  %2407 = vmatpush1.msra.mxu0 %v2406
  %v2408 = vand.u32 %v92, 4294901760
  %2409 = vmatprep.subr.mxu0 %v2408
  %v2410 = vand.u32 %v91, 4294901760
  %2411 = vmatpush1.msra.mxu0 %v2410
  %v2412 = vand.u32 %v100, 4294901760
  %2413 = vmatprep.subr.mxu0 %v2412
  %v2414 = vand.u32 %v99, 4294901760
  %2415 = vmatpush1.msra.mxu0 %v2414
  %v2416 = vand.u32 %v108, 4294901760
  %2417 = vmatprep.subr.mxu0 %v2416
  %v2418 = vand.u32 %v107, 4294901760
  %2419 = vmatpush1.msra.mxu0 %v2418
  %v2420 = vand.u32 %v116, 4294901760
  %2421 = vmatprep.subr.mxu0 %v2420
  %v2422 = vand.u32 %v115, 4294901760
  %2423 = vmatpush1.msra.mxu0 %v2422
  %v2424 = vand.u32 %v124, 4294901760
  %2425 = vmatprep.subr.mxu0 %v2424
  %v2426 = vand.u32 %v123, 4294901760
  %2427 = vmatpush1.msra.mxu0 %v2426
  %v2428 = vand.u32 %v132, 4294901760
  %2429 = vmatprep.subr.mxu0 %v2428
  %v2430 = vand.u32 %v131, 4294901760
  %2431 = vmatpush1.msra.mxu0 %v2430
  %v2432 = vand.u32 %v140, 4294901760
  %2433 = vmatprep.subr.mxu0 %v2432
  %v2434 = vand.u32 %v139, 4294901760
  %2435 = vmatpush1.msra.mxu0 %v2434
  %2436 = vmatprep.subr.mxu0 0.0
  %2437 = vmatpush1.msra.mxu0 0.0
  %2438 = vmatprep.subr.mxu0 0.0
  %2439 = vmatpush1.msra.mxu0 0.0
  %2440 = vmatprep.subr.mxu0 0.0
  %2441 = vmatpush1.msra.mxu0 0.0
  %2442 = vmatprep.subr.mxu0 0.0
  %2443 = vmatpush1.msra.mxu0 0.0
  %2444 = vmatprep.subr.mxu0 0.0
  %2445 = vmatpush1.msra.mxu0 0.0
  %2446 = vmatprep.subr.mxu0 0.0
  %2447 = vmatpush1.msra.mxu0 0.0
  %2448 = vmatprep.subr.mxu0 0.0
  %2449 = vmatpush1.msra.mxu0 0.0
  %2450 = vmatprep.subr.mxu0 0.0
  %2451 = vmatpush1.msra.mxu0 0.0
  %2452 = vmatprep.subr.mxu0 0.0
  %2453 = vmatpush1.msra.mxu0 0.0
  %2454 = vmatprep.subr.mxu0 0.0
  %2455 = vmatpush1.msra.mxu0 0.0
  %2456 = vmatprep.subr.mxu0 0.0
  %2457 = vmatpush1.msra.mxu0 0.0
  %2458 = vmatprep.subr.mxu0 0.0
  %2459 = vmatpush1.msra.mxu0 0.0
  %2460 = vmatprep.subr.mxu0 0.0
  %2461 = vmatpush1.msra.mxu0 0.0
  %2462 = vmatprep.subr.mxu0 0.0
  %2463 = vmatpush1.msra.mxu0 0.0
  %2464 = vmatprep.subr.mxu0 0.0
  %2465 = vmatpush1.msra.mxu0 0.0
  %2466 = vmatprep.subr.mxu0 0.0
  %2467 = vmatpush1.msra.mxu0 0.0
  %2468 = vmatprep.mubr.f32.mxu0 0.0
  %v2469 = vand.u32 %v14, 4294901760
  %v2470 = vsub.f32 %v14, %v2469
  %v2471 = vand.u32 %v2470, 4294901760
  %2472 = vmatmul.mubr.f32.gmra.mrb[0].mxu0 %v2471
  %v2473 = vpop.f32.mrb[0].mxu0
  %v2474 = vadd.f32 %v2368, %v2473
  %v2475 = vpop.f32.mrb[0].mxu0
  %v2476 = vadd.f32 %v2370, %v2475
  %2477 = vdwg.mxu0
  %v2478 = vand.u32 %v20, 4294901760
  %v2479 = vsub.f32 %v20, %v2478
  %v2480 = vand.u32 %v2479, 4294901760
  %2481 = vmatprep.subr.mxu0 %v2480
  %v2482 = vand.u32 %v19, 4294901760
  %v2483 = vsub.f32 %v19, %v2482
  %v2484 = vand.u32 %v2483, 4294901760
  %2485 = vmatpush1.msra.mxu0 %v2484
  %v2486 = vand.u32 %v28, 4294901760
  %v2487 = vsub.f32 %v28, %v2486
  %v2488 = vand.u32 %v2487, 4294901760
  %2489 = vmatprep.subr.mxu0 %v2488
  %v2490 = vand.u32 %v27, 4294901760
  %v2491 = vsub.f32 %v27, %v2490
  %v2492 = vand.u32 %v2491, 4294901760
  %2493 = vmatpush1.msra.mxu0 %v2492
  %v2494 = vand.u32 %v36, 4294901760
  %v2495 = vsub.f32 %v36, %v2494
  %v2496 = vand.u32 %v2495, 4294901760
  %2497 = vmatprep.subr.mxu0 %v2496
  %v2498 = vand.u32 %v35, 4294901760
  %v2499 = vsub.f32 %v35, %v2498
  %v2500 = vand.u32 %v2499, 4294901760
  %2501 = vmatpush1.msra.mxu0 %v2500
  %v2502 = vand.u32 %v44, 4294901760
  %v2503 = vsub.f32 %v44, %v2502
  %v2504 = vand.u32 %v2503, 4294901760
  %2505 = vmatprep.subr.mxu0 %v2504
  %v2506 = vand.u32 %v43, 4294901760
  %v2507 = vsub.f32 %v43, %v2506
  %v2508 = vand.u32 %v2507, 4294901760
  %2509 = vmatpush1.msra.mxu0 %v2508
  %v2510 = vand.u32 %v52, 4294901760
  %v2511 = vsub.f32 %v52, %v2510
  %v2512 = vand.u32 %v2511, 4294901760
  %2513 = vmatprep.subr.mxu0 %v2512
  %v2514 = vand.u32 %v51, 4294901760
  %v2515 = vsub.f32 %v51, %v2514
  %v2516 = vand.u32 %v2515, 4294901760
  %2517 = vmatpush1.msra.mxu0 %v2516
  %v2518 = vand.u32 %v60, 4294901760
  %v2519 = vsub.f32 %v60, %v2518
  %v2520 = vand.u32 %v2519, 4294901760
  %2521 = vmatprep.subr.mxu0 %v2520
  %v2522 = vand.u32 %v59, 4294901760
  %v2523 = vsub.f32 %v59, %v2522
  %v2524 = vand.u32 %v2523, 4294901760
  %2525 = vmatpush1.msra.mxu0 %v2524
  %v2526 = vand.u32 %v68, 4294901760
  %v2527 = vsub.f32 %v68, %v2526
  %v2528 = vand.u32 %v2527, 4294901760
  %2529 = vmatprep.subr.mxu0 %v2528
  %v2530 = vand.u32 %v67, 4294901760
  %v2531 = vsub.f32 %v67, %v2530
  %v2532 = vand.u32 %v2531, 4294901760
  %2533 = vmatpush1.msra.mxu0 %v2532
  %v2534 = vand.u32 %v76, 4294901760
  %v2535 = vsub.f32 %v76, %v2534
  %v2536 = vand.u32 %v2535, 4294901760
  %2537 = vmatprep.subr.mxu0 %v2536
  %v2538 = vand.u32 %v75, 4294901760
  %v2539 = vsub.f32 %v75, %v2538
  %v2540 = vand.u32 %v2539, 4294901760
  %2541 = vmatpush1.msra.mxu0 %v2540
  %v2542 = vand.u32 %v84, 4294901760
  %v2543 = vsub.f32 %v84, %v2542
  %v2544 = vand.u32 %v2543, 4294901760
  %2545 = vmatprep.subr.mxu0 %v2544
  %v2546 = vand.u32 %v83, 4294901760
  %v2547 = vsub.f32 %v83, %v2546
  %v2548 = vand.u32 %v2547, 4294901760
  %2549 = vmatpush1.msra.mxu0 %v2548
  %v2550 = vand.u32 %v92, 4294901760
  %v2551 = vsub.f32 %v92, %v2550
  %v2552 = vand.u32 %v2551, 4294901760
  %2553 = vmatprep.subr.mxu0 %v2552
  %v2554 = vand.u32 %v91, 4294901760
  %v2555 = vsub.f32 %v91, %v2554
  %v2556 = vand.u32 %v2555, 4294901760
  %2557 = vmatpush1.msra.mxu0 %v2556
  %v2558 = vand.u32 %v100, 4294901760
  %v2559 = vsub.f32 %v100, %v2558
  %v2560 = vand.u32 %v2559, 4294901760
  %2561 = vmatprep.subr.mxu0 %v2560
  %v2562 = vand.u32 %v99, 4294901760
  %v2563 = vsub.f32 %v99, %v2562
  %v2564 = vand.u32 %v2563, 4294901760
  %2565 = vmatpush1.msra.mxu0 %v2564
  %v2566 = vand.u32 %v108, 4294901760
  %v2567 = vsub.f32 %v108, %v2566
  %v2568 = vand.u32 %v2567, 4294901760
  %2569 = vmatprep.subr.mxu0 %v2568
  %v2570 = vand.u32 %v107, 4294901760
  %v2571 = vsub.f32 %v107, %v2570
  %v2572 = vand.u32 %v2571, 4294901760
  %2573 = vmatpush1.msra.mxu0 %v2572
  %v2574 = vand.u32 %v116, 4294901760
  %v2575 = vsub.f32 %v116, %v2574
  %v2576 = vand.u32 %v2575, 4294901760
  %2577 = vmatprep.subr.mxu0 %v2576
  %v2578 = vand.u32 %v115, 4294901760
  %v2579 = vsub.f32 %v115, %v2578
  %v2580 = vand.u32 %v2579, 4294901760
  %2581 = vmatpush1.msra.mxu0 %v2580
  %v2582 = vand.u32 %v124, 4294901760
  %v2583 = vsub.f32 %v124, %v2582
  %v2584 = vand.u32 %v2583, 4294901760
  %2585 = vmatprep.subr.mxu0 %v2584
  %v2586 = vand.u32 %v123, 4294901760
  %v2587 = vsub.f32 %v123, %v2586
  %v2588 = vand.u32 %v2587, 4294901760
  %2589 = vmatpush1.msra.mxu0 %v2588
  %v2590 = vand.u32 %v132, 4294901760
  %v2591 = vsub.f32 %v132, %v2590
  %v2592 = vand.u32 %v2591, 4294901760
  %2593 = vmatprep.subr.mxu0 %v2592
  %v2594 = vand.u32 %v131, 4294901760
  %v2595 = vsub.f32 %v131, %v2594
  %v2596 = vand.u32 %v2595, 4294901760
  %2597 = vmatpush1.msra.mxu0 %v2596
  %v2598 = vand.u32 %v140, 4294901760
  %v2599 = vsub.f32 %v140, %v2598
  %v2600 = vand.u32 %v2599, 4294901760
  %2601 = vmatprep.subr.mxu0 %v2600
  %v2602 = vand.u32 %v139, 4294901760
  %v2603 = vsub.f32 %v139, %v2602
  %v2604 = vand.u32 %v2603, 4294901760
  %2605 = vmatpush1.msra.mxu0 %v2604
  %2606 = vmatprep.subr.mxu0 0.0
  %2607 = vmatpush1.msra.mxu0 0.0
  %2608 = vmatprep.subr.mxu0 0.0
  %2609 = vmatpush1.msra.mxu0 0.0
  %2610 = vmatprep.subr.mxu0 0.0
  %2611 = vmatpush1.msra.mxu0 0.0
  %2612 = vmatprep.subr.mxu0 0.0
  %2613 = vmatpush1.msra.mxu0 0.0
  %2614 = vmatprep.subr.mxu0 0.0
  %2615 = vmatpush1.msra.mxu0 0.0
  %2616 = vmatprep.subr.mxu0 0.0
  %2617 = vmatpush1.msra.mxu0 0.0
  %2618 = vmatprep.subr.mxu0 0.0
  %2619 = vmatpush1.msra.mxu0 0.0
  %2620 = vmatprep.subr.mxu0 0.0
  %2621 = vmatpush1.msra.mxu0 0.0
  %2622 = vmatprep.subr.mxu0 0.0
  %2623 = vmatpush1.msra.mxu0 0.0
  %2624 = vmatprep.subr.mxu0 0.0
  %2625 = vmatpush1.msra.mxu0 0.0
  %2626 = vmatprep.subr.mxu0 0.0
  %2627 = vmatpush1.msra.mxu0 0.0
  %2628 = vmatprep.subr.mxu0 0.0
  %2629 = vmatpush1.msra.mxu0 0.0
  %2630 = vmatprep.subr.mxu0 0.0
  %2631 = vmatpush1.msra.mxu0 0.0
  %2632 = vmatprep.subr.mxu0 0.0
  %2633 = vmatpush1.msra.mxu0 0.0
  %2634 = vmatprep.subr.mxu0 0.0
  %2635 = vmatpush1.msra.mxu0 0.0
  %2636 = vmatprep.subr.mxu0 0.0
  %2637 = vmatpush1.msra.mxu0 0.0
  %2638 = vmatprep.mubr.f32.mxu0 0.0
  %v2639 = vand.u32 %v14, 4294901760
  %2640 = vmatmul.mubr.f32.gmra.mrb[0].mxu0 %v2639
  %v2641 = vpop.f32.mrb[0].mxu0
  %v2642 = vadd.f32 %v2474, %v2641
  %v2643 = vpop.f32.mrb[0].mxu0
  %v2644 = vadd.f32 %v2476, %v2643
  %2645 = vdwg.mxu0
  %v2646 = vand.u32 %v20, 4294901760
  %2647 = vmatprep.subr.mxu0 %v2646
  %v2648 = vand.u32 %v19, 4294901760
  %2649 = vmatpush1.msra.mxu0 %v2648
  %v2650 = vand.u32 %v28, 4294901760
  %2651 = vmatprep.subr.mxu0 %v2650
  %v2652 = vand.u32 %v27, 4294901760
  %2653 = vmatpush1.msra.mxu0 %v2652
  %v2654 = vand.u32 %v36, 4294901760
  %2655 = vmatprep.subr.mxu0 %v2654
  %v2656 = vand.u32 %v35, 4294901760
  %2657 = vmatpush1.msra.mxu0 %v2656
  %v2658 = vand.u32 %v44, 4294901760
  %2659 = vmatprep.subr.mxu0 %v2658
  %v2660 = vand.u32 %v43, 4294901760
  %2661 = vmatpush1.msra.mxu0 %v2660
  %v2662 = vand.u32 %v52, 4294901760
  %2663 = vmatprep.subr.mxu0 %v2662
  %v2664 = vand.u32 %v51, 4294901760
  %2665 = vmatpush1.msra.mxu0 %v2664
  %v2666 = vand.u32 %v60, 4294901760
  %2667 = vmatprep.subr.mxu0 %v2666
  %v2668 = vand.u32 %v59, 4294901760
  %2669 = vmatpush1.msra.mxu0 %v2668
  %v2670 = vand.u32 %v68, 4294901760
  %2671 = vmatprep.subr.mxu0 %v2670
  %v2672 = vand.u32 %v67, 4294901760
  %2673 = vmatpush1.msra.mxu0 %v2672
  %v2674 = vand.u32 %v76, 4294901760
  %2675 = vmatprep.subr.mxu0 %v2674
  %v2676 = vand.u32 %v75, 4294901760
  %2677 = vmatpush1.msra.mxu0 %v2676
  %v2678 = vand.u32 %v84, 4294901760
  %2679 = vmatprep.subr.mxu0 %v2678
  %v2680 = vand.u32 %v83, 4294901760
  %2681 = vmatpush1.msra.mxu0 %v2680
  %v2682 = vand.u32 %v92, 4294901760
  %2683 = vmatprep.subr.mxu0 %v2682
  %v2684 = vand.u32 %v91, 4294901760
  %2685 = vmatpush1.msra.mxu0 %v2684
  %v2686 = vand.u32 %v100, 4294901760
  %2687 = vmatprep.subr.mxu0 %v2686
  %v2688 = vand.u32 %v99, 4294901760
  %2689 = vmatpush1.msra.mxu0 %v2688
  %v2690 = vand.u32 %v108, 4294901760
  %2691 = vmatprep.subr.mxu0 %v2690
  %v2692 = vand.u32 %v107, 4294901760
  %2693 = vmatpush1.msra.mxu0 %v2692
  %v2694 = vand.u32 %v116, 4294901760
  %2695 = vmatprep.subr.mxu0 %v2694
  %v2696 = vand.u32 %v115, 4294901760
  %2697 = vmatpush1.msra.mxu0 %v2696
  %v2698 = vand.u32 %v124, 4294901760
  %2699 = vmatprep.subr.mxu0 %v2698
  %v2700 = vand.u32 %v123, 4294901760
  %2701 = vmatpush1.msra.mxu0 %v2700
  %v2702 = vand.u32 %v132, 4294901760
  %2703 = vmatprep.subr.mxu0 %v2702
  %v2704 = vand.u32 %v131, 4294901760
  %2705 = vmatpush1.msra.mxu0 %v2704
  %v2706 = vand.u32 %v140, 4294901760
  %2707 = vmatprep.subr.mxu0 %v2706
  %v2708 = vand.u32 %v139, 4294901760
  %2709 = vmatpush1.msra.mxu0 %v2708
  %2710 = vmatprep.subr.mxu0 0.0
  %2711 = vmatpush1.msra.mxu0 0.0
  %2712 = vmatprep.subr.mxu0 0.0
  %2713 = vmatpush1.msra.mxu0 0.0
  %2714 = vmatprep.subr.mxu0 0.0
  %2715 = vmatpush1.msra.mxu0 0.0
  %2716 = vmatprep.subr.mxu0 0.0
  %2717 = vmatpush1.msra.mxu0 0.0
  %2718 = vmatprep.subr.mxu0 0.0
  %2719 = vmatpush1.msra.mxu0 0.0
  %2720 = vmatprep.subr.mxu0 0.0
  %2721 = vmatpush1.msra.mxu0 0.0
  %2722 = vmatprep.subr.mxu0 0.0
  %2723 = vmatpush1.msra.mxu0 0.0
  %2724 = vmatprep.subr.mxu0 0.0
  %2725 = vmatpush1.msra.mxu0 0.0
  %2726 = vmatprep.subr.mxu0 0.0
  %2727 = vmatpush1.msra.mxu0 0.0
  %2728 = vmatprep.subr.mxu0 0.0
  %2729 = vmatpush1.msra.mxu0 0.0
  %2730 = vmatprep.subr.mxu0 0.0
  %2731 = vmatpush1.msra.mxu0 0.0
  %2732 = vmatprep.subr.mxu0 0.0
  %2733 = vmatpush1.msra.mxu0 0.0
  %2734 = vmatprep.subr.mxu0 0.0
  %2735 = vmatpush1.msra.mxu0 0.0
  %2736 = vmatprep.subr.mxu0 0.0
  %2737 = vmatpush1.msra.mxu0 0.0
  %2738 = vmatprep.subr.mxu0 0.0
  %2739 = vmatpush1.msra.mxu0 0.0
  %2740 = vmatprep.subr.mxu0 0.0
  %2741 = vmatpush1.msra.mxu0 0.0
  %2742 = vmatprep.mubr.f32.mxu0 0.0
  %v2743 = vand.u32 %v14, 4294901760
  %2744 = vmatmul.mubr.f32.gmra.mrb[0].mxu0 %v2743
  %v2745 = vpop.f32.mrb[0].mxu0
  %v2746 = vadd.f32 %v2642, %v2745
  %v2747 = vpop.f32.mrb[0].mxu0
  %v2748 = vadd.f32 %v2644, %v2747
  %2749 = vdwg.mxu0
  %v2750 = vand.u32 %v22, 4294901760
  %2751 = vmatprep.subr.mxu0 %v2750
  %v2752 = vand.u32 %v21, 4294901760
  %2753 = vmatpush1.msra.mxu0 %v2752
  %v2754 = vand.u32 %v30, 4294901760
  %2755 = vmatprep.subr.mxu0 %v2754
  %v2756 = vand.u32 %v29, 4294901760
  %2757 = vmatpush1.msra.mxu0 %v2756
  %v2758 = vand.u32 %v38, 4294901760
  %2759 = vmatprep.subr.mxu0 %v2758
  %v2760 = vand.u32 %v37, 4294901760
  %2761 = vmatpush1.msra.mxu0 %v2760
  %v2762 = vand.u32 %v46, 4294901760
  %2763 = vmatprep.subr.mxu0 %v2762
  %v2764 = vand.u32 %v45, 4294901760
  %2765 = vmatpush1.msra.mxu0 %v2764
  %v2766 = vand.u32 %v54, 4294901760
  %2767 = vmatprep.subr.mxu0 %v2766
  %v2768 = vand.u32 %v53, 4294901760
  %2769 = vmatpush1.msra.mxu0 %v2768
  %v2770 = vand.u32 %v62, 4294901760
  %2771 = vmatprep.subr.mxu0 %v2770
  %v2772 = vand.u32 %v61, 4294901760
  %2773 = vmatpush1.msra.mxu0 %v2772
  %v2774 = vand.u32 %v70, 4294901760
  %2775 = vmatprep.subr.mxu0 %v2774
  %v2776 = vand.u32 %v69, 4294901760
  %2777 = vmatpush1.msra.mxu0 %v2776
  %v2778 = vand.u32 %v78, 4294901760
  %2779 = vmatprep.subr.mxu0 %v2778
  %v2780 = vand.u32 %v77, 4294901760
  %2781 = vmatpush1.msra.mxu0 %v2780
  %v2782 = vand.u32 %v86, 4294901760
  %2783 = vmatprep.subr.mxu0 %v2782
  %v2784 = vand.u32 %v85, 4294901760
  %2785 = vmatpush1.msra.mxu0 %v2784
  %v2786 = vand.u32 %v94, 4294901760
  %2787 = vmatprep.subr.mxu0 %v2786
  %v2788 = vand.u32 %v93, 4294901760
  %2789 = vmatpush1.msra.mxu0 %v2788
  %v2790 = vand.u32 %v102, 4294901760
  %2791 = vmatprep.subr.mxu0 %v2790
  %v2792 = vand.u32 %v101, 4294901760
  %2793 = vmatpush1.msra.mxu0 %v2792
  %v2794 = vand.u32 %v110, 4294901760
  %2795 = vmatprep.subr.mxu0 %v2794
  %v2796 = vand.u32 %v109, 4294901760
  %2797 = vmatpush1.msra.mxu0 %v2796
  %v2798 = vand.u32 %v118, 4294901760
  %2799 = vmatprep.subr.mxu0 %v2798
  %v2800 = vand.u32 %v117, 4294901760
  %2801 = vmatpush1.msra.mxu0 %v2800
  %v2802 = vand.u32 %v126, 4294901760
  %2803 = vmatprep.subr.mxu0 %v2802
  %v2804 = vand.u32 %v125, 4294901760
  %2805 = vmatpush1.msra.mxu0 %v2804
  %v2806 = vand.u32 %v134, 4294901760
  %2807 = vmatprep.subr.mxu0 %v2806
  %v2808 = vand.u32 %v133, 4294901760
  %2809 = vmatpush1.msra.mxu0 %v2808
  %v2810 = vand.u32 %v142, 4294901760
  %2811 = vmatprep.subr.mxu0 %v2810
  %v2812 = vand.u32 %v141, 4294901760
  %2813 = vmatpush1.msra.mxu0 %v2812
  %2814 = vmatprep.subr.mxu0 0.0
  %2815 = vmatpush1.msra.mxu0 0.0
  %2816 = vmatprep.subr.mxu0 0.0
  %2817 = vmatpush1.msra.mxu0 0.0
  %2818 = vmatprep.subr.mxu0 0.0
  %2819 = vmatpush1.msra.mxu0 0.0
  %2820 = vmatprep.subr.mxu0 0.0
  %2821 = vmatpush1.msra.mxu0 0.0
  %2822 = vmatprep.subr.mxu0 0.0
  %2823 = vmatpush1.msra.mxu0 0.0
  %2824 = vmatprep.subr.mxu0 0.0
  %2825 = vmatpush1.msra.mxu0 0.0
  %2826 = vmatprep.subr.mxu0 0.0
  %2827 = vmatpush1.msra.mxu0 0.0
  %2828 = vmatprep.subr.mxu0 0.0
  %2829 = vmatpush1.msra.mxu0 0.0
  %2830 = vmatprep.subr.mxu0 0.0
  %2831 = vmatpush1.msra.mxu0 0.0
  %2832 = vmatprep.subr.mxu0 0.0
  %2833 = vmatpush1.msra.mxu0 0.0
  %2834 = vmatprep.subr.mxu0 0.0
  %2835 = vmatpush1.msra.mxu0 0.0
  %2836 = vmatprep.subr.mxu0 0.0
  %2837 = vmatpush1.msra.mxu0 0.0
  %2838 = vmatprep.subr.mxu0 0.0
  %2839 = vmatpush1.msra.mxu0 0.0
  %2840 = vmatprep.subr.mxu0 0.0
  %2841 = vmatpush1.msra.mxu0 0.0
  %2842 = vmatprep.subr.mxu0 0.0
  %2843 = vmatpush1.msra.mxu0 0.0
  %2844 = vmatprep.subr.mxu0 0.0
  %2845 = vmatpush1.msra.mxu0 0.0
  %2846 = vmatprep.mubr.f32.mxu0 0.0
  %v2847 = vand.u32 %v14, 4294901760
  %v2848 = vsub.f32 %v14, %v2847
  %v2849 = vand.u32 %v2848, 4294901760
  %v2850 = vsub.f32 %v2848, %v2849
  %v2851 = vand.u32 %v2850, 4294901760
  %2852 = vmatmul.mubr.f32.gmra.mrb[0].mxu0 %v2851
  %v2853 = vpop.f32.mrb[0].mxu0
  %v2854 = vadd.f32 %v172, %v2853
  %v2855 = vpop.f32.mrb[0].mxu0
  %v2856 = vadd.f32 %v176, %v2855
  %2857 = vdwg.mxu0
  %v2858 = vand.u32 %v22, 4294901760
  %v2859 = vsub.f32 %v22, %v2858
  %v2860 = vand.u32 %v2859, 4294901760
  %v2861 = vsub.f32 %v2859, %v2860
  %v2862 = vand.u32 %v2861, 4294901760
  %2863 = vmatprep.subr.mxu0 %v2862
  %v2864 = vand.u32 %v21, 4294901760
  %v2865 = vsub.f32 %v21, %v2864
  %v2866 = vand.u32 %v2865, 4294901760
  %v2867 = vsub.f32 %v2865, %v2866
  %v2868 = vand.u32 %v2867, 4294901760
  %2869 = vmatpush1.msra.mxu0 %v2868
  %v2870 = vand.u32 %v30, 4294901760
  %v2871 = vsub.f32 %v30, %v2870
  %v2872 = vand.u32 %v2871, 4294901760
  %v2873 = vsub.f32 %v2871, %v2872
  %v2874 = vand.u32 %v2873, 4294901760
  %2875 = vmatprep.subr.mxu0 %v2874
  %v2876 = vand.u32 %v29, 4294901760
  %v2877 = vsub.f32 %v29, %v2876
  %v2878 = vand.u32 %v2877, 4294901760
  %v2879 = vsub.f32 %v2877, %v2878
  %v2880 = vand.u32 %v2879, 4294901760
  %2881 = vmatpush1.msra.mxu0 %v2880
  %v2882 = vand.u32 %v38, 4294901760
  %v2883 = vsub.f32 %v38, %v2882
  %v2884 = vand.u32 %v2883, 4294901760
  %v2885 = vsub.f32 %v2883, %v2884
  %v2886 = vand.u32 %v2885, 4294901760
  %2887 = vmatprep.subr.mxu0 %v2886
  %v2888 = vand.u32 %v37, 4294901760
  %v2889 = vsub.f32 %v37, %v2888
  %v2890 = vand.u32 %v2889, 4294901760
  %v2891 = vsub.f32 %v2889, %v2890
  %v2892 = vand.u32 %v2891, 4294901760
  %2893 = vmatpush1.msra.mxu0 %v2892
  %v2894 = vand.u32 %v46, 4294901760
  %v2895 = vsub.f32 %v46, %v2894
  %v2896 = vand.u32 %v2895, 4294901760
  %v2897 = vsub.f32 %v2895, %v2896
  %v2898 = vand.u32 %v2897, 4294901760
  %2899 = vmatprep.subr.mxu0 %v2898
  %v2900 = vand.u32 %v45, 4294901760
  %v2901 = vsub.f32 %v45, %v2900
  %v2902 = vand.u32 %v2901, 4294901760
  %v2903 = vsub.f32 %v2901, %v2902
  %v2904 = vand.u32 %v2903, 4294901760
  %2905 = vmatpush1.msra.mxu0 %v2904
  %v2906 = vand.u32 %v54, 4294901760
  %v2907 = vsub.f32 %v54, %v2906
  %v2908 = vand.u32 %v2907, 4294901760
  %v2909 = vsub.f32 %v2907, %v2908
  %v2910 = vand.u32 %v2909, 4294901760
  %2911 = vmatprep.subr.mxu0 %v2910
  %v2912 = vand.u32 %v53, 4294901760
  %v2913 = vsub.f32 %v53, %v2912
  %v2914 = vand.u32 %v2913, 4294901760
  %v2915 = vsub.f32 %v2913, %v2914
  %v2916 = vand.u32 %v2915, 4294901760
  %2917 = vmatpush1.msra.mxu0 %v2916
  %v2918 = vand.u32 %v62, 4294901760
  %v2919 = vsub.f32 %v62, %v2918
  %v2920 = vand.u32 %v2919, 4294901760
  %v2921 = vsub.f32 %v2919, %v2920
  %v2922 = vand.u32 %v2921, 4294901760
  %2923 = vmatprep.subr.mxu0 %v2922
  %v2924 = vand.u32 %v61, 4294901760
  %v2925 = vsub.f32 %v61, %v2924
  %v2926 = vand.u32 %v2925, 4294901760
  %v2927 = vsub.f32 %v2925, %v2926
  %v2928 = vand.u32 %v2927, 4294901760
  %2929 = vmatpush1.msra.mxu0 %v2928
  %v2930 = vand.u32 %v70, 4294901760
  %v2931 = vsub.f32 %v70, %v2930
  %v2932 = vand.u32 %v2931, 4294901760
  %v2933 = vsub.f32 %v2931, %v2932
  %v2934 = vand.u32 %v2933, 4294901760
  %2935 = vmatprep.subr.mxu0 %v2934
  %v2936 = vand.u32 %v69, 4294901760
  %v2937 = vsub.f32 %v69, %v2936
  %v2938 = vand.u32 %v2937, 4294901760
  %v2939 = vsub.f32 %v2937, %v2938
  %v2940 = vand.u32 %v2939, 4294901760
  %2941 = vmatpush1.msra.mxu0 %v2940
  %v2942 = vand.u32 %v78, 4294901760
  %v2943 = vsub.f32 %v78, %v2942
  %v2944 = vand.u32 %v2943, 4294901760
  %v2945 = vsub.f32 %v2943, %v2944
  %v2946 = vand.u32 %v2945, 4294901760
  %2947 = vmatprep.subr.mxu0 %v2946
  %v2948 = vand.u32 %v77, 4294901760
  %v2949 = vsub.f32 %v77, %v2948
  %v2950 = vand.u32 %v2949, 4294901760
  %v2951 = vsub.f32 %v2949, %v2950
  %v2952 = vand.u32 %v2951, 4294901760
  %2953 = vmatpush1.msra.mxu0 %v2952
  %v2954 = vand.u32 %v86, 4294901760
  %v2955 = vsub.f32 %v86, %v2954
  %v2956 = vand.u32 %v2955, 4294901760
  %v2957 = vsub.f32 %v2955, %v2956
  %v2958 = vand.u32 %v2957, 4294901760
  %2959 = vmatprep.subr.mxu0 %v2958
  %v2960 = vand.u32 %v85, 4294901760
  %v2961 = vsub.f32 %v85, %v2960
  %v2962 = vand.u32 %v2961, 4294901760
  %v2963 = vsub.f32 %v2961, %v2962
  %v2964 = vand.u32 %v2963, 4294901760
  %2965 = vmatpush1.msra.mxu0 %v2964
  %v2966 = vand.u32 %v94, 4294901760
  %v2967 = vsub.f32 %v94, %v2966
  %v2968 = vand.u32 %v2967, 4294901760
  %v2969 = vsub.f32 %v2967, %v2968
  %v2970 = vand.u32 %v2969, 4294901760
  %2971 = vmatprep.subr.mxu0 %v2970
  %v2972 = vand.u32 %v93, 4294901760
  %v2973 = vsub.f32 %v93, %v2972
  %v2974 = vand.u32 %v2973, 4294901760
  %v2975 = vsub.f32 %v2973, %v2974
  %v2976 = vand.u32 %v2975, 4294901760
  %2977 = vmatpush1.msra.mxu0 %v2976
  %v2978 = vand.u32 %v102, 4294901760
  %v2979 = vsub.f32 %v102, %v2978
  %v2980 = vand.u32 %v2979, 4294901760
  %v2981 = vsub.f32 %v2979, %v2980
  %v2982 = vand.u32 %v2981, 4294901760
  %2983 = vmatprep.subr.mxu0 %v2982
  %v2984 = vand.u32 %v101, 4294901760
  %v2985 = vsub.f32 %v101, %v2984
  %v2986 = vand.u32 %v2985, 4294901760
  %v2987 = vsub.f32 %v2985, %v2986
  %v2988 = vand.u32 %v2987, 4294901760
  %2989 = vmatpush1.msra.mxu0 %v2988
  %v2990 = vand.u32 %v110, 4294901760
  %v2991 = vsub.f32 %v110, %v2990
  %v2992 = vand.u32 %v2991, 4294901760
  %v2993 = vsub.f32 %v2991, %v2992
  %v2994 = vand.u32 %v2993, 4294901760
  %2995 = vmatprep.subr.mxu0 %v2994
  %v2996 = vand.u32 %v109, 4294901760
  %v2997 = vsub.f32 %v109, %v2996
  %v2998 = vand.u32 %v2997, 4294901760
  %v2999 = vsub.f32 %v2997, %v2998
  %v3000 = vand.u32 %v2999, 4294901760
  %3001 = vmatpush1.msra.mxu0 %v3000
  %v3002 = vand.u32 %v118, 4294901760
  %v3003 = vsub.f32 %v118, %v3002
  %v3004 = vand.u32 %v3003, 4294901760
  %v3005 = vsub.f32 %v3003, %v3004
  %v3006 = vand.u32 %v3005, 4294901760
  %3007 = vmatprep.subr.mxu0 %v3006
  %v3008 = vand.u32 %v117, 4294901760
  %v3009 = vsub.f32 %v117, %v3008
  %v3010 = vand.u32 %v3009, 4294901760
  %v3011 = vsub.f32 %v3009, %v3010
  %v3012 = vand.u32 %v3011, 4294901760
  %3013 = vmatpush1.msra.mxu0 %v3012
  %v3014 = vand.u32 %v126, 4294901760
  %v3015 = vsub.f32 %v126, %v3014
  %v3016 = vand.u32 %v3015, 4294901760
  %v3017 = vsub.f32 %v3015, %v3016
  %v3018 = vand.u32 %v3017, 4294901760
  %3019 = vmatprep.subr.mxu0 %v3018
  %v3020 = vand.u32 %v125, 4294901760
  %v3021 = vsub.f32 %v125, %v3020
  %v3022 = vand.u32 %v3021, 4294901760
  %v3023 = vsub.f32 %v3021, %v3022
  %v3024 = vand.u32 %v3023, 4294901760
  %3025 = vmatpush1.msra.mxu0 %v3024
  %v3026 = vand.u32 %v134, 4294901760
  %v3027 = vsub.f32 %v134, %v3026
  %v3028 = vand.u32 %v3027, 4294901760
  %v3029 = vsub.f32 %v3027, %v3028
  %v3030 = vand.u32 %v3029, 4294901760
  %3031 = vmatprep.subr.mxu0 %v3030
  %v3032 = vand.u32 %v133, 4294901760
  %v3033 = vsub.f32 %v133, %v3032
  %v3034 = vand.u32 %v3033, 4294901760
  %v3035 = vsub.f32 %v3033, %v3034
  %v3036 = vand.u32 %v3035, 4294901760
  %3037 = vmatpush1.msra.mxu0 %v3036
  %v3038 = vand.u32 %v142, 4294901760
  %v3039 = vsub.f32 %v142, %v3038
  %v3040 = vand.u32 %v3039, 4294901760
  %v3041 = vsub.f32 %v3039, %v3040
  %v3042 = vand.u32 %v3041, 4294901760
  %3043 = vmatprep.subr.mxu0 %v3042
  %v3044 = vand.u32 %v141, 4294901760
  %v3045 = vsub.f32 %v141, %v3044
  %v3046 = vand.u32 %v3045, 4294901760
  %v3047 = vsub.f32 %v3045, %v3046
  %v3048 = vand.u32 %v3047, 4294901760
  %3049 = vmatpush1.msra.mxu0 %v3048
  %3050 = vmatprep.subr.mxu0 0.0
  %3051 = vmatpush1.msra.mxu0 0.0
  %3052 = vmatprep.subr.mxu0 0.0
  %3053 = vmatpush1.msra.mxu0 0.0
  %3054 = vmatprep.subr.mxu0 0.0
  %3055 = vmatpush1.msra.mxu0 0.0
  %3056 = vmatprep.subr.mxu0 0.0
  %3057 = vmatpush1.msra.mxu0 0.0
  %3058 = vmatprep.subr.mxu0 0.0
  %3059 = vmatpush1.msra.mxu0 0.0
  %3060 = vmatprep.subr.mxu0 0.0
  %3061 = vmatpush1.msra.mxu0 0.0
  %3062 = vmatprep.subr.mxu0 0.0
  %3063 = vmatpush1.msra.mxu0 0.0
  %3064 = vmatprep.subr.mxu0 0.0
  %3065 = vmatpush1.msra.mxu0 0.0
  %3066 = vmatprep.subr.mxu0 0.0
  %3067 = vmatpush1.msra.mxu0 0.0
  %3068 = vmatprep.subr.mxu0 0.0
  %3069 = vmatpush1.msra.mxu0 0.0
  %3070 = vmatprep.subr.mxu0 0.0
  %3071 = vmatpush1.msra.mxu0 0.0
  %3072 = vmatprep.subr.mxu0 0.0
  %3073 = vmatpush1.msra.mxu0 0.0
  %3074 = vmatprep.subr.mxu0 0.0
  %3075 = vmatpush1.msra.mxu0 0.0
  %3076 = vmatprep.subr.mxu0 0.0
  %3077 = vmatpush1.msra.mxu0 0.0
  %3078 = vmatprep.subr.mxu0 0.0
  %3079 = vmatpush1.msra.mxu0 0.0
  %3080 = vmatprep.subr.mxu0 0.0
  %3081 = vmatpush1.msra.mxu0 0.0
  %3082 = vmatprep.mubr.f32.mxu0 0.0
  %v3083 = vand.u32 %v14, 4294901760
  %3084 = vmatmul.mubr.f32.gmra.mrb[0].mxu0 %v3083
  %v3085 = vpop.f32.mrb[0].mxu0
  %v3086 = vadd.f32 %v2854, %v3085
  %v3087 = vpop.f32.mrb[0].mxu0
  %v3088 = vadd.f32 %v2856, %v3087
  %3089 = vdwg.mxu0
  %v3090 = vand.u32 %v22, 4294901760
  %v3091 = vsub.f32 %v22, %v3090
  %3092 = vmatprep.subr.mxu0 %v3091
  %v3093 = vand.u32 %v21, 4294901760
  %v3094 = vsub.f32 %v21, %v3093
  %3095 = vmatpush1.msra.mxu0 %v3094
  %v3096 = vand.u32 %v30, 4294901760
  %v3097 = vsub.f32 %v30, %v3096
  %3098 = vmatprep.subr.mxu0 %v3097
  %v3099 = vand.u32 %v29, 4294901760
  %v3100 = vsub.f32 %v29, %v3099
  %3101 = vmatpush1.msra.mxu0 %v3100
  %v3102 = vand.u32 %v38, 4294901760
  %v3103 = vsub.f32 %v38, %v3102
  %3104 = vmatprep.subr.mxu0 %v3103
  %v3105 = vand.u32 %v37, 4294901760
  %v3106 = vsub.f32 %v37, %v3105
  %3107 = vmatpush1.msra.mxu0 %v3106
  %v3108 = vand.u32 %v46, 4294901760
  %v3109 = vsub.f32 %v46, %v3108
  %3110 = vmatprep.subr.mxu0 %v3109
  %v3111 = vand.u32 %v45, 4294901760
  %v3112 = vsub.f32 %v45, %v3111
  %3113 = vmatpush1.msra.mxu0 %v3112
  %v3114 = vand.u32 %v54, 4294901760
  %v3115 = vsub.f32 %v54, %v3114
  %3116 = vmatprep.subr.mxu0 %v3115
  %v3117 = vand.u32 %v53, 4294901760
  %v3118 = vsub.f32 %v53, %v3117
  %3119 = vmatpush1.msra.mxu0 %v3118
  %v3120 = vand.u32 %v62, 4294901760
  %v3121 = vsub.f32 %v62, %v3120
  %3122 = vmatprep.subr.mxu0 %v3121
  %v3123 = vand.u32 %v61, 4294901760
  %v3124 = vsub.f32 %v61, %v3123
  %3125 = vmatpush1.msra.mxu0 %v3124
  %v3126 = vand.u32 %v70, 4294901760
  %v3127 = vsub.f32 %v70, %v3126
  %3128 = vmatprep.subr.mxu0 %v3127
  %v3129 = vand.u32 %v69, 4294901760
  %v3130 = vsub.f32 %v69, %v3129
  %3131 = vmatpush1.msra.mxu0 %v3130
  %v3132 = vand.u32 %v78, 4294901760
  %v3133 = vsub.f32 %v78, %v3132
  %3134 = vmatprep.subr.mxu0 %v3133
  %v3135 = vand.u32 %v77, 4294901760
  %v3136 = vsub.f32 %v77, %v3135
  %3137 = vmatpush1.msra.mxu0 %v3136
  %v3138 = vand.u32 %v86, 4294901760
  %v3139 = vsub.f32 %v86, %v3138
  %3140 = vmatprep.subr.mxu0 %v3139
  %v3141 = vand.u32 %v85, 4294901760
  %v3142 = vsub.f32 %v85, %v3141
  %3143 = vmatpush1.msra.mxu0 %v3142
  %v3144 = vand.u32 %v94, 4294901760
  %v3145 = vsub.f32 %v94, %v3144
  %3146 = vmatprep.subr.mxu0 %v3145
  %v3147 = vand.u32 %v93, 4294901760
  %v3148 = vsub.f32 %v93, %v3147
  %3149 = vmatpush1.msra.mxu0 %v3148
  %v3150 = vand.u32 %v102, 4294901760
  %v3151 = vsub.f32 %v102, %v3150
  %3152 = vmatprep.subr.mxu0 %v3151
  %v3153 = vand.u32 %v101, 4294901760
  %v3154 = vsub.f32 %v101, %v3153
  %3155 = vmatpush1.msra.mxu0 %v3154
  %v3156 = vand.u32 %v110, 4294901760
  %v3157 = vsub.f32 %v110, %v3156
  %3158 = vmatprep.subr.mxu0 %v3157
  %v3159 = vand.u32 %v109, 4294901760
  %v3160 = vsub.f32 %v109, %v3159
  %3161 = vmatpush1.msra.mxu0 %v3160
  %v3162 = vand.u32 %v118, 4294901760
  %v3163 = vsub.f32 %v118, %v3162
  %3164 = vmatprep.subr.mxu0 %v3163
  %v3165 = vand.u32 %v117, 4294901760
  %v3166 = vsub.f32 %v117, %v3165
  %3167 = vmatpush1.msra.mxu0 %v3166
  %v3168 = vand.u32 %v126, 4294901760
  %v3169 = vsub.f32 %v126, %v3168
  %3170 = vmatprep.subr.mxu0 %v3169
  %v3171 = vand.u32 %v125, 4294901760
  %v3172 = vsub.f32 %v125, %v3171
  %3173 = vmatpush1.msra.mxu0 %v3172
  %v3174 = vand.u32 %v134, 4294901760
  %v3175 = vsub.f32 %v134, %v3174
  %3176 = vmatprep.subr.mxu0 %v3175
  %v3177 = vand.u32 %v133, 4294901760
  %v3178 = vsub.f32 %v133, %v3177
  %3179 = vmatpush1.msra.mxu0 %v3178
  %v3180 = vand.u32 %v142, 4294901760
  %v3181 = vsub.f32 %v142, %v3180
  %3182 = vmatprep.subr.mxu0 %v3181
  %v3183 = vand.u32 %v141, 4294901760
  %v3184 = vsub.f32 %v141, %v3183
  %3185 = vmatpush1.msra.mxu0 %v3184
  %3186 = vmatprep.subr.mxu0 0.0
  %3187 = vmatpush1.msra.mxu0 0.0
  %3188 = vmatprep.subr.mxu0 0.0
  %3189 = vmatpush1.msra.mxu0 0.0
  %3190 = vmatprep.subr.mxu0 0.0
  %3191 = vmatpush1.msra.mxu0 0.0
  %3192 = vmatprep.subr.mxu0 0.0
  %3193 = vmatpush1.msra.mxu0 0.0
  %3194 = vmatprep.subr.mxu0 0.0
  %3195 = vmatpush1.msra.mxu0 0.0
  %3196 = vmatprep.subr.mxu0 0.0
  %3197 = vmatpush1.msra.mxu0 0.0
  %3198 = vmatprep.subr.mxu0 0.0
  %3199 = vmatpush1.msra.mxu0 0.0
  %3200 = vmatprep.subr.mxu0 0.0
  %3201 = vmatpush1.msra.mxu0 0.0
  %3202 = vmatprep.subr.mxu0 0.0
  %3203 = vmatpush1.msra.mxu0 0.0
  %3204 = vmatprep.subr.mxu0 0.0
  %3205 = vmatpush1.msra.mxu0 0.0
  %3206 = vmatprep.subr.mxu0 0.0
  %3207 = vmatpush1.msra.mxu0 0.0
  %3208 = vmatprep.subr.mxu0 0.0
  %3209 = vmatpush1.msra.mxu0 0.0
  %3210 = vmatprep.subr.mxu0 0.0
  %3211 = vmatpush1.msra.mxu0 0.0
  %3212 = vmatprep.subr.mxu0 0.0
  %3213 = vmatpush1.msra.mxu0 0.0
  %3214 = vmatprep.subr.mxu0 0.0
  %3215 = vmatpush1.msra.mxu0 0.0
  %3216 = vmatprep.subr.mxu0 0.0
  %3217 = vmatpush1.msra.mxu0 0.0
  %3218 = vmatprep.mubr.f32.mxu0 0.0
  %v3219 = vand.u32 %v14, 4294901760
  %v3220 = vsub.f32 %v14, %v3219
  %3221 = vmatmul.mubr.f32.gmra.mrb[0].mxu0 %v3220
  %v3222 = vpop.f32.mrb[0].mxu0
  %v3223 = vadd.f32 %v3086, %v3222
  %v3224 = vpop.f32.mrb[0].mxu0
  %v3225 = vadd.f32 %v3088, %v3224
  %3226 = vdwg.mxu0
  %v3227 = vand.u32 %v22, 4294901760
  %3228 = vmatprep.subr.mxu0 %v3227
  %v3229 = vand.u32 %v21, 4294901760
  %3230 = vmatpush1.msra.mxu0 %v3229
  %v3231 = vand.u32 %v30, 4294901760
  %3232 = vmatprep.subr.mxu0 %v3231
  %v3233 = vand.u32 %v29, 4294901760
  %3234 = vmatpush1.msra.mxu0 %v3233
  %v3235 = vand.u32 %v38, 4294901760
  %3236 = vmatprep.subr.mxu0 %v3235
  %v3237 = vand.u32 %v37, 4294901760
  %3238 = vmatpush1.msra.mxu0 %v3237
  %v3239 = vand.u32 %v46, 4294901760
  %3240 = vmatprep.subr.mxu0 %v3239
  %v3241 = vand.u32 %v45, 4294901760
  %3242 = vmatpush1.msra.mxu0 %v3241
  %v3243 = vand.u32 %v54, 4294901760
  %3244 = vmatprep.subr.mxu0 %v3243
  %v3245 = vand.u32 %v53, 4294901760
  %3246 = vmatpush1.msra.mxu0 %v3245
  %v3247 = vand.u32 %v62, 4294901760
  %3248 = vmatprep.subr.mxu0 %v3247
  %v3249 = vand.u32 %v61, 4294901760
  %3250 = vmatpush1.msra.mxu0 %v3249
  %v3251 = vand.u32 %v70, 4294901760
  %3252 = vmatprep.subr.mxu0 %v3251
  %v3253 = vand.u32 %v69, 4294901760
  %3254 = vmatpush1.msra.mxu0 %v3253
  %v3255 = vand.u32 %v78, 4294901760
  %3256 = vmatprep.subr.mxu0 %v3255
  %v3257 = vand.u32 %v77, 4294901760
  %3258 = vmatpush1.msra.mxu0 %v3257
  %v3259 = vand.u32 %v86, 4294901760
  %3260 = vmatprep.subr.mxu0 %v3259
  %v3261 = vand.u32 %v85, 4294901760
  %3262 = vmatpush1.msra.mxu0 %v3261
  %v3263 = vand.u32 %v94, 4294901760
  %3264 = vmatprep.subr.mxu0 %v3263
  %v3265 = vand.u32 %v93, 4294901760
  %3266 = vmatpush1.msra.mxu0 %v3265
  %v3267 = vand.u32 %v102, 4294901760
  %3268 = vmatprep.subr.mxu0 %v3267
  %v3269 = vand.u32 %v101, 4294901760
  %3270 = vmatpush1.msra.mxu0 %v3269
  %v3271 = vand.u32 %v110, 4294901760
  %3272 = vmatprep.subr.mxu0 %v3271
  %v3273 = vand.u32 %v109, 4294901760
  %3274 = vmatpush1.msra.mxu0 %v3273
  %v3275 = vand.u32 %v118, 4294901760
  %3276 = vmatprep.subr.mxu0 %v3275
  %v3277 = vand.u32 %v117, 4294901760
  %3278 = vmatpush1.msra.mxu0 %v3277
  %v3279 = vand.u32 %v126, 4294901760
  %3280 = vmatprep.subr.mxu0 %v3279
  %v3281 = vand.u32 %v125, 4294901760
  %3282 = vmatpush1.msra.mxu0 %v3281
  %v3283 = vand.u32 %v134, 4294901760
  %3284 = vmatprep.subr.mxu0 %v3283
  %v3285 = vand.u32 %v133, 4294901760
  %3286 = vmatpush1.msra.mxu0 %v3285
  %v3287 = vand.u32 %v142, 4294901760
  %3288 = vmatprep.subr.mxu0 %v3287
  %v3289 = vand.u32 %v141, 4294901760
  %3290 = vmatpush1.msra.mxu0 %v3289
  %3291 = vmatprep.subr.mxu0 0.0
  %3292 = vmatpush1.msra.mxu0 0.0
  %3293 = vmatprep.subr.mxu0 0.0
  %3294 = vmatpush1.msra.mxu0 0.0
  %3295 = vmatprep.subr.mxu0 0.0
  %3296 = vmatpush1.msra.mxu0 0.0
  %3297 = vmatprep.subr.mxu0 0.0
  %3298 = vmatpush1.msra.mxu0 0.0
  %3299 = vmatprep.subr.mxu0 0.0
  %3300 = vmatpush1.msra.mxu0 0.0
  %3301 = vmatprep.subr.mxu0 0.0
  %3302 = vmatpush1.msra.mxu0 0.0
  %3303 = vmatprep.subr.mxu0 0.0
  %3304 = vmatpush1.msra.mxu0 0.0
  %3305 = vmatprep.subr.mxu0 0.0
  %3306 = vmatpush1.msra.mxu0 0.0
  %3307 = vmatprep.subr.mxu0 0.0
  %3308 = vmatpush1.msra.mxu0 0.0
  %3309 = vmatprep.subr.mxu0 0.0
  %3310 = vmatpush1.msra.mxu0 0.0
  %3311 = vmatprep.subr.mxu0 0.0
  %3312 = vmatpush1.msra.mxu0 0.0
  %3313 = vmatprep.subr.mxu0 0.0
  %3314 = vmatpush1.msra.mxu0 0.0
  %3315 = vmatprep.subr.mxu0 0.0
  %3316 = vmatpush1.msra.mxu0 0.0
  %3317 = vmatprep.subr.mxu0 0.0
  %3318 = vmatpush1.msra.mxu0 0.0
  %3319 = vmatprep.subr.mxu0 0.0
  %3320 = vmatpush1.msra.mxu0 0.0
  %3321 = vmatprep.subr.mxu0 0.0
  %3322 = vmatpush1.msra.mxu0 0.0
  %3323 = vmatprep.mubr.f32.mxu0 0.0
  %v3324 = vand.u32 %v14, 4294901760
  %v3325 = vsub.f32 %v14, %v3324
  %v3326 = vand.u32 %v3325, 4294901760
  %3327 = vmatmul.mubr.f32.gmra.mrb[0].mxu0 %v3326
  %v3328 = vpop.f32.mrb[0].mxu0
  %v3329 = vadd.f32 %v3223, %v3328
  %v3330 = vpop.f32.mrb[0].mxu0
  %v3331 = vadd.f32 %v3225, %v3330
  %3332 = vdwg.mxu0
  %v3333 = vand.u32 %v22, 4294901760
  %v3334 = vsub.f32 %v22, %v3333
  %v3335 = vand.u32 %v3334, 4294901760
  %3336 = vmatprep.subr.mxu0 %v3335
  %v3337 = vand.u32 %v21, 4294901760
  %v3338 = vsub.f32 %v21, %v3337
  %v3339 = vand.u32 %v3338, 4294901760
  %3340 = vmatpush1.msra.mxu0 %v3339
  %v3341 = vand.u32 %v30, 4294901760
  %v3342 = vsub.f32 %v30, %v3341
  %v3343 = vand.u32 %v3342, 4294901760
  %3344 = vmatprep.subr.mxu0 %v3343
  %v3345 = vand.u32 %v29, 4294901760
  %v3346 = vsub.f32 %v29, %v3345
  %v3347 = vand.u32 %v3346, 4294901760
  %3348 = vmatpush1.msra.mxu0 %v3347
  %v3349 = vand.u32 %v38, 4294901760
  %v3350 = vsub.f32 %v38, %v3349
  %v3351 = vand.u32 %v3350, 4294901760
  %3352 = vmatprep.subr.mxu0 %v3351
  %v3353 = vand.u32 %v37, 4294901760
  %v3354 = vsub.f32 %v37, %v3353
  %v3355 = vand.u32 %v3354, 4294901760
  %3356 = vmatpush1.msra.mxu0 %v3355
  %v3357 = vand.u32 %v46, 4294901760
  %v3358 = vsub.f32 %v46, %v3357
  %v3359 = vand.u32 %v3358, 4294901760
  %3360 = vmatprep.subr.mxu0 %v3359
  %v3361 = vand.u32 %v45, 4294901760
  %v3362 = vsub.f32 %v45, %v3361
  %v3363 = vand.u32 %v3362, 4294901760
  %3364 = vmatpush1.msra.mxu0 %v3363
  %v3365 = vand.u32 %v54, 4294901760
  %v3366 = vsub.f32 %v54, %v3365
  %v3367 = vand.u32 %v3366, 4294901760
  %3368 = vmatprep.subr.mxu0 %v3367
  %v3369 = vand.u32 %v53, 4294901760
  %v3370 = vsub.f32 %v53, %v3369
  %v3371 = vand.u32 %v3370, 4294901760
  %3372 = vmatpush1.msra.mxu0 %v3371
  %v3373 = vand.u32 %v62, 4294901760
  %v3374 = vsub.f32 %v62, %v3373
  %v3375 = vand.u32 %v3374, 4294901760
  %3376 = vmatprep.subr.mxu0 %v3375
  %v3377 = vand.u32 %v61, 4294901760
  %v3378 = vsub.f32 %v61, %v3377
  %v3379 = vand.u32 %v3378, 4294901760
  %3380 = vmatpush1.msra.mxu0 %v3379
  %v3381 = vand.u32 %v70, 4294901760
  %v3382 = vsub.f32 %v70, %v3381
  %v3383 = vand.u32 %v3382, 4294901760
  %3384 = vmatprep.subr.mxu0 %v3383
  %v3385 = vand.u32 %v69, 4294901760
  %v3386 = vsub.f32 %v69, %v3385
  %v3387 = vand.u32 %v3386, 4294901760
  %3388 = vmatpush1.msra.mxu0 %v3387
  %v3389 = vand.u32 %v78, 4294901760
  %v3390 = vsub.f32 %v78, %v3389
  %v3391 = vand.u32 %v3390, 4294901760
  %3392 = vmatprep.subr.mxu0 %v3391
  %v3393 = vand.u32 %v77, 4294901760
  %v3394 = vsub.f32 %v77, %v3393
  %v3395 = vand.u32 %v3394, 4294901760
  %3396 = vmatpush1.msra.mxu0 %v3395
  %v3397 = vand.u32 %v86, 4294901760
  %v3398 = vsub.f32 %v86, %v3397
  %v3399 = vand.u32 %v3398, 4294901760
  %3400 = vmatprep.subr.mxu0 %v3399
  %v3401 = vand.u32 %v85, 4294901760
  %v3402 = vsub.f32 %v85, %v3401
  %v3403 = vand.u32 %v3402, 4294901760
  %3404 = vmatpush1.msra.mxu0 %v3403
  %v3405 = vand.u32 %v94, 4294901760
  %v3406 = vsub.f32 %v94, %v3405
  %v3407 = vand.u32 %v3406, 4294901760
  %3408 = vmatprep.subr.mxu0 %v3407
  %v3409 = vand.u32 %v93, 4294901760
  %v3410 = vsub.f32 %v93, %v3409
  %v3411 = vand.u32 %v3410, 4294901760
  %3412 = vmatpush1.msra.mxu0 %v3411
  %v3413 = vand.u32 %v102, 4294901760
  %v3414 = vsub.f32 %v102, %v3413
  %v3415 = vand.u32 %v3414, 4294901760
  %3416 = vmatprep.subr.mxu0 %v3415
  %v3417 = vand.u32 %v101, 4294901760
  %v3418 = vsub.f32 %v101, %v3417
  %v3419 = vand.u32 %v3418, 4294901760
  %3420 = vmatpush1.msra.mxu0 %v3419
  %v3421 = vand.u32 %v110, 4294901760
  %v3422 = vsub.f32 %v110, %v3421
  %v3423 = vand.u32 %v3422, 4294901760
  %3424 = vmatprep.subr.mxu0 %v3423
  %v3425 = vand.u32 %v109, 4294901760
  %v3426 = vsub.f32 %v109, %v3425
  %v3427 = vand.u32 %v3426, 4294901760
  %3428 = vmatpush1.msra.mxu0 %v3427
  %v3429 = vand.u32 %v118, 4294901760
  %v3430 = vsub.f32 %v118, %v3429
  %v3431 = vand.u32 %v3430, 4294901760
  %3432 = vmatprep.subr.mxu0 %v3431
  %v3433 = vand.u32 %v117, 4294901760
  %v3434 = vsub.f32 %v117, %v3433
  %v3435 = vand.u32 %v3434, 4294901760
  %3436 = vmatpush1.msra.mxu0 %v3435
  %v3437 = vand.u32 %v126, 4294901760
  %v3438 = vsub.f32 %v126, %v3437
  %v3439 = vand.u32 %v3438, 4294901760
  %3440 = vmatprep.subr.mxu0 %v3439
  %v3441 = vand.u32 %v125, 4294901760
  %v3442 = vsub.f32 %v125, %v3441
  %v3443 = vand.u32 %v3442, 4294901760
  %3444 = vmatpush1.msra.mxu0 %v3443
  %v3445 = vand.u32 %v134, 4294901760
  %v3446 = vsub.f32 %v134, %v3445
  %v3447 = vand.u32 %v3446, 4294901760
  %3448 = vmatprep.subr.mxu0 %v3447
  %v3449 = vand.u32 %v133, 4294901760
  %v3450 = vsub.f32 %v133, %v3449
  %v3451 = vand.u32 %v3450, 4294901760
  %3452 = vmatpush1.msra.mxu0 %v3451
  %v3453 = vand.u32 %v142, 4294901760
  %v3454 = vsub.f32 %v142, %v3453
  %v3455 = vand.u32 %v3454, 4294901760
  %3456 = vmatprep.subr.mxu0 %v3455
  %v3457 = vand.u32 %v141, 4294901760
  %v3458 = vsub.f32 %v141, %v3457
  %v3459 = vand.u32 %v3458, 4294901760
  %3460 = vmatpush1.msra.mxu0 %v3459
  %3461 = vmatprep.subr.mxu0 0.0
  %3462 = vmatpush1.msra.mxu0 0.0
  %3463 = vmatprep.subr.mxu0 0.0
  %3464 = vmatpush1.msra.mxu0 0.0
  %3465 = vmatprep.subr.mxu0 0.0
  %3466 = vmatpush1.msra.mxu0 0.0
  %3467 = vmatprep.subr.mxu0 0.0
  %3468 = vmatpush1.msra.mxu0 0.0
  %3469 = vmatprep.subr.mxu0 0.0
  %3470 = vmatpush1.msra.mxu0 0.0
  %3471 = vmatprep.subr.mxu0 0.0
  %3472 = vmatpush1.msra.mxu0 0.0
  %3473 = vmatprep.subr.mxu0 0.0
  %3474 = vmatpush1.msra.mxu0 0.0
  %3475 = vmatprep.subr.mxu0 0.0
  %3476 = vmatpush1.msra.mxu0 0.0
  %3477 = vmatprep.subr.mxu0 0.0
  %3478 = vmatpush1.msra.mxu0 0.0
  %3479 = vmatprep.subr.mxu0 0.0
  %3480 = vmatpush1.msra.mxu0 0.0
  %3481 = vmatprep.subr.mxu0 0.0
  %3482 = vmatpush1.msra.mxu0 0.0
  %3483 = vmatprep.subr.mxu0 0.0
  %3484 = vmatpush1.msra.mxu0 0.0
  %3485 = vmatprep.subr.mxu0 0.0
  %3486 = vmatpush1.msra.mxu0 0.0
  %3487 = vmatprep.subr.mxu0 0.0
  %3488 = vmatpush1.msra.mxu0 0.0
  %3489 = vmatprep.subr.mxu0 0.0
  %3490 = vmatpush1.msra.mxu0 0.0
  %3491 = vmatprep.subr.mxu0 0.0
  %3492 = vmatpush1.msra.mxu0 0.0
  %3493 = vmatprep.mubr.f32.mxu0 0.0
  %v3494 = vand.u32 %v14, 4294901760
  %3495 = vmatmul.mubr.f32.gmra.mrb[0].mxu0 %v3494
  %v3496 = vpop.f32.mrb[0].mxu0
  %v3497 = vadd.f32 %v3329, %v3496
  %v3498 = vpop.f32.mrb[0].mxu0
  %v3499 = vadd.f32 %v3331, %v3498
  %3500 = vdwg.mxu0
  %v3501 = vand.u32 %v22, 4294901760
  %3502 = vmatprep.subr.mxu0 %v3501
  %v3503 = vand.u32 %v21, 4294901760
  %3504 = vmatpush1.msra.mxu0 %v3503
  %v3505 = vand.u32 %v30, 4294901760
  %3506 = vmatprep.subr.mxu0 %v3505
  %v3507 = vand.u32 %v29, 4294901760
  %3508 = vmatpush1.msra.mxu0 %v3507
  %v3509 = vand.u32 %v38, 4294901760
  %3510 = vmatprep.subr.mxu0 %v3509
  %v3511 = vand.u32 %v37, 4294901760
  %3512 = vmatpush1.msra.mxu0 %v3511
  %v3513 = vand.u32 %v46, 4294901760
  %3514 = vmatprep.subr.mxu0 %v3513
  %v3515 = vand.u32 %v45, 4294901760
  %3516 = vmatpush1.msra.mxu0 %v3515
  %v3517 = vand.u32 %v54, 4294901760
  %3518 = vmatprep.subr.mxu0 %v3517
  %v3519 = vand.u32 %v53, 4294901760
  %3520 = vmatpush1.msra.mxu0 %v3519
  %v3521 = vand.u32 %v62, 4294901760
  %3522 = vmatprep.subr.mxu0 %v3521
  %v3523 = vand.u32 %v61, 4294901760
  %3524 = vmatpush1.msra.mxu0 %v3523
  %v3525 = vand.u32 %v70, 4294901760
  %3526 = vmatprep.subr.mxu0 %v3525
  %v3527 = vand.u32 %v69, 4294901760
  %3528 = vmatpush1.msra.mxu0 %v3527
  %v3529 = vand.u32 %v78, 4294901760
  %3530 = vmatprep.subr.mxu0 %v3529
  %v3531 = vand.u32 %v77, 4294901760
  %3532 = vmatpush1.msra.mxu0 %v3531
  %v3533 = vand.u32 %v86, 4294901760
  %3534 = vmatprep.subr.mxu0 %v3533
  %v3535 = vand.u32 %v85, 4294901760
  %3536 = vmatpush1.msra.mxu0 %v3535
  %v3537 = vand.u32 %v94, 4294901760
  %3538 = vmatprep.subr.mxu0 %v3537
  %v3539 = vand.u32 %v93, 4294901760
  %3540 = vmatpush1.msra.mxu0 %v3539
  %v3541 = vand.u32 %v102, 4294901760
  %3542 = vmatprep.subr.mxu0 %v3541
  %v3543 = vand.u32 %v101, 4294901760
  %3544 = vmatpush1.msra.mxu0 %v3543
  %v3545 = vand.u32 %v110, 4294901760
  %3546 = vmatprep.subr.mxu0 %v3545
  %v3547 = vand.u32 %v109, 4294901760
  %3548 = vmatpush1.msra.mxu0 %v3547
  %v3549 = vand.u32 %v118, 4294901760
  %3550 = vmatprep.subr.mxu0 %v3549
  %v3551 = vand.u32 %v117, 4294901760
  %3552 = vmatpush1.msra.mxu0 %v3551
  %v3553 = vand.u32 %v126, 4294901760
  %3554 = vmatprep.subr.mxu0 %v3553
  %v3555 = vand.u32 %v125, 4294901760
  %3556 = vmatpush1.msra.mxu0 %v3555
  %v3557 = vand.u32 %v134, 4294901760
  %3558 = vmatprep.subr.mxu0 %v3557
  %v3559 = vand.u32 %v133, 4294901760
  %3560 = vmatpush1.msra.mxu0 %v3559
  %v3561 = vand.u32 %v142, 4294901760
  %3562 = vmatprep.subr.mxu0 %v3561
  %v3563 = vand.u32 %v141, 4294901760
  %3564 = vmatpush1.msra.mxu0 %v3563
  %3565 = vmatprep.subr.mxu0 0.0
  %3566 = vmatpush1.msra.mxu0 0.0
  %3567 = vmatprep.subr.mxu0 0.0
  %3568 = vmatpush1.msra.mxu0 0.0
  %3569 = vmatprep.subr.mxu0 0.0
  %3570 = vmatpush1.msra.mxu0 0.0
  %3571 = vmatprep.subr.mxu0 0.0
  %3572 = vmatpush1.msra.mxu0 0.0
  %3573 = vmatprep.subr.mxu0 0.0
  %3574 = vmatpush1.msra.mxu0 0.0
  %3575 = vmatprep.subr.mxu0 0.0
  %3576 = vmatpush1.msra.mxu0 0.0
  %3577 = vmatprep.subr.mxu0 0.0
  %3578 = vmatpush1.msra.mxu0 0.0
  %3579 = vmatprep.subr.mxu0 0.0
  %3580 = vmatpush1.msra.mxu0 0.0
  %3581 = vmatprep.subr.mxu0 0.0
  %3582 = vmatpush1.msra.mxu0 0.0
  %3583 = vmatprep.subr.mxu0 0.0
  %3584 = vmatpush1.msra.mxu0 0.0
  %3585 = vmatprep.subr.mxu0 0.0
  %3586 = vmatpush1.msra.mxu0 0.0
  %3587 = vmatprep.subr.mxu0 0.0
  %3588 = vmatpush1.msra.mxu0 0.0
  %3589 = vmatprep.subr.mxu0 0.0
  %3590 = vmatpush1.msra.mxu0 0.0
  %3591 = vmatprep.subr.mxu0 0.0
  %3592 = vmatpush1.msra.mxu0 0.0
  %3593 = vmatprep.subr.mxu0 0.0
  %3594 = vmatpush1.msra.mxu0 0.0
  %3595 = vmatprep.subr.mxu0 0.0
  %3596 = vmatpush1.msra.mxu0 0.0
  %3597 = vmatprep.mubr.f32.mxu0 0.0
  %v3598 = vand.u32 %v14, 4294901760
  %3599 = vmatmul.mubr.f32.gmra.mrb[0].mxu0 %v3598
  %v3600 = vpop.f32.mrb[0].mxu0
  %v3601 = vadd.f32 %v3497, %v3600
  %v3602 = vpop.f32.mrb[0].mxu0
  %v3603 = vadd.f32 %v3499, %v3602
  %3604 = vdwg.mxu0
  %3605 = vst [vmem:[%s3] sm:$0xff] %v1036
  %3606 = vst [vmem:[%s3 + $0x8] sm:$0xff] %v1038
  %3607 = vst [vmem:[%s3 + $0x10] sm:$0xff] %v1891
  %3608 = vst [vmem:[%s3 + $0x18] sm:$0xff] %v1893
  %3609 = vst [vmem:[%s3 + $0x20] sm:$0xff] %v2746
  %3610 = vst [vmem:[%s3 + $0x28] sm:$0xff] %v2748
  %3611 = vst [vmem:[%s3 + $0x30] sm:$0xff] %v3601
  %3612 = vst [vmem:[%s3 + $0x38] sm:$0xff] %v3603
  // Predicated region
  $region14: #{model_adapt_heads.1} parent=0 // pred_check
    _
  $region15: #{model_adapt_heads.1} parent=0 // pred_check_branch
    %3614 = sbr.rel (0) target = $region17
  $region16: #{model_adapt_heads.1} parent=0 // pred_region
    _
  $region17: #{model_adapt_heads.1} parent=0 // pred_fallthru
    _
  // Predicated region
  $region18: #{model_adapt_heads.1} parent=0 // pred_check
    _
  $region19: #{model_adapt_heads.1} parent=0 // pred_check_branch
    %3616 = sbr.rel (0) target = $region21
  $region20: #{model_adapt_heads.1} parent=0 // pred_region
    _
  $region21: #{model_adapt_heads.1} parent=0 // pred_fallthru
    _

</llo_original>
